<compile_context>
chip_gen: v7x
topology: tpu7x:2x2x1
jax: 0.10.0
libtpu: 0.0.40
codegen_flags: <defaults>
</compile_context>

<pallas_src>
import jax
import jax.numpy as jnp
from jax.experimental import pallas as pl
from jax.experimental.pallas import tpu as pltpu

EPS = 1e-5          # nn.BatchNorm2d default eps
NEG_SLOPE = 0.01    # F.leaky_relu default negative_slope


def _leaky(x):
    return jnp.where(x > 0, x, NEG_SLOPE * x)


def _idiv(a, d):
    """Integer divide by a Python-int constant (cheap shift for powers of 2)."""
    if d & (d - 1) == 0:
        return jnp.right_shift(a, d.bit_length() - 1)
    return a // d


def _imod(a, d):
    """Integer modulo by a Python-int constant (cheap mask for powers of 2)."""
    if d & (d - 1) == 0:
        return jnp.bitwise_and(a, d - 1)
    return a % d


def _make_resblock_kernel(N, C, H, W):
    HW = H * W
    L = N * HW          # flattened batch*spatial length (lane axis)

    def kernel(x_ref, w1_ref, b1_ref, g1_ref, be1_ref,
               w2_ref, b2_ref, g2_ref, be2_ref, out_ref):
        """Fused ResBlock forward, channel-major / lane-dense.

        x_ref   : (N, C, H*W)   input (NCHW with spatial flattened)
        w*_ref  : (9, C, C)     conv weights, [tap(kh*3+kw), c_out, c_in]
        b*/g*/be* : (C, 1)      conv bias / BN gamma / BN beta
        out_ref : (N, C, H*W)   output (NCHW with spatial flattened)
        """
        # Lay the batch side by side along the lane axis: (C, N*H*W).
        # Lane-aligned concat (HW is a multiple of 128 at the test shape).
        xcat = jnp.concatenate([x_ref[n] for n in range(N)], axis=1)

        # Per-tap validity masks, computed once and reused by both convs.
        # h/w are recovered from the flattened lane index; they also mask the
        # positions where the circular roll wraps (row/image boundaries).
        lane = jax.lax.broadcasted_iota(jnp.int32, (C, L), 1)
        w_pos = _imod(lane, W)
        h_pos = _imod(_idiv(lane, W), H)
        masks = []
        for t in range(9):
            dh, dw = t // 3 - 1, t % 3 - 1
            conds = []
            if dh == -1:
                conds.append(h_pos >= 1)
            if dh == 1:
                conds.append(h_pos <= H - 2)
            if dw == -1:
                conds.append(w_pos >= 1)
            if dw == 1:
                conds.append(w_pos <= W - 2)
            m = None
            for c in conds:
                m = c if m is None else jnp.logical_and(m, c)
            masks.append(m)

        inv_m = jnp.float32(1.0 / L)

        def conv_bn(x, w_ref, b_ref, g_ref, be_ref):
            # 3x3 conv as 9 shifted matmuls; acc stays an f32 value in VMEM.
            acc = jnp.zeros((C, L), jnp.float32)
            for t in range(9):
                dh, dw = t // 3 - 1, t % 3 - 1
                s = dh * W + dw
                xs = x if s == 0 else pltpu.roll(x, shift=(-s) % L, axis=1)
                if masks[t] is not None:
                    xs = jnp.where(masks[t], xs, 0.0)
                acc = acc + jnp.dot(w_ref[t], xs,
                                    preferred_element_type=jnp.float32)
            acc = acc + b_ref[...]                       # (C,1) lane-broadcast

            # BatchNorm2d (training mode): two-pass batch statistics in f32.
            mean = jnp.sum(acc, axis=1, keepdims=True) * inv_m       # (C,1)
            cen = acc - mean
            var = jnp.sum(cen * cen, axis=1, keepdims=True) * inv_m  # biased
            scale = jax.lax.rsqrt(var + EPS) * g_ref[...]
            return cen * scale + be_ref[...]

        # --- stage 1: conv1 -> bn1 -> leaky_relu (never leaves VMEM) -------
        y = _leaky(conv_bn(xcat, w1_ref, b1_ref, g1_ref, be1_ref))
        # --- stage 2: conv2 -> bn2 -> (+residual) -> leaky_relu ------------
        z = conv_bn(y, w2_ref, b2_ref, g2_ref, be2_ref)
        out = _leaky(xcat + z)

        # Emit NCHW directly: image n is the lane slab [n*HW, (n+1)*HW).
        for n in range(N):
            out_ref[n] = out[:, n * HW:(n + 1) * HW]

    return kernel


@jax.jit
def res_block_forward(x_nchw, params):
    """Forward pass of ResBlock. x_nchw: (N, C, H, W) float32 -> (N, C, H, W)."""
    x = x_nchw.astype(jnp.float32)
    N, C, H, W = x.shape
    x3 = x.reshape(N, C, H * W)                      # free reshape, no transpose

    # (C_out, C_in, 3, 3) OIHW -> (9, C_out, C_in), tap-major (kh, kw). Tiny.
    def prep_w(w_oihw):
        return jnp.transpose(w_oihw, (2, 3, 0, 1)).reshape(9, C, C)

    w1 = prep_w(params["w1"])
    w2 = prep_w(params["w2"])
    b1 = params["b1"].reshape(C, 1)
    b2 = params["b2"].reshape(C, 1)
    g1 = params["g1"].reshape(C, 1)
    g2 = params["g2"].reshape(C, 1)
    be1 = params["be1"].reshape(C, 1)
    be2 = params["be2"].reshape(C, 1)

    vm = pl.BlockSpec(memory_space=pltpu.MemorySpace.VMEM)
    out3 = pl.pallas_call(
        _make_resblock_kernel(N, C, H, W),
        out_shape=jax.ShapeDtypeStruct((N, C, H * W), jnp.float32),
        in_specs=[vm] * 9,
        out_specs=vm,
        compiler_params=pltpu.CompilerParams(
            vmem_limit_bytes=32 * 1024 * 1024),      # safe on v5e/v6e/v7x
    )(x3, w1, b1, g1, be1, w2, b2, g2, be2)

    return out3.reshape(N, C, H, W)                  # free reshape, no transpose


def init_params(key, nf):
    """Deterministic parameter init (shapes match ResBlock.__init__ / PyTorch)."""
    k1, k2, k3, k4 = jax.random.split(key, 4)
    fan_in = nf * 3 * 3
    scale = 1.0 / (fan_in ** 0.5)
    return {
        # conv weights in PyTorch OIHW layout
        "w1": (scale * jax.random.normal(k1, (nf, nf, 3, 3))).astype(jnp.float32),
        "b1": (scale * jax.random.normal(k2, (nf,))).astype(jnp.float32),
        "w2": (scale * jax.random.normal(k3, (nf, nf, 3, 3))).astype(jnp.float32),
        "b2": (scale * jax.random.normal(k4, (nf,))).astype(jnp.float32),
        # BatchNorm affine params at PyTorch defaults (gamma=1, beta=0)
        "g1": jnp.ones((nf,), jnp.float32),
        "be1": jnp.zeros((nf,), jnp.float32),
        "g2": jnp.ones((nf,), jnp.float32),
        "be2": jnp.zeros((nf,), jnp.float32),
    }


def _reference_forward(x_nchw, params):
    """Pure-JAX (XLA) reference for correctness checking (NCHW throughout)."""
    hi = jax.lax.Precision.HIGHEST

    def conv_bn(inp, w_oihw, b, gamma, beta):
        y = jax.lax.conv_general_dilated(
            inp, w_oihw, window_strides=(1, 1), padding=[(1, 1), (1, 1)],
            dimension_numbers=("NCHW", "OIHW", "NCHW"), precision=hi)
        y = y + b.reshape(1, -1, 1, 1)
        mean = jnp.mean(y, axis=(0, 2, 3), keepdims=True)
        var = jnp.mean((y - mean) ** 2, axis=(0, 2, 3), keepdims=True)
        return ((y - mean) * jax.lax.rsqrt(var + EPS)
                * gamma.reshape(1, -1, 1, 1) + beta.reshape(1, -1, 1, 1))

    y = _leaky(conv_bn(x_nchw, params["w1"], params["b1"],
                       params["g1"], params["be1"]))
    z = conv_bn(y, params["w2"], params["b2"], params["g2"], params["be2"])
    return _leaky(x_nchw + z)


if __name__ == "__main__":
    key = jax.random.PRNGKey(0)
    kx, kp = jax.random.split(key)

    N, C, H, W = 2, 4, 16, 16          # nf = 4
    x = jax.random.normal(kx, (N, C, H, W), dtype=jnp.float32)
    params = init_params(kp, C)

    out = res_block_forward(x, params)
    out = jax.block_until_ready(out)

    assert out.shape == (N, C, H, W)
    assert jnp.all(jnp.isfinite(out))

    ref = jax.block_until_ready(_reference_forward(x, params))
    assert jnp.allclose(out, ref, atol=2e-3, rtol=2e-3), (
        float(jnp.max(jnp.abs(out - ref))))

    print("KERNEL_OK")
</pallas_src>

<mosaic_0001>
module attributes {stable_mosaic.version = 11 : i64} {
  func.func @kernel(%arg0: memref<2x4x256xf32, #tpu.memory_space<vmem>>, %arg1: memref<9x4x4xf32, #tpu.memory_space<vmem>>, %arg2: memref<4x1xf32, #tpu.memory_space<vmem>>, %arg3: memref<4x1xf32, #tpu.memory_space<vmem>>, %arg4: memref<4x1xf32, #tpu.memory_space<vmem>>, %arg5: memref<9x4x4xf32, #tpu.memory_space<vmem>>, %arg6: memref<4x1xf32, #tpu.memory_space<vmem>>, %arg7: memref<4x1xf32, #tpu.memory_space<vmem>>, %arg8: memref<4x1xf32, #tpu.memory_space<vmem>>, %arg9: memref<2x4x256xf32, #tpu.memory_space<vmem>>) attributes {dimension_semantics = [], scalar_prefetch = 0 : i64, scratch_operands = 0 : i64, tpu.core_type = #tpu.core_type<tc>} {
    %c0 = arith.constant 0 : index
    %c0_0 = arith.constant 0 : index
    %c0_1 = arith.constant 0 : index
    %0 = vector.load %arg0[%c0, %c0_0, %c0_1] : memref<2x4x256xf32, #tpu.memory_space<vmem>>, vector<1x4x256xf32>
    %1 = vector.shape_cast %0 : vector<1x4x256xf32> to vector<4x256xf32>
    %c1 = arith.constant 1 : index
    %c0_2 = arith.constant 0 : index
    %c0_3 = arith.constant 0 : index
    %2 = vector.load %arg0[%c1, %c0_2, %c0_3] : memref<2x4x256xf32, #tpu.memory_space<vmem>>, vector<1x4x256xf32>
    %3 = vector.shape_cast %2 : vector<1x4x256xf32> to vector<4x256xf32>
    %4 = tpu.concatenate %1, %3 in 1 : vector<4x256xf32>, vector<4x256xf32> -> vector<4x512xf32>
    %5 = tpu.iota {dimensions = array<i32: 1>} : vector<4x512xi32>
    %c15_i32 = arith.constant 15 : i32
    %6 = vector.broadcast %c15_i32 : i32 to vector<4x512xi32>
    %7 = arith.andi %5, %6 : vector<4x512xi32>
    %c4_i32 = arith.constant 4 : i32
    %8 = vector.broadcast %c4_i32 : i32 to vector<4x512xi32>
    %9 = arith.shrsi %5, %8 : vector<4x512xi32>
    %c15_i32_4 = arith.constant 15 : i32
    %10 = vector.broadcast %c15_i32_4 : i32 to vector<4x512xi32>
    %11 = arith.andi %9, %10 : vector<4x512xi32>
    %c1_i32 = arith.constant 1 : i32
    %12 = vector.broadcast %c1_i32 : i32 to vector<4x512xi32>
    %13 = arith.cmpi sge, %11, %12 : vector<4x512xi32>
    %c1_i32_5 = arith.constant 1 : i32
    %14 = vector.broadcast %c1_i32_5 : i32 to vector<4x512xi32>
    %15 = arith.cmpi sge, %7, %14 : vector<4x512xi32>
    %16 = arith.andi %13, %15 : vector<4x512xi1>
    %c1_i32_6 = arith.constant 1 : i32
    %17 = vector.broadcast %c1_i32_6 : i32 to vector<4x512xi32>
    %18 = arith.cmpi sge, %11, %17 : vector<4x512xi32>
    %c1_i32_7 = arith.constant 1 : i32
    %19 = vector.broadcast %c1_i32_7 : i32 to vector<4x512xi32>
    %20 = arith.cmpi sge, %11, %19 : vector<4x512xi32>
    %c14_i32 = arith.constant 14 : i32
    %21 = vector.broadcast %c14_i32 : i32 to vector<4x512xi32>
    %22 = arith.cmpi sle, %7, %21 : vector<4x512xi32>
    %23 = arith.andi %20, %22 : vector<4x512xi1>
    %c1_i32_8 = arith.constant 1 : i32
    %24 = vector.broadcast %c1_i32_8 : i32 to vector<4x512xi32>
    %25 = arith.cmpi sge, %7, %24 : vector<4x512xi32>
    %c14_i32_9 = arith.constant 14 : i32
    %26 = vector.broadcast %c14_i32_9 : i32 to vector<4x512xi32>
    %27 = arith.cmpi sle, %7, %26 : vector<4x512xi32>
    %c14_i32_10 = arith.constant 14 : i32
    %28 = vector.broadcast %c14_i32_10 : i32 to vector<4x512xi32>
    %29 = arith.cmpi sle, %11, %28 : vector<4x512xi32>
    %c1_i32_11 = arith.constant 1 : i32
    %30 = vector.broadcast %c1_i32_11 : i32 to vector<4x512xi32>
    %31 = arith.cmpi sge, %7, %30 : vector<4x512xi32>
    %32 = arith.andi %29, %31 : vector<4x512xi1>
    %c14_i32_12 = arith.constant 14 : i32
    %33 = vector.broadcast %c14_i32_12 : i32 to vector<4x512xi32>
    %34 = arith.cmpi sle, %11, %33 : vector<4x512xi32>
    %c14_i32_13 = arith.constant 14 : i32
    %35 = vector.broadcast %c14_i32_13 : i32 to vector<4x512xi32>
    %36 = arith.cmpi sle, %11, %35 : vector<4x512xi32>
    %c14_i32_14 = arith.constant 14 : i32
    %37 = vector.broadcast %c14_i32_14 : i32 to vector<4x512xi32>
    %38 = arith.cmpi sle, %7, %37 : vector<4x512xi32>
    %39 = arith.andi %36, %38 : vector<4x512xi1>
    %cst = arith.constant 0.000000e+00 : f32
    %40 = vector.broadcast %cst : f32 to vector<4x512xf32>
    %c17_i32 = arith.constant 17 : i32
    %41 = tpu.dynamic_rotate %4 by %c17_i32 dim 1 : vector<4x512xf32>, i32 -> vector<4x512xf32>
    %cst_15 = arith.constant 0.000000e+00 : f32
    %42 = vector.broadcast %cst_15 : f32 to vector<4x512xf32>
    %43 = arith.select %16, %41, %42 : vector<4x512xi1>, vector<4x512xf32>
    %c0_16 = arith.constant 0 : index
    %c0_17 = arith.constant 0 : index
    %c0_18 = arith.constant 0 : index
    %44 = vector.load %arg1[%c0_16, %c0_17, %c0_18] : memref<9x4x4xf32, #tpu.memory_space<vmem>>, vector<1x4x4xf32>
    %45 = vector.shape_cast %44 : vector<1x4x4xf32> to vector<4x4xf32>
    %cst_19 = arith.constant dense<0.000000e+00> : vector<4x512xf32>
    %46 = tpu.matmul %45, %43, %cst_19 {dimension_numbers = #tpu.dot_dimension_numbers<[1], [0], [0], [1], [0, 0, 1, 1], [], []>} : vector<4x4xf32>, vector<4x512xf32>, vector<4x512xf32> -> vector<4x512xf32>
    %47 = arith.addf %40, %46 : vector<4x512xf32>
    %c16_i32 = arith.constant 16 : i32
    %48 = tpu.dynamic_rotate %4 by %c16_i32 dim 1 : vector<4x512xf32>, i32 -> vector<4x512xf32>
    %cst_20 = arith.constant 0.000000e+00 : f32
    %49 = vector.broadcast %cst_20 : f32 to vector<4x512xf32>
    %50 = arith.select %18, %48, %49 : vector<4x512xi1>, vector<4x512xf32>
    %c1_21 = arith.constant 1 : index
    %c0_22 = arith.constant 0 : index
    %c0_23 = arith.constant 0 : index
    %51 = vector.load %arg1[%c1_21, %c0_22, %c0_23] : memref<9x4x4xf32, #tpu.memory_space<vmem>>, vector<1x4x4xf32>
    %52 = vector.shape_cast %51 : vector<1x4x4xf32> to vector<4x4xf32>
    %cst_24 = arith.constant dense<0.000000e+00> : vector<4x512xf32>
    %53 = tpu.matmul %52, %50, %cst_24 {dimension_numbers = #tpu.dot_dimension_numbers<[1], [0], [0], [1], [0, 0, 1, 1], [], []>} : vector<4x4xf32>, vector<4x512xf32>, vector<4x512xf32> -> vector<4x512xf32>
    %54 = arith.addf %47, %53 : vector<4x512xf32>
    %c15_i32_25 = arith.constant 15 : i32
    %55 = tpu.dynamic_rotate %4 by %c15_i32_25 dim 1 : vector<4x512xf32>, i32 -> vector<4x512xf32>
    %cst_26 = arith.constant 0.000000e+00 : f32
    %56 = vector.broadcast %cst_26 : f32 to vector<4x512xf32>
    %57 = arith.select %23, %55, %56 : vector<4x512xi1>, vector<4x512xf32>
    %c2 = arith.constant 2 : index
    %c0_27 = arith.constant 0 : index
    %c0_28 = arith.constant 0 : index
    %58 = vector.load %arg1[%c2, %c0_27, %c0_28] : memref<9x4x4xf32, #tpu.memory_space<vmem>>, vector<1x4x4xf32>
    %59 = vector.shape_cast %58 : vector<1x4x4xf32> to vector<4x4xf32>
    %cst_29 = arith.constant dense<0.000000e+00> : vector<4x512xf32>
    %60 = tpu.matmul %59, %57, %cst_29 {dimension_numbers = #tpu.dot_dimension_numbers<[1], [0], [0], [1], [0, 0, 1, 1], [], []>} : vector<4x4xf32>, vector<4x512xf32>, vector<4x512xf32> -> vector<4x512xf32>
    %61 = arith.addf %54, %60 : vector<4x512xf32>
    %c1_i32_30 = arith.constant 1 : i32
    %62 = tpu.dynamic_rotate %4 by %c1_i32_30 dim 1 : vector<4x512xf32>, i32 -> vector<4x512xf32>
    %cst_31 = arith.constant 0.000000e+00 : f32
    %63 = vector.broadcast %cst_31 : f32 to vector<4x512xf32>
    %64 = arith.select %25, %62, %63 : vector<4x512xi1>, vector<4x512xf32>
    %c3 = arith.constant 3 : index
    %c0_32 = arith.constant 0 : index
    %c0_33 = arith.constant 0 : index
    %65 = vector.load %arg1[%c3, %c0_32, %c0_33] : memref<9x4x4xf32, #tpu.memory_space<vmem>>, vector<1x4x4xf32>
    %66 = vector.shape_cast %65 : vector<1x4x4xf32> to vector<4x4xf32>
    %cst_34 = arith.constant dense<0.000000e+00> : vector<4x512xf32>
    %67 = tpu.matmul %66, %64, %cst_34 {dimension_numbers = #tpu.dot_dimension_numbers<[1], [0], [0], [1], [0, 0, 1, 1], [], []>} : vector<4x4xf32>, vector<4x512xf32>, vector<4x512xf32> -> vector<4x512xf32>
    %68 = arith.addf %61, %67 : vector<4x512xf32>
    %c4 = arith.constant 4 : index
    %c0_35 = arith.constant 0 : index
    %c0_36 = arith.constant 0 : index
    %69 = vector.load %arg1[%c4, %c0_35, %c0_36] : memref<9x4x4xf32, #tpu.memory_space<vmem>>, vector<1x4x4xf32>
    %70 = vector.shape_cast %69 : vector<1x4x4xf32> to vector<4x4xf32>
    %cst_37 = arith.constant dense<0.000000e+00> : vector<4x512xf32>
    %71 = tpu.matmul %70, %4, %cst_37 {dimension_numbers = #tpu.dot_dimension_numbers<[1], [0], [0], [1], [0, 0, 1, 1], [], []>} : vector<4x4xf32>, vector<4x512xf32>, vector<4x512xf32> -> vector<4x512xf32>
    %72 = arith.addf %68, %71 : vector<4x512xf32>
    %c511_i32 = arith.constant 511 : i32
    %73 = tpu.dynamic_rotate %4 by %c511_i32 dim 1 : vector<4x512xf32>, i32 -> vector<4x512xf32>
    %cst_38 = arith.constant 0.000000e+00 : f32
    %74 = vector.broadcast %cst_38 : f32 to vector<4x512xf32>
    %75 = arith.select %27, %73, %74 : vector<4x512xi1>, vector<4x512xf32>
    %c5 = arith.constant 5 : index
    %c0_39 = arith.constant 0 : index
    %c0_40 = arith.constant 0 : index
    %76 = vector.load %arg1[%c5, %c0_39, %c0_40] : memref<9x4x4xf32, #tpu.memory_space<vmem>>, vector<1x4x4xf32>
    %77 = vector.shape_cast %76 : vector<1x4x4xf32> to vector<4x4xf32>
    %cst_41 = arith.constant dense<0.000000e+00> : vector<4x512xf32>
    %78 = tpu.matmul %77, %75, %cst_41 {dimension_numbers = #tpu.dot_dimension_numbers<[1], [0], [0], [1], [0, 0, 1, 1], [], []>} : vector<4x4xf32>, vector<4x512xf32>, vector<4x512xf32> -> vector<4x512xf32>
    %79 = arith.addf %72, %78 : vector<4x512xf32>
    %c497_i32 = arith.constant 497 : i32
    %80 = tpu.dynamic_rotate %4 by %c497_i32 dim 1 : vector<4x512xf32>, i32 -> vector<4x512xf32>
    %cst_42 = arith.constant 0.000000e+00 : f32
    %81 = vector.broadcast %cst_42 : f32 to vector<4x512xf32>
    %82 = arith.select %32, %80, %81 : vector<4x512xi1>, vector<4x512xf32>
    %c6 = arith.constant 6 : index
    %c0_43 = arith.constant 0 : index
    %c0_44 = arith.constant 0 : index
    %83 = vector.load %arg1[%c6, %c0_43, %c0_44] : memref<9x4x4xf32, #tpu.memory_space<vmem>>, vector<1x4x4xf32>
    %84 = vector.shape_cast %83 : vector<1x4x4xf32> to vector<4x4xf32>
    %cst_45 = arith.constant dense<0.000000e+00> : vector<4x512xf32>
    %85 = tpu.matmul %84, %82, %cst_45 {dimension_numbers = #tpu.dot_dimension_numbers<[1], [0], [0], [1], [0, 0, 1, 1], [], []>} : vector<4x4xf32>, vector<4x512xf32>, vector<4x512xf32> -> vector<4x512xf32>
    %86 = arith.addf %79, %85 : vector<4x512xf32>
    %c496_i32 = arith.constant 496 : i32
    %87 = tpu.dynamic_rotate %4 by %c496_i32 dim 1 : vector<4x512xf32>, i32 -> vector<4x512xf32>
    %cst_46 = arith.constant 0.000000e+00 : f32
    %88 = vector.broadcast %cst_46 : f32 to vector<4x512xf32>
    %89 = arith.select %34, %87, %88 : vector<4x512xi1>, vector<4x512xf32>
    %c7 = arith.constant 7 : index
    %c0_47 = arith.constant 0 : index
    %c0_48 = arith.constant 0 : index
    %90 = vector.load %arg1[%c7, %c0_47, %c0_48] : memref<9x4x4xf32, #tpu.memory_space<vmem>>, vector<1x4x4xf32>
    %91 = vector.shape_cast %90 : vector<1x4x4xf32> to vector<4x4xf32>
    %cst_49 = arith.constant dense<0.000000e+00> : vector<4x512xf32>
    %92 = tpu.matmul %91, %89, %cst_49 {dimension_numbers = #tpu.dot_dimension_numbers<[1], [0], [0], [1], [0, 0, 1, 1], [], []>} : vector<4x4xf32>, vector<4x512xf32>, vector<4x512xf32> -> vector<4x512xf32>
    %93 = arith.addf %86, %92 : vector<4x512xf32>
    %c495_i32 = arith.constant 495 : i32
    %94 = tpu.dynamic_rotate %4 by %c495_i32 dim 1 : vector<4x512xf32>, i32 -> vector<4x512xf32>
    %cst_50 = arith.constant 0.000000e+00 : f32
    %95 = vector.broadcast %cst_50 : f32 to vector<4x512xf32>
    %96 = arith.select %39, %94, %95 : vector<4x512xi1>, vector<4x512xf32>
    %c8 = arith.constant 8 : index
    %c0_51 = arith.constant 0 : index
    %c0_52 = arith.constant 0 : index
    %97 = vector.load %arg1[%c8, %c0_51, %c0_52] : memref<9x4x4xf32, #tpu.memory_space<vmem>>, vector<1x4x4xf32>
    %98 = vector.shape_cast %97 : vector<1x4x4xf32> to vector<4x4xf32>
    %cst_53 = arith.constant dense<0.000000e+00> : vector<4x512xf32>
    %99 = tpu.matmul %98, %96, %cst_53 {dimension_numbers = #tpu.dot_dimension_numbers<[1], [0], [0], [1], [0, 0, 1, 1], [], []>} : vector<4x4xf32>, vector<4x512xf32>, vector<4x512xf32> -> vector<4x512xf32>
    %100 = arith.addf %93, %99 : vector<4x512xf32>
    %c0_54 = arith.constant 0 : index
    %c0_55 = arith.constant 0 : index
    %101 = vector.load %arg2[%c0_54, %c0_55] : memref<4x1xf32, #tpu.memory_space<vmem>>, vector<4x1xf32>
    %102 = vector.broadcast %101 : vector<4x1xf32> to vector<4x512xf32>
    %103 = arith.addf %100, %102 : vector<4x512xf32>
    %cst_56 = arith.constant dense<0.000000e+00> : vector<4xf32>
    %104 = vector.multi_reduction <add>, %103, %cst_56 [1] : vector<4x512xf32> to vector<4xf32>
    %105 = vector.shape_cast %104 : vector<4xf32> to vector<4x1xf32>
    %cst_57 = arith.constant 0.001953125 : f32
    %106 = vector.broadcast %cst_57 : f32 to vector<4x1xf32>
    %107 = arith.mulf %105, %106 : vector<4x1xf32>
    %108 = vector.broadcast %107 : vector<4x1xf32> to vector<4x512xf32>
    %109 = arith.subf %103, %108 : vector<4x512xf32>
    %110 = arith.mulf %109, %109 : vector<4x512xf32>
    %cst_58 = arith.constant dense<0.000000e+00> : vector<4xf32>
    %111 = vector.multi_reduction <add>, %110, %cst_58 [1] : vector<4x512xf32> to vector<4xf32>
    %112 = vector.shape_cast %111 : vector<4xf32> to vector<4x1xf32>
    %cst_59 = arith.constant 0.001953125 : f32
    %113 = vector.broadcast %cst_59 : f32 to vector<4x1xf32>
    %114 = arith.mulf %112, %113 : vector<4x1xf32>
    %cst_60 = arith.constant 9.99999974E-6 : f32
    %115 = vector.broadcast %cst_60 : f32 to vector<4x1xf32>
    %116 = arith.addf %114, %115 : vector<4x1xf32>
    %117 = math.rsqrt %116 : vector<4x1xf32>
    %c0_61 = arith.constant 0 : index
    %c0_62 = arith.constant 0 : index
    %118 = vector.load %arg3[%c0_61, %c0_62] : memref<4x1xf32, #tpu.memory_space<vmem>>, vector<4x1xf32>
    %119 = arith.mulf %117, %118 : vector<4x1xf32>
    %120 = vector.broadcast %119 : vector<4x1xf32> to vector<4x512xf32>
    %121 = arith.mulf %109, %120 : vector<4x512xf32>
    %c0_63 = arith.constant 0 : index
    %c0_64 = arith.constant 0 : index
    %122 = vector.load %arg4[%c0_63, %c0_64] : memref<4x1xf32, #tpu.memory_space<vmem>>, vector<4x1xf32>
    %123 = vector.broadcast %122 : vector<4x1xf32> to vector<4x512xf32>
    %124 = arith.addf %121, %123 : vector<4x512xf32>
    %cst_65 = arith.constant 0.000000e+00 : f32
    %125 = vector.broadcast %cst_65 : f32 to vector<4x512xf32>
    %126 = arith.cmpf ogt, %124, %125 : vector<4x512xf32>
    %cst_66 = arith.constant 0.00999999977 : f32
    %127 = vector.broadcast %cst_66 : f32 to vector<4x512xf32>
    %128 = arith.mulf %127, %124 : vector<4x512xf32>
    %129 = arith.select %126, %124, %128 : vector<4x512xi1>, vector<4x512xf32>
    %cst_67 = arith.constant 0.000000e+00 : f32
    %130 = vector.broadcast %cst_67 : f32 to vector<4x512xf32>
    %c17_i32_68 = arith.constant 17 : i32
    %131 = tpu.dynamic_rotate %129 by %c17_i32_68 dim 1 : vector<4x512xf32>, i32 -> vector<4x512xf32>
    %cst_69 = arith.constant 0.000000e+00 : f32
    %132 = vector.broadcast %cst_69 : f32 to vector<4x512xf32>
    %133 = arith.select %16, %131, %132 : vector<4x512xi1>, vector<4x512xf32>
    %c0_70 = arith.constant 0 : index
    %c0_71 = arith.constant 0 : index
    %c0_72 = arith.constant 0 : index
    %134 = vector.load %arg5[%c0_70, %c0_71, %c0_72] : memref<9x4x4xf32, #tpu.memory_space<vmem>>, vector<1x4x4xf32>
    %135 = vector.shape_cast %134 : vector<1x4x4xf32> to vector<4x4xf32>
    %cst_73 = arith.constant dense<0.000000e+00> : vector<4x512xf32>
    %136 = tpu.matmul %135, %133, %cst_73 {dimension_numbers = #tpu.dot_dimension_numbers<[1], [0], [0], [1], [0, 0, 1, 1], [], []>} : vector<4x4xf32>, vector<4x512xf32>, vector<4x512xf32> -> vector<4x512xf32>
    %137 = arith.addf %130, %136 : vector<4x512xf32>
    %c16_i32_74 = arith.constant 16 : i32
    %138 = tpu.dynamic_rotate %129 by %c16_i32_74 dim 1 : vector<4x512xf32>, i32 -> vector<4x512xf32>
    %cst_75 = arith.constant 0.000000e+00 : f32
    %139 = vector.broadcast %cst_75 : f32 to vector<4x512xf32>
    %140 = arith.select %18, %138, %139 : vector<4x512xi1>, vector<4x512xf32>
    %c1_76 = arith.constant 1 : index
    %c0_77 = arith.constant 0 : index
    %c0_78 = arith.constant 0 : index
    %141 = vector.load %arg5[%c1_76, %c0_77, %c0_78] : memref<9x4x4xf32, #tpu.memory_space<vmem>>, vector<1x4x4xf32>
    %142 = vector.shape_cast %141 : vector<1x4x4xf32> to vector<4x4xf32>
    %cst_79 = arith.constant dense<0.000000e+00> : vector<4x512xf32>
    %143 = tpu.matmul %142, %140, %cst_79 {dimension_numbers = #tpu.dot_dimension_numbers<[1], [0], [0], [1], [0, 0, 1, 1], [], []>} : vector<4x4xf32>, vector<4x512xf32>, vector<4x512xf32> -> vector<4x512xf32>
    %144 = arith.addf %137, %143 : vector<4x512xf32>
    %c15_i32_80 = arith.constant 15 : i32
    %145 = tpu.dynamic_rotate %129 by %c15_i32_80 dim 1 : vector<4x512xf32>, i32 -> vector<4x512xf32>
    %cst_81 = arith.constant 0.000000e+00 : f32
    %146 = vector.broadcast %cst_81 : f32 to vector<4x512xf32>
    %147 = arith.select %23, %145, %146 : vector<4x512xi1>, vector<4x512xf32>
    %c2_82 = arith.constant 2 : index
    %c0_83 = arith.constant 0 : index
    %c0_84 = arith.constant 0 : index
    %148 = vector.load %arg5[%c2_82, %c0_83, %c0_84] : memref<9x4x4xf32, #tpu.memory_space<vmem>>, vector<1x4x4xf32>
    %149 = vector.shape_cast %148 : vector<1x4x4xf32> to vector<4x4xf32>
    %cst_85 = arith.constant dense<0.000000e+00> : vector<4x512xf32>
    %150 = tpu.matmul %149, %147, %cst_85 {dimension_numbers = #tpu.dot_dimension_numbers<[1], [0], [0], [1], [0, 0, 1, 1], [], []>} : vector<4x4xf32>, vector<4x512xf32>, vector<4x512xf32> -> vector<4x512xf32>
    %151 = arith.addf %144, %150 : vector<4x512xf32>
    %c1_i32_86 = arith.constant 1 : i32
    %152 = tpu.dynamic_rotate %129 by %c1_i32_86 dim 1 : vector<4x512xf32>, i32 -> vector<4x512xf32>
    %cst_87 = arith.constant 0.000000e+00 : f32
    %153 = vector.broadcast %cst_87 : f32 to vector<4x512xf32>
    %154 = arith.select %25, %152, %153 : vector<4x512xi1>, vector<4x512xf32>
    %c3_88 = arith.constant 3 : index
    %c0_89 = arith.constant 0 : index
    %c0_90 = arith.constant 0 : index
    %155 = vector.load %arg5[%c3_88, %c0_89, %c0_90] : memref<9x4x4xf32, #tpu.memory_space<vmem>>, vector<1x4x4xf32>
    %156 = vector.shape_cast %155 : vector<1x4x4xf32> to vector<4x4xf32>
    %cst_91 = arith.constant dense<0.000000e+00> : vector<4x512xf32>
    %157 = tpu.matmul %156, %154, %cst_91 {dimension_numbers = #tpu.dot_dimension_numbers<[1], [0], [0], [1], [0, 0, 1, 1], [], []>} : vector<4x4xf32>, vector<4x512xf32>, vector<4x512xf32> -> vector<4x512xf32>
    %158 = arith.addf %151, %157 : vector<4x512xf32>
    %c4_92 = arith.constant 4 : index
    %c0_93 = arith.constant 0 : index
    %c0_94 = arith.constant 0 : index
    %159 = vector.load %arg5[%c4_92, %c0_93, %c0_94] : memref<9x4x4xf32, #tpu.memory_space<vmem>>, vector<1x4x4xf32>
    %160 = vector.shape_cast %159 : vector<1x4x4xf32> to vector<4x4xf32>
    %cst_95 = arith.constant dense<0.000000e+00> : vector<4x512xf32>
    %161 = tpu.matmul %160, %129, %cst_95 {dimension_numbers = #tpu.dot_dimension_numbers<[1], [0], [0], [1], [0, 0, 1, 1], [], []>} : vector<4x4xf32>, vector<4x512xf32>, vector<4x512xf32> -> vector<4x512xf32>
    %162 = arith.addf %158, %161 : vector<4x512xf32>
    %c511_i32_96 = arith.constant 511 : i32
    %163 = tpu.dynamic_rotate %129 by %c511_i32_96 dim 1 : vector<4x512xf32>, i32 -> vector<4x512xf32>
    %cst_97 = arith.constant 0.000000e+00 : f32
    %164 = vector.broadcast %cst_97 : f32 to vector<4x512xf32>
    %165 = arith.select %27, %163, %164 : vector<4x512xi1>, vector<4x512xf32>
    %c5_98 = arith.constant 5 : index
    %c0_99 = arith.constant 0 : index
    %c0_100 = arith.constant 0 : index
    %166 = vector.load %arg5[%c5_98, %c0_99, %c0_100] : memref<9x4x4xf32, #tpu.memory_space<vmem>>, vector<1x4x4xf32>
    %167 = vector.shape_cast %166 : vector<1x4x4xf32> to vector<4x4xf32>
    %cst_101 = arith.constant dense<0.000000e+00> : vector<4x512xf32>
    %168 = tpu.matmul %167, %165, %cst_101 {dimension_numbers = #tpu.dot_dimension_numbers<[1], [0], [0], [1], [0, 0, 1, 1], [], []>} : vector<4x4xf32>, vector<4x512xf32>, vector<4x512xf32> -> vector<4x512xf32>
    %169 = arith.addf %162, %168 : vector<4x512xf32>
    %c497_i32_102 = arith.constant 497 : i32
    %170 = tpu.dynamic_rotate %129 by %c497_i32_102 dim 1 : vector<4x512xf32>, i32 -> vector<4x512xf32>
    %cst_103 = arith.constant 0.000000e+00 : f32
    %171 = vector.broadcast %cst_103 : f32 to vector<4x512xf32>
    %172 = arith.select %32, %170, %171 : vector<4x512xi1>, vector<4x512xf32>
    %c6_104 = arith.constant 6 : index
    %c0_105 = arith.constant 0 : index
    %c0_106 = arith.constant 0 : index
    %173 = vector.load %arg5[%c6_104, %c0_105, %c0_106] : memref<9x4x4xf32, #tpu.memory_space<vmem>>, vector<1x4x4xf32>
    %174 = vector.shape_cast %173 : vector<1x4x4xf32> to vector<4x4xf32>
    %cst_107 = arith.constant dense<0.000000e+00> : vector<4x512xf32>
    %175 = tpu.matmul %174, %172, %cst_107 {dimension_numbers = #tpu.dot_dimension_numbers<[1], [0], [0], [1], [0, 0, 1, 1], [], []>} : vector<4x4xf32>, vector<4x512xf32>, vector<4x512xf32> -> vector<4x512xf32>
    %176 = arith.addf %169, %175 : vector<4x512xf32>
    %c496_i32_108 = arith.constant 496 : i32
    %177 = tpu.dynamic_rotate %129 by %c496_i32_108 dim 1 : vector<4x512xf32>, i32 -> vector<4x512xf32>
    %cst_109 = arith.constant 0.000000e+00 : f32
    %178 = vector.broadcast %cst_109 : f32 to vector<4x512xf32>
    %179 = arith.select %34, %177, %178 : vector<4x512xi1>, vector<4x512xf32>
    %c7_110 = arith.constant 7 : index
    %c0_111 = arith.constant 0 : index
    %c0_112 = arith.constant 0 : index
    %180 = vector.load %arg5[%c7_110, %c0_111, %c0_112] : memref<9x4x4xf32, #tpu.memory_space<vmem>>, vector<1x4x4xf32>
    %181 = vector.shape_cast %180 : vector<1x4x4xf32> to vector<4x4xf32>
    %cst_113 = arith.constant dense<0.000000e+00> : vector<4x512xf32>
    %182 = tpu.matmul %181, %179, %cst_113 {dimension_numbers = #tpu.dot_dimension_numbers<[1], [0], [0], [1], [0, 0, 1, 1], [], []>} : vector<4x4xf32>, vector<4x512xf32>, vector<4x512xf32> -> vector<4x512xf32>
    %183 = arith.addf %176, %182 : vector<4x512xf32>
    %c495_i32_114 = arith.constant 495 : i32
    %184 = tpu.dynamic_rotate %129 by %c495_i32_114 dim 1 : vector<4x512xf32>, i32 -> vector<4x512xf32>
    %cst_115 = arith.constant 0.000000e+00 : f32
    %185 = vector.broadcast %cst_115 : f32 to vector<4x512xf32>
    %186 = arith.select %39, %184, %185 : vector<4x512xi1>, vector<4x512xf32>
    %c8_116 = arith.constant 8 : index
    %c0_117 = arith.constant 0 : index
    %c0_118 = arith.constant 0 : index
    %187 = vector.load %arg5[%c8_116, %c0_117, %c0_118] : memref<9x4x4xf32, #tpu.memory_space<vmem>>, vector<1x4x4xf32>
    %188 = vector.shape_cast %187 : vector<1x4x4xf32> to vector<4x4xf32>
    %cst_119 = arith.constant dense<0.000000e+00> : vector<4x512xf32>
    %189 = tpu.matmul %188, %186, %cst_119 {dimension_numbers = #tpu.dot_dimension_numbers<[1], [0], [0], [1], [0, 0, 1, 1], [], []>} : vector<4x4xf32>, vector<4x512xf32>, vector<4x512xf32> -> vector<4x512xf32>
    %190 = arith.addf %183, %189 : vector<4x512xf32>
    %c0_120 = arith.constant 0 : index
    %c0_121 = arith.constant 0 : index
    %191 = vector.load %arg6[%c0_120, %c0_121] : memref<4x1xf32, #tpu.memory_space<vmem>>, vector<4x1xf32>
    %192 = vector.broadcast %191 : vector<4x1xf32> to vector<4x512xf32>
    %193 = arith.addf %190, %192 : vector<4x512xf32>
    %cst_122 = arith.constant dense<0.000000e+00> : vector<4xf32>
    %194 = vector.multi_reduction <add>, %193, %cst_122 [1] : vector<4x512xf32> to vector<4xf32>
    %195 = vector.shape_cast %194 : vector<4xf32> to vector<4x1xf32>
    %cst_123 = arith.constant 0.001953125 : f32
    %196 = vector.broadcast %cst_123 : f32 to vector<4x1xf32>
    %197 = arith.mulf %195, %196 : vector<4x1xf32>
    %198 = vector.broadcast %197 : vector<4x1xf32> to vector<4x512xf32>
    %199 = arith.subf %193, %198 : vector<4x512xf32>
    %200 = arith.mulf %199, %199 : vector<4x512xf32>
    %cst_124 = arith.constant dense<0.000000e+00> : vector<4xf32>
    %201 = vector.multi_reduction <add>, %200, %cst_124 [1] : vector<4x512xf32> to vector<4xf32>
    %202 = vector.shape_cast %201 : vector<4xf32> to vector<4x1xf32>
    %cst_125 = arith.constant 0.001953125 : f32
    %203 = vector.broadcast %cst_125 : f32 to vector<4x1xf32>
    %204 = arith.mulf %202, %203 : vector<4x1xf32>
    %cst_126 = arith.constant 9.99999974E-6 : f32
    %205 = vector.broadcast %cst_126 : f32 to vector<4x1xf32>
    %206 = arith.addf %204, %205 : vector<4x1xf32>
    %207 = math.rsqrt %206 : vector<4x1xf32>
    %c0_127 = arith.constant 0 : index
    %c0_128 = arith.constant 0 : index
    %208 = vector.load %arg7[%c0_127, %c0_128] : memref<4x1xf32, #tpu.memory_space<vmem>>, vector<4x1xf32>
    %209 = arith.mulf %207, %208 : vector<4x1xf32>
    %210 = vector.broadcast %209 : vector<4x1xf32> to vector<4x512xf32>
    %211 = arith.mulf %199, %210 : vector<4x512xf32>
    %c0_129 = arith.constant 0 : index
    %c0_130 = arith.constant 0 : index
    %212 = vector.load %arg8[%c0_129, %c0_130] : memref<4x1xf32, #tpu.memory_space<vmem>>, vector<4x1xf32>
    %213 = vector.broadcast %212 : vector<4x1xf32> to vector<4x512xf32>
    %214 = arith.addf %211, %213 : vector<4x512xf32>
    %215 = arith.addf %4, %214 : vector<4x512xf32>
    %cst_131 = arith.constant 0.000000e+00 : f32
    %216 = vector.broadcast %cst_131 : f32 to vector<4x512xf32>
    %217 = arith.cmpf ogt, %215, %216 : vector<4x512xf32>
    %cst_132 = arith.constant 0.00999999977 : f32
    %218 = vector.broadcast %cst_132 : f32 to vector<4x512xf32>
    %219 = arith.mulf %218, %215 : vector<4x512xf32>
    %220 = arith.select %217, %215, %219 : vector<4x512xi1>, vector<4x512xf32>
    %221 = vector.extract_strided_slice %220 {offsets = [0, 0], sizes = [4, 256], strides = [1, 1]} : vector<4x512xf32> to vector<4x256xf32>
    %c0_133 = arith.constant 0 : index
    %c0_134 = arith.constant 0 : index
    %c0_135 = arith.constant 0 : index
    %222 = vector.load %arg9[%c0_133, %c0_134, %c0_135] : memref<2x4x256xf32, #tpu.memory_space<vmem>>, vector<1x4x256xf32>
    %223 = vector.shape_cast %222 : vector<1x4x256xf32> to vector<4x256xf32>
    %224 = vector.shape_cast %221 : vector<4x256xf32> to vector<1x4x256xf32>
    tpu.vector_store %arg9[%c0_133, %c0_134, %c0_135], %224 {strides = array<i32>} : memref<2x4x256xf32, #tpu.memory_space<vmem>>, vector<1x4x256xf32>,
    %225 = vector.extract_strided_slice %220 {offsets = [0, 256], sizes = [4, 256], strides = [1, 1]} : vector<4x512xf32> to vector<4x256xf32>
    %c1_136 = arith.constant 1 : index
    %c0_137 = arith.constant 0 : index
    %c0_138 = arith.constant 0 : index
    %226 = vector.load %arg9[%c1_136, %c0_137, %c0_138] : memref<2x4x256xf32, #tpu.memory_space<vmem>>, vector<1x4x256xf32>
    %227 = vector.shape_cast %226 : vector<1x4x256xf32> to vector<4x256xf32>
    %228 = vector.shape_cast %225 : vector<4x256xf32> to vector<1x4x256xf32>
    tpu.vector_store %arg9[%c1_136, %c0_137, %c0_138], %228 {strides = array<i32>} : memref<2x4x256xf32, #tpu.memory_space<vmem>>, vector<1x4x256xf32>,
    return
  }
}

</mosaic_0001>

<llo_original>
// kernel: res_block_forward.1
$region0: #{res_block_forward.1}
  #allocation0 [shape = 'u32[]', space=smem, size = 0x4, offset = 0x4, fixed_abs, tag = 'smem constant byte address 0x4 - core index']
  #allocation1 [shape = 'u32[144,128]{1,0:T(1,128)}', space=vmem, size = 0x12000, scoped, tag = 'internal scratch']
  %s0 = inlined_call_operand.vmem [shape: f32[2,4,256], index: 0, kind: input, shape index: {}]
  %s1 = inlined_call_operand.vmem [shape: f32[9,4,4], index: 1, kind: input, shape index: {}]
  %s2 = inlined_call_operand.vmem [shape: f32[4,1], index: 2, kind: input, shape index: {}]
  %s3 = inlined_call_operand.vmem [shape: f32[4,1], index: 3, kind: input, shape index: {}]
  %s4 = inlined_call_operand.vmem [shape: f32[4,1], index: 4, kind: input, shape index: {}]
  %s5 = inlined_call_operand.vmem [shape: f32[9,4,4], index: 5, kind: input, shape index: {}]
  %s6 = inlined_call_operand.vmem [shape: f32[4,1], index: 6, kind: input, shape index: {}]
  %s7 = inlined_call_operand.vmem [shape: f32[4,1], index: 7, kind: input, shape index: {}]
  %s8 = inlined_call_operand.vmem [shape: f32[4,1], index: 8, kind: input, shape index: {}]
  %s9 = inlined_call_operand.vmem [shape: f32[2,4,256], index: 9, kind: output, shape index: {}]
  %s10 = sld [smem:[#allocation0]]
  $region46: #{res_block_forward.1} parent=0
    _
  %s12 = ssub.s32 1, %s10
  %s13 = scalar_select 0, %s12, %s10
  // Predicated region
  $region2: #{res_block_forward.1} parent=0 // pred_check
    _
  $region3: #{res_block_forward.1} parent=0 // pred_check_branch
    %15 = sbr.rel (0) target = $region5
  $region4: #{res_block_forward.1} parent=0 // pred_region
    _
  $region5: #{res_block_forward.1} parent=0 // pred_fallthru
    _
  // Predicated region
  $region6: #{res_block_forward.1} parent=0 // pred_check
    _
  $region7: #{res_block_forward.1} parent=0 // pred_check_branch
    %17 = sbr.rel (0) target = $region9
  $region8: #{res_block_forward.1} parent=0 // pred_region
    _
  $region9: #{res_block_forward.1} parent=0 // pred_fallthru
    _
  // Predicated region
  $region10: #{res_block_forward.1} parent=0 // pred_check
    _
  $region11: #{res_block_forward.1} parent=0 // pred_check_branch
    %19 = sbr.rel (0) target = $region13
  $region12: #{res_block_forward.1} parent=0 // pred_region
    _
  $region13: #{res_block_forward.1} parent=0 // pred_fallthru
    _
  // Predicated region
  $region14: #{res_block_forward.1} parent=0 // pred_check
    _
  $region15: #{res_block_forward.1} parent=0 // pred_check_branch
    %21 = sbr.rel (0) target = $region17
  $region16: #{res_block_forward.1} parent=0 // pred_region
    _
  $region17: #{res_block_forward.1} parent=0 // pred_fallthru
    _
  // Predicated region
  $region18: #{res_block_forward.1} parent=0 // pred_check
    _
  $region19: #{res_block_forward.1} parent=0 // pred_check_branch
    %23 = sbr.rel (0) target = $region21
  $region20: #{res_block_forward.1} parent=0 // pred_region
    _
  $region21: #{res_block_forward.1} parent=0 // pred_fallthru
    _
  // Predicated region
  $region22: #{res_block_forward.1} parent=0 // pred_check
    _
  $region23: #{res_block_forward.1} parent=0 // pred_check_branch
    %25 = sbr.rel (0) target = $region25
  $region24: #{res_block_forward.1} parent=0 // pred_region
    _
  $region25: #{res_block_forward.1} parent=0 // pred_fallthru
    _
  // Predicated region
  $region26: #{res_block_forward.1} parent=0 // pred_check
    _
  $region27: #{res_block_forward.1} parent=0 // pred_check_branch
    %27 = sbr.rel (0) target = $region29
  $region28: #{res_block_forward.1} parent=0 // pred_region
    _
  $region29: #{res_block_forward.1} parent=0 // pred_fallthru
    _
  // Predicated region
  $region30: #{res_block_forward.1} parent=0 // pred_check
    _
  $region31: #{res_block_forward.1} parent=0 // pred_check_branch
    %29 = sbr.rel (0) target = $region33
  $region32: #{res_block_forward.1} parent=0 // pred_region
    _
  $region33: #{res_block_forward.1} parent=0 // pred_fallthru
    _
  // Predicated region
  $region34: #{res_block_forward.1} parent=0 // pred_check
    _
  $region35: #{res_block_forward.1} parent=0 // pred_check_branch
    %31 = sbr.rel (0) target = $region37
  $region36: #{res_block_forward.1} parent=0 // pred_region
    _
  $region37: #{res_block_forward.1} parent=0 // pred_fallthru
    _
  %v32 = vld [vmem:[%s0] sm:$0xff]
  %s33 = scalar_lea.vmem %s0, 8
  %v34 = vld [vmem:[%s33] sm:$0xff]
  %v36 = vcombine.high %v32, %v32
  %v39 = vcombine.high %v34, %v34
  %v41 = vlaneseq
  %v42 = vand.u32 %v41, 127
  %v43 = vadd.s32 %v42, 128
  %v44 = vadd.s32 %v42, 256
  %v45 = vadd.s32 %v42, 384
  %v46 = vand.u32 %v42, 15
  %v47 = vand.u32 %v43, 15
  %v48 = vand.u32 %v44, 15
  %v49 = vand.u32 %v45, 15
  %v50 = vshra.s32 %v42, 4
  %v51 = vshra.s32 %v43, 4
  %v52 = vshra.s32 %v44, 4
  %v53 = vshra.s32 %v45, 4
  %v54 = vand.u32 %v50, 15
  %v55 = vand.u32 %v51, 15
  %v56 = vand.u32 %v52, 15
  %v57 = vand.u32 %v53, 15
  %vm58 = vcmp.ge.s32.totalorder %v54, 1
  %vm59 = vcmp.ge.s32.totalorder %v55, 1
  %vm60 = vcmp.ge.s32.totalorder %v56, 1
  %vm61 = vcmp.ge.s32.totalorder %v57, 1
  %vm62 = vcmp.ge.s32.totalorder %v46, 1
  %vm63 = vcmp.ge.s32.totalorder %v47, 1
  %vm64 = vcmp.ge.s32.totalorder %v48, 1
  %vm65 = vcmp.ge.s32.totalorder %v49, 1
  %vm66 = vmand %vm58, %vm62
  %vm67 = vmand %vm59, %vm63
  %vm68 = vmand %vm60, %vm64
  %vm69 = vmand %vm61, %vm65
  %vm70 = vcmp.le.s32.totalorder %v46, 14
  %vm71 = vcmp.le.s32.totalorder %v47, 14
  %vm72 = vcmp.le.s32.totalorder %v48, 14
  %vm73 = vcmp.le.s32.totalorder %v49, 14
  %vm74 = vmand %vm58, %vm70
  %vm75 = vmand %vm59, %vm71
  %vm76 = vmand %vm60, %vm72
  %vm77 = vmand %vm61, %vm73
  %vm78 = vcmp.le.s32.totalorder %v54, 14
  %vm79 = vcmp.le.s32.totalorder %v55, 14
  %vm80 = vcmp.le.s32.totalorder %v56, 14
  %vm81 = vcmp.le.s32.totalorder %v57, 14
  %vm82 = vmand %vm78, %vm62
  %vm83 = vmand %vm79, %vm63
  %vm84 = vmand %vm80, %vm64
  %vm85 = vmand %vm81, %vm65
  %vm86 = vmand %vm78, %vm70
  %vm87 = vmand %vm79, %vm71
  %vm88 = vmand %vm80, %vm72
  %vm89 = vmand %vm81, %vm73
  %90 = vrot.lane.b32.xlu0 %v32, 17
  %v91 = vpop.permute.xlu0 %90
  %92 = vrot.lane.b32.xlu0 %v36, 17
  %v93 = vpop.permute.xlu0 %92
  %94 = vrot.lane.b32.xlu0 %v34, 17
  %v95 = vpop.permute.xlu0 %94
  %96 = vrot.lane.b32.xlu0 %v39, 17
  %v97 = vpop.permute.xlu0 %96
  %vm98 = vcmp.lt.s32.totalorder %v42, 17
  %v99 = vsel %vm98, %v95, %v97
  %v100 = vsel %vm98, %v93, %v95
  %v101 = vsel %vm98, %v91, %v93
  %v102 = vsel %vm98, %v97, %v91
  %v103 = vsel %vm66, %v102, 0.0
  %v104 = vsel %vm67, %v101, 0.0
  %v105 = vsel %vm68, %v100, 0.0
  %v106 = vsel %vm69, %v99, 0.0
  %v107 = vld [vmem:[%s1] sm:$0xf]
  %108 = vrot.lane.b32.xlu0 %v32, 16
  %v109 = vpop.permute.xlu0 %108
  %110 = vrot.lane.b32.xlu0 %v36, 16
  %v111 = vpop.permute.xlu0 %110
  %112 = vrot.lane.b32.xlu0 %v34, 16
  %v113 = vpop.permute.xlu0 %112
  %114 = vrot.lane.b32.xlu0 %v39, 16
  %v115 = vpop.permute.xlu0 %114
  %vm116 = vcmp.lt.s32.totalorder %v42, 16
  %v117 = vsel %vm116, %v113, %v115
  %v118 = vsel %vm116, %v111, %v113
  %v119 = vsel %vm116, %v109, %v111
  %v120 = vsel %vm116, %v115, %v109
  %v121 = vsel %vm58, %v120, 0.0
  %v122 = vsel %vm59, %v119, 0.0
  %v123 = vsel %vm60, %v118, 0.0
  %v124 = vsel %vm61, %v117, 0.0
  %s125 = scalar_lea.vmem %s1, 4
  %v126 = vld [vmem:[%s125] sm:$0xf]
  %vm127 = vcmask 31744
  %v129 = vsel %vm127, %v126, 0
  %vm131 = vcmask 1043456
  %v133 = vsel %vm131, %v121, 0
  %v136 = vsel %vm131, %v122, 0
  %v139 = vsel %vm131, %v123, 0
  %v142 = vsel %vm131, %v124, 0
  %144 = vmatprep.subr.mxu0 %v136
  %145 = vmatpush1.msra.mxu0 %v133
  %146 = vmatprep.subr.mxu0 0.0
  %147 = vmatpush1.msra.mxu0 0.0
  %148 = vmatprep.subr.mxu0 0.0
  %149 = vmatpush1.msra.mxu0 0.0
  %150 = vmatprep.subr.mxu0 0.0
  %151 = vmatpush1.msra.mxu0 0.0
  %152 = vmatprep.subr.mxu0 0.0
  %153 = vmatpush1.msra.mxu0 0.0
  %154 = vmatprep.subr.mxu0 0.0
  %155 = vmatpush1.msra.mxu0 0.0
  %156 = vmatprep.subr.mxu0 0.0
  %157 = vmatpush1.msra.mxu0 0.0
  %158 = vmatprep.subr.mxu0 0.0
  %159 = vmatpush1.msra.mxu0 0.0
  %160 = vmatprep.subr.mxu0 0.0
  %161 = vmatpush1.msra.mxu0 0.0
  %162 = vmatprep.subr.mxu0 0.0
  %163 = vmatpush1.msra.mxu0 0.0
  %164 = vmatprep.subr.mxu0 0.0
  %165 = vmatpush1.msra.mxu0 0.0
  %166 = vmatprep.subr.mxu0 0.0
  %167 = vmatpush1.msra.mxu0 0.0
  %168 = vmatprep.subr.mxu0 0.0
  %169 = vmatpush1.msra.mxu0 0.0
  %170 = vmatprep.subr.mxu0 0.0
  %171 = vmatpush1.msra.mxu0 0.0
  %172 = vmatprep.subr.mxu0 0.0
  %173 = vmatpush1.msra.mxu0 0.0
  %174 = vmatprep.subr.mxu0 0.0
  %175 = vmatpush1.msra.mxu0 0.0
  %176 = vmatprep.subr.mxu0 0.0
  %177 = vmatpush1.msra.mxu0 0.0
  %178 = vmatprep.subr.mxu0 0.0
  %179 = vmatpush1.msra.mxu0 0.0
  %180 = vmatprep.subr.mxu0 0.0
  %181 = vmatpush1.msra.mxu0 0.0
  %182 = vmatprep.subr.mxu0 0.0
  %183 = vmatpush1.msra.mxu0 0.0
  %184 = vmatprep.subr.mxu0 0.0
  %185 = vmatpush1.msra.mxu0 0.0
  %186 = vmatprep.subr.mxu0 0.0
  %187 = vmatpush1.msra.mxu0 0.0
  %188 = vmatprep.subr.mxu0 0.0
  %189 = vmatpush1.msra.mxu0 0.0
  %190 = vmatprep.subr.mxu0 0.0
  %191 = vmatpush1.msra.mxu0 0.0
  %192 = vmatprep.subr.mxu0 0.0
  %193 = vmatpush1.msra.mxu0 0.0
  %194 = vmatprep.subr.mxu0 0.0
  %195 = vmatpush1.msra.mxu0 0.0
  %196 = vmatprep.subr.mxu0 0.0
  %197 = vmatpush1.msra.mxu0 0.0
  %198 = vmatprep.subr.mxu0 0.0
  %199 = vmatpush1.msra.mxu0 0.0
  %200 = vmatprep.subr.mxu0 0.0
  %201 = vmatpush1.msra.mxu0 0.0
  %202 = vmatprep.subr.mxu0 0.0
  %203 = vmatpush1.msra.mxu0 0.0
  %204 = vmatprep.subr.mxu0 0.0
  %205 = vmatpush1.msra.mxu0 0.0
  %206 = vmatprep.subr.mxu0 0.0
  %207 = vmatpush1.msra.mxu0 0.0
  %208 = vmatprep.mubr.f32.mxu0 0.0
  %209 = vmatmul.mubr.f32.gmra.mrb[0].mxu0 %v129
  %v210 = vpop.f32.mrb[0].mxu0
  %v211 = vadd.f32 0.0, %v210
  %v212 = vpop.f32.mrb[0].mxu0
  %v213 = vadd.f32 0.0, %v212
  %214 = vdwg.mxu0
  %215 = vmatprep.subr.mxu0 %v142
  %216 = vmatpush1.msra.mxu0 %v139
  %217 = vmatprep.subr.mxu0 0.0
  %218 = vmatpush1.msra.mxu0 0.0
  %219 = vmatprep.subr.mxu0 0.0
  %220 = vmatpush1.msra.mxu0 0.0
  %221 = vmatprep.subr.mxu0 0.0
  %222 = vmatpush1.msra.mxu0 0.0
  %223 = vmatprep.subr.mxu0 0.0
  %224 = vmatpush1.msra.mxu0 0.0
  %225 = vmatprep.subr.mxu0 0.0
  %226 = vmatpush1.msra.mxu0 0.0
  %227 = vmatprep.subr.mxu0 0.0
  %228 = vmatpush1.msra.mxu0 0.0
  %229 = vmatprep.subr.mxu0 0.0
  %230 = vmatpush1.msra.mxu0 0.0
  %231 = vmatprep.subr.mxu0 0.0
  %232 = vmatpush1.msra.mxu0 0.0
  %233 = vmatprep.subr.mxu0 0.0
  %234 = vmatpush1.msra.mxu0 0.0
  %235 = vmatprep.subr.mxu0 0.0
  %236 = vmatpush1.msra.mxu0 0.0
  %237 = vmatprep.subr.mxu0 0.0
  %238 = vmatpush1.msra.mxu0 0.0
  %239 = vmatprep.subr.mxu0 0.0
  %240 = vmatpush1.msra.mxu0 0.0
  %241 = vmatprep.subr.mxu0 0.0
  %242 = vmatpush1.msra.mxu0 0.0
  %243 = vmatprep.subr.mxu0 0.0
  %244 = vmatpush1.msra.mxu0 0.0
  %245 = vmatprep.subr.mxu0 0.0
  %246 = vmatpush1.msra.mxu0 0.0
  %247 = vmatprep.subr.mxu0 0.0
  %248 = vmatpush1.msra.mxu0 0.0
  %249 = vmatprep.subr.mxu0 0.0
  %250 = vmatpush1.msra.mxu0 0.0
  %251 = vmatprep.subr.mxu0 0.0
  %252 = vmatpush1.msra.mxu0 0.0
  %253 = vmatprep.subr.mxu0 0.0
  %254 = vmatpush1.msra.mxu0 0.0
  %255 = vmatprep.subr.mxu0 0.0
  %256 = vmatpush1.msra.mxu0 0.0
  %257 = vmatprep.subr.mxu0 0.0
  %258 = vmatpush1.msra.mxu0 0.0
  %259 = vmatprep.subr.mxu0 0.0
  %260 = vmatpush1.msra.mxu0 0.0
  %261 = vmatprep.subr.mxu0 0.0
  %262 = vmatpush1.msra.mxu0 0.0
  %263 = vmatprep.subr.mxu0 0.0
  %264 = vmatpush1.msra.mxu0 0.0
  %265 = vmatprep.subr.mxu0 0.0
  %266 = vmatpush1.msra.mxu0 0.0
  %267 = vmatprep.subr.mxu0 0.0
  %268 = vmatpush1.msra.mxu0 0.0
  %269 = vmatprep.subr.mxu0 0.0
  %270 = vmatpush1.msra.mxu0 0.0
  %271 = vmatprep.subr.mxu0 0.0
  %272 = vmatpush1.msra.mxu0 0.0
  %273 = vmatprep.subr.mxu0 0.0
  %274 = vmatpush1.msra.mxu0 0.0
  %275 = vmatprep.subr.mxu0 0.0
  %276 = vmatpush1.msra.mxu0 0.0
  %277 = vmatprep.subr.mxu0 0.0
  %278 = vmatpush1.msra.mxu0 0.0
  %279 = vmatprep.mubr.f32.mxu0 0.0
  %280 = vmatmul.mubr.f32.gmra.mrb[0].mxu0 %v129
  %v281 = vpop.f32.mrb[0].mxu0
  %v282 = vadd.f32 0.0, %v281
  %v283 = vpop.f32.mrb[0].mxu0
  %v284 = vadd.f32 0.0, %v283
  %285 = vdwg.mxu0
  %v287 = vsel %vm127, %v107, 0
  %v290 = vsel %vm131, %v103, 0
  %v293 = vsel %vm131, %v104, 0
  %v296 = vsel %vm131, %v105, 0
  %v299 = vsel %vm131, %v106, 0
  %301 = vmatprep.subr.mxu0 %v293
  %302 = vmatpush1.msra.mxu0 %v290
  %303 = vmatprep.subr.mxu0 0.0
  %304 = vmatpush1.msra.mxu0 0.0
  %305 = vmatprep.subr.mxu0 0.0
  %306 = vmatpush1.msra.mxu0 0.0
  %307 = vmatprep.subr.mxu0 0.0
  %308 = vmatpush1.msra.mxu0 0.0
  %309 = vmatprep.subr.mxu0 0.0
  %310 = vmatpush1.msra.mxu0 0.0
  %311 = vmatprep.subr.mxu0 0.0
  %312 = vmatpush1.msra.mxu0 0.0
  %313 = vmatprep.subr.mxu0 0.0
  %314 = vmatpush1.msra.mxu0 0.0
  %315 = vmatprep.subr.mxu0 0.0
  %316 = vmatpush1.msra.mxu0 0.0
  %317 = vmatprep.subr.mxu0 0.0
  %318 = vmatpush1.msra.mxu0 0.0
  %319 = vmatprep.subr.mxu0 0.0
  %320 = vmatpush1.msra.mxu0 0.0
  %321 = vmatprep.subr.mxu0 0.0
  %322 = vmatpush1.msra.mxu0 0.0
  %323 = vmatprep.subr.mxu0 0.0
  %324 = vmatpush1.msra.mxu0 0.0
  %325 = vmatprep.subr.mxu0 0.0
  %326 = vmatpush1.msra.mxu0 0.0
  %327 = vmatprep.subr.mxu0 0.0
  %328 = vmatpush1.msra.mxu0 0.0
  %329 = vmatprep.subr.mxu0 0.0
  %330 = vmatpush1.msra.mxu0 0.0
  %331 = vmatprep.subr.mxu0 0.0
  %332 = vmatpush1.msra.mxu0 0.0
  %333 = vmatprep.subr.mxu0 0.0
  %334 = vmatpush1.msra.mxu0 0.0
  %335 = vmatprep.subr.mxu0 0.0
  %336 = vmatpush1.msra.mxu0 0.0
  %337 = vmatprep.subr.mxu0 0.0
  %338 = vmatpush1.msra.mxu0 0.0
  %339 = vmatprep.subr.mxu0 0.0
  %340 = vmatpush1.msra.mxu0 0.0
  %341 = vmatprep.subr.mxu0 0.0
  %342 = vmatpush1.msra.mxu0 0.0
  %343 = vmatprep.subr.mxu0 0.0
  %344 = vmatpush1.msra.mxu0 0.0
  %345 = vmatprep.subr.mxu0 0.0
  %346 = vmatpush1.msra.mxu0 0.0
  %347 = vmatprep.subr.mxu0 0.0
  %348 = vmatpush1.msra.mxu0 0.0
  %349 = vmatprep.subr.mxu0 0.0
  %350 = vmatpush1.msra.mxu0 0.0
  %351 = vmatprep.subr.mxu0 0.0
  %352 = vmatpush1.msra.mxu0 0.0
  %353 = vmatprep.subr.mxu0 0.0
  %354 = vmatpush1.msra.mxu0 0.0
  %355 = vmatprep.subr.mxu0 0.0
  %356 = vmatpush1.msra.mxu0 0.0
  %357 = vmatprep.subr.mxu0 0.0
  %358 = vmatpush1.msra.mxu0 0.0
  %359 = vmatprep.subr.mxu0 0.0
  %360 = vmatpush1.msra.mxu0 0.0
  %361 = vmatprep.subr.mxu0 0.0
  %362 = vmatpush1.msra.mxu0 0.0
  %363 = vmatprep.subr.mxu0 0.0
  %364 = vmatpush1.msra.mxu0 0.0
  %365 = vmatprep.mubr.f32.mxu0 0.0
  %366 = vmatmul.mubr.f32.gmra.mrb[0].mxu0 %v287
  %v367 = vpop.f32.mrb[0].mxu0
  %v368 = vadd.f32 %v211, %v367
  %v369 = vpop.f32.mrb[0].mxu0
  %v370 = vadd.f32 %v213, %v369
  %371 = vdwg.mxu0
  %372 = vmatprep.subr.mxu0 %v299
  %373 = vmatpush1.msra.mxu0 %v296
  %374 = vmatprep.subr.mxu0 0.0
  %375 = vmatpush1.msra.mxu0 0.0
  %376 = vmatprep.subr.mxu0 0.0
  %377 = vmatpush1.msra.mxu0 0.0
  %378 = vmatprep.subr.mxu0 0.0
  %379 = vmatpush1.msra.mxu0 0.0
  %380 = vmatprep.subr.mxu0 0.0
  %381 = vmatpush1.msra.mxu0 0.0
  %382 = vmatprep.subr.mxu0 0.0
  %383 = vmatpush1.msra.mxu0 0.0
  %384 = vmatprep.subr.mxu0 0.0
  %385 = vmatpush1.msra.mxu0 0.0
  %386 = vmatprep.subr.mxu0 0.0
  %387 = vmatpush1.msra.mxu0 0.0
  %388 = vmatprep.subr.mxu0 0.0
  %389 = vmatpush1.msra.mxu0 0.0
  %390 = vmatprep.subr.mxu0 0.0
  %391 = vmatpush1.msra.mxu0 0.0
  %392 = vmatprep.subr.mxu0 0.0
  %393 = vmatpush1.msra.mxu0 0.0
  %394 = vmatprep.subr.mxu0 0.0
  %395 = vmatpush1.msra.mxu0 0.0
  %396 = vmatprep.subr.mxu0 0.0
  %397 = vmatpush1.msra.mxu0 0.0
  %398 = vmatprep.subr.mxu0 0.0
  %399 = vmatpush1.msra.mxu0 0.0
  %400 = vmatprep.subr.mxu0 0.0
  %401 = vmatpush1.msra.mxu0 0.0
  %402 = vmatprep.subr.mxu0 0.0
  %403 = vmatpush1.msra.mxu0 0.0
  %404 = vmatprep.subr.mxu0 0.0
  %405 = vmatpush1.msra.mxu0 0.0
  %406 = vmatprep.subr.mxu0 0.0
  %407 = vmatpush1.msra.mxu0 0.0
  %408 = vmatprep.subr.mxu0 0.0
  %409 = vmatpush1.msra.mxu0 0.0
  %410 = vmatprep.subr.mxu0 0.0
  %411 = vmatpush1.msra.mxu0 0.0
  %412 = vmatprep.subr.mxu0 0.0
  %413 = vmatpush1.msra.mxu0 0.0
  %414 = vmatprep.subr.mxu0 0.0
  %415 = vmatpush1.msra.mxu0 0.0
  %416 = vmatprep.subr.mxu0 0.0
  %417 = vmatpush1.msra.mxu0 0.0
  %418 = vmatprep.subr.mxu0 0.0
  %419 = vmatpush1.msra.mxu0 0.0
  %420 = vmatprep.subr.mxu0 0.0
  %421 = vmatpush1.msra.mxu0 0.0
  %422 = vmatprep.subr.mxu0 0.0
  %423 = vmatpush1.msra.mxu0 0.0
  %424 = vmatprep.subr.mxu0 0.0
  %425 = vmatpush1.msra.mxu0 0.0
  %426 = vmatprep.subr.mxu0 0.0
  %427 = vmatpush1.msra.mxu0 0.0
  %428 = vmatprep.subr.mxu0 0.0
  %429 = vmatpush1.msra.mxu0 0.0
  %430 = vmatprep.subr.mxu0 0.0
  %431 = vmatpush1.msra.mxu0 0.0
  %432 = vmatprep.subr.mxu0 0.0
  %433 = vmatpush1.msra.mxu0 0.0
  %434 = vmatprep.subr.mxu0 0.0
  %435 = vmatpush1.msra.mxu0 0.0
  %436 = vmatprep.mubr.f32.mxu0 0.0
  %437 = vmatmul.mubr.f32.gmra.mrb[0].mxu0 %v287
  %v438 = vpop.f32.mrb[0].mxu0
  %v439 = vadd.f32 %v282, %v438
  %v440 = vpop.f32.mrb[0].mxu0
  %v441 = vadd.f32 %v284, %v440
  %442 = vdwg.mxu0
  %443 = vrot.lane.b32.xlu0 %v32, 15
  %v444 = vpop.permute.xlu0 %443
  %445 = vrot.lane.b32.xlu0 %v36, 15
  %v446 = vpop.permute.xlu0 %445
  %447 = vrot.lane.b32.xlu0 %v34, 15
  %v448 = vpop.permute.xlu0 %447
  %449 = vrot.lane.b32.xlu0 %v39, 15
  %v450 = vpop.permute.xlu0 %449
  %vm451 = vcmp.lt.s32.totalorder %v42, 15
  %v452 = vsel %vm451, %v448, %v450
  %v453 = vsel %vm451, %v446, %v448
  %v454 = vsel %vm451, %v444, %v446
  %v455 = vsel %vm451, %v450, %v444
  %v456 = vsel %vm74, %v455, 0.0
  %v457 = vsel %vm75, %v454, 0.0
  %v458 = vsel %vm76, %v453, 0.0
  %v459 = vsel %vm77, %v452, 0.0
  %s460 = scalar_lea.vmem %s1, 8
  %v461 = vld [vmem:[%s460] sm:$0xf]
  %v463 = vsel %vm127, %v461, 0
  %v466 = vsel %vm131, %v456, 0
  %v469 = vsel %vm131, %v457, 0
  %v472 = vsel %vm131, %v458, 0
  %v475 = vsel %vm131, %v459, 0
  %477 = vmatprep.subr.mxu0 %v469
  %478 = vmatpush1.msra.mxu0 %v466
  %479 = vmatprep.subr.mxu0 0.0
  %480 = vmatpush1.msra.mxu0 0.0
  %481 = vmatprep.subr.mxu0 0.0
  %482 = vmatpush1.msra.mxu0 0.0
  %483 = vmatprep.subr.mxu0 0.0
  %484 = vmatpush1.msra.mxu0 0.0
  %485 = vmatprep.subr.mxu0 0.0
  %486 = vmatpush1.msra.mxu0 0.0
  %487 = vmatprep.subr.mxu0 0.0
  %488 = vmatpush1.msra.mxu0 0.0
  %489 = vmatprep.subr.mxu0 0.0
  %490 = vmatpush1.msra.mxu0 0.0
  %491 = vmatprep.subr.mxu0 0.0
  %492 = vmatpush1.msra.mxu0 0.0
  %493 = vmatprep.subr.mxu0 0.0
  %494 = vmatpush1.msra.mxu0 0.0
  %495 = vmatprep.subr.mxu0 0.0
  %496 = vmatpush1.msra.mxu0 0.0
  %497 = vmatprep.subr.mxu0 0.0
  %498 = vmatpush1.msra.mxu0 0.0
  %499 = vmatprep.subr.mxu0 0.0
  %500 = vmatpush1.msra.mxu0 0.0
  %501 = vmatprep.subr.mxu0 0.0
  %502 = vmatpush1.msra.mxu0 0.0
  %503 = vmatprep.subr.mxu0 0.0
  %504 = vmatpush1.msra.mxu0 0.0
  %505 = vmatprep.subr.mxu0 0.0
  %506 = vmatpush1.msra.mxu0 0.0
  %507 = vmatprep.subr.mxu0 0.0
  %508 = vmatpush1.msra.mxu0 0.0
  %509 = vmatprep.subr.mxu0 0.0
  %510 = vmatpush1.msra.mxu0 0.0
  %511 = vmatprep.subr.mxu0 0.0
  %512 = vmatpush1.msra.mxu0 0.0
  %513 = vmatprep.subr.mxu0 0.0
  %514 = vmatpush1.msra.mxu0 0.0
  %515 = vmatprep.subr.mxu0 0.0
  %516 = vmatpush1.msra.mxu0 0.0
  %517 = vmatprep.subr.mxu0 0.0
  %518 = vmatpush1.msra.mxu0 0.0
  %519 = vmatprep.subr.mxu0 0.0
  %520 = vmatpush1.msra.mxu0 0.0
  %521 = vmatprep.subr.mxu0 0.0
  %522 = vmatpush1.msra.mxu0 0.0
  %523 = vmatprep.subr.mxu0 0.0
  %524 = vmatpush1.msra.mxu0 0.0
  %525 = vmatprep.subr.mxu0 0.0
  %526 = vmatpush1.msra.mxu0 0.0
  %527 = vmatprep.subr.mxu0 0.0
  %528 = vmatpush1.msra.mxu0 0.0
  %529 = vmatprep.subr.mxu0 0.0
  %530 = vmatpush1.msra.mxu0 0.0
  %531 = vmatprep.subr.mxu0 0.0
  %532 = vmatpush1.msra.mxu0 0.0
  %533 = vmatprep.subr.mxu0 0.0
  %534 = vmatpush1.msra.mxu0 0.0
  %535 = vmatprep.subr.mxu0 0.0
  %536 = vmatpush1.msra.mxu0 0.0
  %537 = vmatprep.subr.mxu0 0.0
  %538 = vmatpush1.msra.mxu0 0.0
  %539 = vmatprep.subr.mxu0 0.0
  %540 = vmatpush1.msra.mxu0 0.0
  %541 = vmatprep.mubr.f32.mxu0 0.0
  %542 = vmatmul.mubr.f32.gmra.mrb[0].mxu0 %v463
  %v543 = vpop.f32.mrb[0].mxu0
  %v544 = vadd.f32 0.0, %v543
  %v545 = vpop.f32.mrb[0].mxu0
  %v546 = vadd.f32 0.0, %v545
  %547 = vdwg.mxu0
  %548 = vmatprep.subr.mxu0 %v475
  %549 = vmatpush1.msra.mxu0 %v472
  %550 = vmatprep.subr.mxu0 0.0
  %551 = vmatpush1.msra.mxu0 0.0
  %552 = vmatprep.subr.mxu0 0.0
  %553 = vmatpush1.msra.mxu0 0.0
  %554 = vmatprep.subr.mxu0 0.0
  %555 = vmatpush1.msra.mxu0 0.0
  %556 = vmatprep.subr.mxu0 0.0
  %557 = vmatpush1.msra.mxu0 0.0
  %558 = vmatprep.subr.mxu0 0.0
  %559 = vmatpush1.msra.mxu0 0.0
  %560 = vmatprep.subr.mxu0 0.0
  %561 = vmatpush1.msra.mxu0 0.0
  %562 = vmatprep.subr.mxu0 0.0
  %563 = vmatpush1.msra.mxu0 0.0
  %564 = vmatprep.subr.mxu0 0.0
  %565 = vmatpush1.msra.mxu0 0.0
  %566 = vmatprep.subr.mxu0 0.0
  %567 = vmatpush1.msra.mxu0 0.0
  %568 = vmatprep.subr.mxu0 0.0
  %569 = vmatpush1.msra.mxu0 0.0
  %570 = vmatprep.subr.mxu0 0.0
  %571 = vmatpush1.msra.mxu0 0.0
  %572 = vmatprep.subr.mxu0 0.0
  %573 = vmatpush1.msra.mxu0 0.0
  %574 = vmatprep.subr.mxu0 0.0
  %575 = vmatpush1.msra.mxu0 0.0
  %576 = vmatprep.subr.mxu0 0.0
  %577 = vmatpush1.msra.mxu0 0.0
  %578 = vmatprep.subr.mxu0 0.0
  %579 = vmatpush1.msra.mxu0 0.0
  %580 = vmatprep.subr.mxu0 0.0
  %581 = vmatpush1.msra.mxu0 0.0
  %582 = vmatprep.subr.mxu0 0.0
  %583 = vmatpush1.msra.mxu0 0.0
  %584 = vmatprep.subr.mxu0 0.0
  %585 = vmatpush1.msra.mxu0 0.0
  %586 = vmatprep.subr.mxu0 0.0
  %587 = vmatpush1.msra.mxu0 0.0
  %588 = vmatprep.subr.mxu0 0.0
  %589 = vmatpush1.msra.mxu0 0.0
  %590 = vmatprep.subr.mxu0 0.0
  %591 = vmatpush1.msra.mxu0 0.0
  %592 = vmatprep.subr.mxu0 0.0
  %593 = vmatpush1.msra.mxu0 0.0
  %594 = vmatprep.subr.mxu0 0.0
  %595 = vmatpush1.msra.mxu0 0.0
  %596 = vmatprep.subr.mxu0 0.0
  %597 = vmatpush1.msra.mxu0 0.0
  %598 = vmatprep.subr.mxu0 0.0
  %599 = vmatpush1.msra.mxu0 0.0
  %600 = vmatprep.subr.mxu0 0.0
  %601 = vmatpush1.msra.mxu0 0.0
  %602 = vmatprep.subr.mxu0 0.0
  %603 = vmatpush1.msra.mxu0 0.0
  %604 = vmatprep.subr.mxu0 0.0
  %605 = vmatpush1.msra.mxu0 0.0
  %606 = vmatprep.subr.mxu0 0.0
  %607 = vmatpush1.msra.mxu0 0.0
  %608 = vmatprep.subr.mxu0 0.0
  %609 = vmatpush1.msra.mxu0 0.0
  %610 = vmatprep.subr.mxu0 0.0
  %611 = vmatpush1.msra.mxu0 0.0
  %612 = vmatprep.mubr.f32.mxu0 0.0
  %613 = vmatmul.mubr.f32.gmra.mrb[0].mxu0 %v463
  %v614 = vpop.f32.mrb[0].mxu0
  %v615 = vadd.f32 0.0, %v614
  %v616 = vpop.f32.mrb[0].mxu0
  %v617 = vadd.f32 0.0, %v616
  %618 = vdwg.mxu0
  %v619 = vadd.f32 %v368, %v544
  %v620 = vadd.f32 %v370, %v546
  %v621 = vadd.f32 %v439, %v615
  %v622 = vadd.f32 %v441, %v617
  %623 = vrot.lane.b32.xlu0 %v32, 1
  %v624 = vpop.permute.xlu0 %623
  %625 = vrot.lane.b32.xlu0 %v36, 1
  %v626 = vpop.permute.xlu0 %625
  %627 = vrot.lane.b32.xlu0 %v34, 1
  %v628 = vpop.permute.xlu0 %627
  %629 = vrot.lane.b32.xlu0 %v39, 1
  %v630 = vpop.permute.xlu0 %629
  %vm631 = vcmp.lt.s32.totalorder %v42, 1
  %v632 = vsel %vm631, %v628, %v630
  %v633 = vsel %vm631, %v626, %v628
  %v634 = vsel %vm631, %v624, %v626
  %v635 = vsel %vm631, %v630, %v624
  %v636 = vsel %vm62, %v635, 0.0
  %v637 = vsel %vm63, %v634, 0.0
  %v638 = vsel %vm64, %v633, 0.0
  %v639 = vsel %vm65, %v632, 0.0
  %s640 = scalar_lea.vmem %s1, 12
  %v641 = vld [vmem:[%s640] sm:$0xf]
  %v643 = vsel %vm127, %v641, 0
  %v646 = vsel %vm131, %v636, 0
  %v649 = vsel %vm131, %v637, 0
  %v652 = vsel %vm131, %v638, 0
  %v655 = vsel %vm131, %v639, 0
  %657 = vmatprep.subr.mxu0 %v649
  %658 = vmatpush1.msra.mxu0 %v646
  %659 = vmatprep.subr.mxu0 0.0
  %660 = vmatpush1.msra.mxu0 0.0
  %661 = vmatprep.subr.mxu0 0.0
  %662 = vmatpush1.msra.mxu0 0.0
  %663 = vmatprep.subr.mxu0 0.0
  %664 = vmatpush1.msra.mxu0 0.0
  %665 = vmatprep.subr.mxu0 0.0
  %666 = vmatpush1.msra.mxu0 0.0
  %667 = vmatprep.subr.mxu0 0.0
  %668 = vmatpush1.msra.mxu0 0.0
  %669 = vmatprep.subr.mxu0 0.0
  %670 = vmatpush1.msra.mxu0 0.0
  %671 = vmatprep.subr.mxu0 0.0
  %672 = vmatpush1.msra.mxu0 0.0
  %673 = vmatprep.subr.mxu0 0.0
  %674 = vmatpush1.msra.mxu0 0.0
  %675 = vmatprep.subr.mxu0 0.0
  %676 = vmatpush1.msra.mxu0 0.0
  %677 = vmatprep.subr.mxu0 0.0
  %678 = vmatpush1.msra.mxu0 0.0
  %679 = vmatprep.subr.mxu0 0.0
  %680 = vmatpush1.msra.mxu0 0.0
  %681 = vmatprep.subr.mxu0 0.0
  %682 = vmatpush1.msra.mxu0 0.0
  %683 = vmatprep.subr.mxu0 0.0
  %684 = vmatpush1.msra.mxu0 0.0
  %685 = vmatprep.subr.mxu0 0.0
  %686 = vmatpush1.msra.mxu0 0.0
  %687 = vmatprep.subr.mxu0 0.0
  %688 = vmatpush1.msra.mxu0 0.0
  %689 = vmatprep.subr.mxu0 0.0
  %690 = vmatpush1.msra.mxu0 0.0
  %691 = vmatprep.subr.mxu0 0.0
  %692 = vmatpush1.msra.mxu0 0.0
  %693 = vmatprep.subr.mxu0 0.0
  %694 = vmatpush1.msra.mxu0 0.0
  %695 = vmatprep.subr.mxu0 0.0
  %696 = vmatpush1.msra.mxu0 0.0
  %697 = vmatprep.subr.mxu0 0.0
  %698 = vmatpush1.msra.mxu0 0.0
  %699 = vmatprep.subr.mxu0 0.0
  %700 = vmatpush1.msra.mxu0 0.0
  %701 = vmatprep.subr.mxu0 0.0
  %702 = vmatpush1.msra.mxu0 0.0
  %703 = vmatprep.subr.mxu0 0.0
  %704 = vmatpush1.msra.mxu0 0.0
  %705 = vmatprep.subr.mxu0 0.0
  %706 = vmatpush1.msra.mxu0 0.0
  %707 = vmatprep.subr.mxu0 0.0
  %708 = vmatpush1.msra.mxu0 0.0
  %709 = vmatprep.subr.mxu0 0.0
  %710 = vmatpush1.msra.mxu0 0.0
  %711 = vmatprep.subr.mxu0 0.0
  %712 = vmatpush1.msra.mxu0 0.0
  %713 = vmatprep.subr.mxu0 0.0
  %714 = vmatpush1.msra.mxu0 0.0
  %715 = vmatprep.subr.mxu0 0.0
  %716 = vmatpush1.msra.mxu0 0.0
  %717 = vmatprep.subr.mxu0 0.0
  %718 = vmatpush1.msra.mxu0 0.0
  %719 = vmatprep.subr.mxu0 0.0
  %720 = vmatpush1.msra.mxu0 0.0
  %721 = vmatprep.mubr.f32.mxu0 0.0
  %722 = vmatmul.mubr.f32.gmra.mrb[0].mxu0 %v643
  %v723 = vpop.f32.mrb[0].mxu0
  %v724 = vadd.f32 0.0, %v723
  %v725 = vpop.f32.mrb[0].mxu0
  %v726 = vadd.f32 0.0, %v725
  %727 = vdwg.mxu0
  %728 = vmatprep.subr.mxu0 %v655
  %729 = vmatpush1.msra.mxu0 %v652
  %730 = vmatprep.subr.mxu0 0.0
  %731 = vmatpush1.msra.mxu0 0.0
  %732 = vmatprep.subr.mxu0 0.0
  %733 = vmatpush1.msra.mxu0 0.0
  %734 = vmatprep.subr.mxu0 0.0
  %735 = vmatpush1.msra.mxu0 0.0
  %736 = vmatprep.subr.mxu0 0.0
  %737 = vmatpush1.msra.mxu0 0.0
  %738 = vmatprep.subr.mxu0 0.0
  %739 = vmatpush1.msra.mxu0 0.0
  %740 = vmatprep.subr.mxu0 0.0
  %741 = vmatpush1.msra.mxu0 0.0
  %742 = vmatprep.subr.mxu0 0.0
  %743 = vmatpush1.msra.mxu0 0.0
  %744 = vmatprep.subr.mxu0 0.0
  %745 = vmatpush1.msra.mxu0 0.0
  %746 = vmatprep.subr.mxu0 0.0
  %747 = vmatpush1.msra.mxu0 0.0
  %748 = vmatprep.subr.mxu0 0.0
  %749 = vmatpush1.msra.mxu0 0.0
  %750 = vmatprep.subr.mxu0 0.0
  %751 = vmatpush1.msra.mxu0 0.0
  %752 = vmatprep.subr.mxu0 0.0
  %753 = vmatpush1.msra.mxu0 0.0
  %754 = vmatprep.subr.mxu0 0.0
  %755 = vmatpush1.msra.mxu0 0.0
  %756 = vmatprep.subr.mxu0 0.0
  %757 = vmatpush1.msra.mxu0 0.0
  %758 = vmatprep.subr.mxu0 0.0
  %759 = vmatpush1.msra.mxu0 0.0
  %760 = vmatprep.subr.mxu0 0.0
  %761 = vmatpush1.msra.mxu0 0.0
  %762 = vmatprep.subr.mxu0 0.0
  %763 = vmatpush1.msra.mxu0 0.0
  %764 = vmatprep.subr.mxu0 0.0
  %765 = vmatpush1.msra.mxu0 0.0
  %766 = vmatprep.subr.mxu0 0.0
  %767 = vmatpush1.msra.mxu0 0.0
  %768 = vmatprep.subr.mxu0 0.0
  %769 = vmatpush1.msra.mxu0 0.0
  %770 = vmatprep.subr.mxu0 0.0
  %771 = vmatpush1.msra.mxu0 0.0
  %772 = vmatprep.subr.mxu0 0.0
  %773 = vmatpush1.msra.mxu0 0.0
  %774 = vmatprep.subr.mxu0 0.0
  %775 = vmatpush1.msra.mxu0 0.0
  %776 = vmatprep.subr.mxu0 0.0
  %777 = vmatpush1.msra.mxu0 0.0
  %778 = vmatprep.subr.mxu0 0.0
  %779 = vmatpush1.msra.mxu0 0.0
  %780 = vmatprep.subr.mxu0 0.0
  %781 = vmatpush1.msra.mxu0 0.0
  %782 = vmatprep.subr.mxu0 0.0
  %783 = vmatpush1.msra.mxu0 0.0
  %784 = vmatprep.subr.mxu0 0.0
  %785 = vmatpush1.msra.mxu0 0.0
  %786 = vmatprep.subr.mxu0 0.0
  %787 = vmatpush1.msra.mxu0 0.0
  %788 = vmatprep.subr.mxu0 0.0
  %789 = vmatpush1.msra.mxu0 0.0
  %790 = vmatprep.subr.mxu0 0.0
  %791 = vmatpush1.msra.mxu0 0.0
  %792 = vmatprep.mubr.f32.mxu0 0.0
  %793 = vmatmul.mubr.f32.gmra.mrb[0].mxu0 %v643
  %v794 = vpop.f32.mrb[0].mxu0
  %v795 = vadd.f32 0.0, %v794
  %v796 = vpop.f32.mrb[0].mxu0
  %v797 = vadd.f32 0.0, %v796
  %798 = vdwg.mxu0
  %v799 = vadd.f32 %v619, %v724
  %v800 = vadd.f32 %v620, %v726
  %v801 = vadd.f32 %v621, %v795
  %v802 = vadd.f32 %v622, %v797
  %s803 = scalar_lea.vmem %s1, 16
  %v804 = vld [vmem:[%s803] sm:$0xf]
  %v806 = vsel %vm127, %v804, 0
  %v808 = vsel %vm131, %v32, 0
  %v810 = vsel %vm131, %v36, 0
  %v812 = vsel %vm131, %v34, 0
  %v814 = vsel %vm131, %v39, 0
  %816 = vmatprep.subr.mxu0 %v810
  %817 = vmatpush1.msra.mxu0 %v808
  %818 = vmatprep.subr.mxu0 0.0
  %819 = vmatpush1.msra.mxu0 0.0
  %820 = vmatprep.subr.mxu0 0.0
  %821 = vmatpush1.msra.mxu0 0.0
  %822 = vmatprep.subr.mxu0 0.0
  %823 = vmatpush1.msra.mxu0 0.0
  %824 = vmatprep.subr.mxu0 0.0
  %825 = vmatpush1.msra.mxu0 0.0
  %826 = vmatprep.subr.mxu0 0.0
  %827 = vmatpush1.msra.mxu0 0.0
  %828 = vmatprep.subr.mxu0 0.0
  %829 = vmatpush1.msra.mxu0 0.0
  %830 = vmatprep.subr.mxu0 0.0
  %831 = vmatpush1.msra.mxu0 0.0
  %832 = vmatprep.subr.mxu0 0.0
  %833 = vmatpush1.msra.mxu0 0.0
  %834 = vmatprep.subr.mxu0 0.0
  %835 = vmatpush1.msra.mxu0 0.0
  %836 = vmatprep.subr.mxu0 0.0
  %837 = vmatpush1.msra.mxu0 0.0
  %838 = vmatprep.subr.mxu0 0.0
  %839 = vmatpush1.msra.mxu0 0.0
  %840 = vmatprep.subr.mxu0 0.0
  %841 = vmatpush1.msra.mxu0 0.0
  %842 = vmatprep.subr.mxu0 0.0
  %843 = vmatpush1.msra.mxu0 0.0
  %844 = vmatprep.subr.mxu0 0.0
  %845 = vmatpush1.msra.mxu0 0.0
  %846 = vmatprep.subr.mxu0 0.0
  %847 = vmatpush1.msra.mxu0 0.0
  %848 = vmatprep.subr.mxu0 0.0
  %849 = vmatpush1.msra.mxu0 0.0
  %850 = vmatprep.subr.mxu0 0.0
  %851 = vmatpush1.msra.mxu0 0.0
  %852 = vmatprep.subr.mxu0 0.0
  %853 = vmatpush1.msra.mxu0 0.0
  %854 = vmatprep.subr.mxu0 0.0
  %855 = vmatpush1.msra.mxu0 0.0
  %856 = vmatprep.subr.mxu0 0.0
  %857 = vmatpush1.msra.mxu0 0.0
  %858 = vmatprep.subr.mxu0 0.0
  %859 = vmatpush1.msra.mxu0 0.0
  %860 = vmatprep.subr.mxu0 0.0
  %861 = vmatpush1.msra.mxu0 0.0
  %862 = vmatprep.subr.mxu0 0.0
  %863 = vmatpush1.msra.mxu0 0.0
  %864 = vmatprep.subr.mxu0 0.0
  %865 = vmatpush1.msra.mxu0 0.0
  %866 = vmatprep.subr.mxu0 0.0
  %867 = vmatpush1.msra.mxu0 0.0
  %868 = vmatprep.subr.mxu0 0.0
  %869 = vmatpush1.msra.mxu0 0.0
  %870 = vmatprep.subr.mxu0 0.0
  %871 = vmatpush1.msra.mxu0 0.0
  %872 = vmatprep.subr.mxu0 0.0
  %873 = vmatpush1.msra.mxu0 0.0
  %874 = vmatprep.subr.mxu0 0.0
  %875 = vmatpush1.msra.mxu0 0.0
  %876 = vmatprep.subr.mxu0 0.0
  %877 = vmatpush1.msra.mxu0 0.0
  %878 = vmatprep.subr.mxu0 0.0
  %879 = vmatpush1.msra.mxu0 0.0
  %880 = vmatprep.mubr.f32.mxu0 0.0
  %881 = vmatmul.mubr.f32.gmra.mrb[0].mxu0 %v806
  %v882 = vpop.f32.mrb[0].mxu0
  %v883 = vadd.f32 0.0, %v882
  %v884 = vpop.f32.mrb[0].mxu0
  %v885 = vadd.f32 0.0, %v884
  %886 = vdwg.mxu0
  %887 = vmatprep.subr.mxu0 %v814
  %888 = vmatpush1.msra.mxu0 %v812
  %889 = vmatprep.subr.mxu0 0.0
  %890 = vmatpush1.msra.mxu0 0.0
  %891 = vmatprep.subr.mxu0 0.0
  %892 = vmatpush1.msra.mxu0 0.0
  %893 = vmatprep.subr.mxu0 0.0
  %894 = vmatpush1.msra.mxu0 0.0
  %895 = vmatprep.subr.mxu0 0.0
  %896 = vmatpush1.msra.mxu0 0.0
  %897 = vmatprep.subr.mxu0 0.0
  %898 = vmatpush1.msra.mxu0 0.0
  %899 = vmatprep.subr.mxu0 0.0
  %900 = vmatpush1.msra.mxu0 0.0
  %901 = vmatprep.subr.mxu0 0.0
  %902 = vmatpush1.msra.mxu0 0.0
  %903 = vmatprep.subr.mxu0 0.0
  %904 = vmatpush1.msra.mxu0 0.0
  %905 = vmatprep.subr.mxu0 0.0
  %906 = vmatpush1.msra.mxu0 0.0
  %907 = vmatprep.subr.mxu0 0.0
  %908 = vmatpush1.msra.mxu0 0.0
  %909 = vmatprep.subr.mxu0 0.0
  %910 = vmatpush1.msra.mxu0 0.0
  %911 = vmatprep.subr.mxu0 0.0
  %912 = vmatpush1.msra.mxu0 0.0
  %913 = vmatprep.subr.mxu0 0.0
  %914 = vmatpush1.msra.mxu0 0.0
  %915 = vmatprep.subr.mxu0 0.0
  %916 = vmatpush1.msra.mxu0 0.0
  %917 = vmatprep.subr.mxu0 0.0
  %918 = vmatpush1.msra.mxu0 0.0
  %919 = vmatprep.subr.mxu0 0.0
  %920 = vmatpush1.msra.mxu0 0.0
  %921 = vmatprep.subr.mxu0 0.0
  %922 = vmatpush1.msra.mxu0 0.0
  %923 = vmatprep.subr.mxu0 0.0
  %924 = vmatpush1.msra.mxu0 0.0
  %925 = vmatprep.subr.mxu0 0.0
  %926 = vmatpush1.msra.mxu0 0.0
  %927 = vmatprep.subr.mxu0 0.0
  %928 = vmatpush1.msra.mxu0 0.0
  %929 = vmatprep.subr.mxu0 0.0
  %930 = vmatpush1.msra.mxu0 0.0
  %931 = vmatprep.subr.mxu0 0.0
  %932 = vmatpush1.msra.mxu0 0.0
  %933 = vmatprep.subr.mxu0 0.0
  %934 = vmatpush1.msra.mxu0 0.0
  %935 = vmatprep.subr.mxu0 0.0
  %936 = vmatpush1.msra.mxu0 0.0
  %937 = vmatprep.subr.mxu0 0.0
  %938 = vmatpush1.msra.mxu0 0.0
  %939 = vmatprep.subr.mxu0 0.0
  %940 = vmatpush1.msra.mxu0 0.0
  %941 = vmatprep.subr.mxu0 0.0
  %942 = vmatpush1.msra.mxu0 0.0
  %943 = vmatprep.subr.mxu0 0.0
  %944 = vmatpush1.msra.mxu0 0.0
  %945 = vmatprep.subr.mxu0 0.0
  %946 = vmatpush1.msra.mxu0 0.0
  %947 = vmatprep.subr.mxu0 0.0
  %948 = vmatpush1.msra.mxu0 0.0
  %949 = vmatprep.subr.mxu0 0.0
  %950 = vmatpush1.msra.mxu0 0.0
  %951 = vmatprep.mubr.f32.mxu0 0.0
  %952 = vmatmul.mubr.f32.gmra.mrb[0].mxu0 %v806
  %v953 = vpop.f32.mrb[0].mxu0
  %v954 = vadd.f32 0.0, %v953
  %v955 = vpop.f32.mrb[0].mxu0
  %v956 = vadd.f32 0.0, %v955
  %957 = vdwg.mxu0
  %v958 = vadd.f32 %v799, %v883
  %v959 = vadd.f32 %v800, %v885
  %v960 = vadd.f32 %v801, %v954
  %v961 = vadd.f32 %v802, %v956
  %962 = vrot.lane.b32.xlu0 %v32, 127
  %v963 = vpop.permute.xlu0 %962
  %964 = vrot.lane.b32.xlu0 %v36, 127
  %v965 = vpop.permute.xlu0 %964
  %966 = vrot.lane.b32.xlu0 %v34, 127
  %v967 = vpop.permute.xlu0 %966
  %968 = vrot.lane.b32.xlu0 %v39, 127
  %v969 = vpop.permute.xlu0 %968
  %vm970 = vcmp.lt.s32.totalorder %v42, 127
  %v971 = vsel %vm970, %v967, %v969
  %v972 = vsel %vm970, %v965, %v967
  %v973 = vsel %vm970, %v963, %v965
  %v974 = vsel %vm970, %v969, %v963
  %v975 = vsel %vm70, %v973, 0.0
  %v976 = vsel %vm71, %v972, 0.0
  %v977 = vsel %vm72, %v971, 0.0
  %v978 = vsel %vm73, %v974, 0.0
  %s979 = scalar_lea.vmem %s1, 20
  %v980 = vld [vmem:[%s979] sm:$0xf]
  %v982 = vsel %vm127, %v980, 0
  %v985 = vsel %vm131, %v975, 0
  %v988 = vsel %vm131, %v976, 0
  %v991 = vsel %vm131, %v977, 0
  %v994 = vsel %vm131, %v978, 0
  %996 = vmatprep.subr.mxu0 %v988
  %997 = vmatpush1.msra.mxu0 %v985
  %998 = vmatprep.subr.mxu0 0.0
  %999 = vmatpush1.msra.mxu0 0.0
  %1000 = vmatprep.subr.mxu0 0.0
  %1001 = vmatpush1.msra.mxu0 0.0
  %1002 = vmatprep.subr.mxu0 0.0
  %1003 = vmatpush1.msra.mxu0 0.0
  %1004 = vmatprep.subr.mxu0 0.0
  %1005 = vmatpush1.msra.mxu0 0.0
  %1006 = vmatprep.subr.mxu0 0.0
  %1007 = vmatpush1.msra.mxu0 0.0
  %1008 = vmatprep.subr.mxu0 0.0
  %1009 = vmatpush1.msra.mxu0 0.0
  %1010 = vmatprep.subr.mxu0 0.0
  %1011 = vmatpush1.msra.mxu0 0.0
  %1012 = vmatprep.subr.mxu0 0.0
  %1013 = vmatpush1.msra.mxu0 0.0
  %1014 = vmatprep.subr.mxu0 0.0
  %1015 = vmatpush1.msra.mxu0 0.0
  %1016 = vmatprep.subr.mxu0 0.0
  %1017 = vmatpush1.msra.mxu0 0.0
  %1018 = vmatprep.subr.mxu0 0.0
  %1019 = vmatpush1.msra.mxu0 0.0
  %1020 = vmatprep.subr.mxu0 0.0
  %1021 = vmatpush1.msra.mxu0 0.0
  %1022 = vmatprep.subr.mxu0 0.0
  %1023 = vmatpush1.msra.mxu0 0.0
  %1024 = vmatprep.subr.mxu0 0.0
  %1025 = vmatpush1.msra.mxu0 0.0
  %1026 = vmatprep.subr.mxu0 0.0
  %1027 = vmatpush1.msra.mxu0 0.0
  %1028 = vmatprep.subr.mxu0 0.0
  %1029 = vmatpush1.msra.mxu0 0.0
  %1030 = vmatprep.subr.mxu0 0.0
  %1031 = vmatpush1.msra.mxu0 0.0
  %1032 = vmatprep.subr.mxu0 0.0
  %1033 = vmatpush1.msra.mxu0 0.0
  %1034 = vmatprep.subr.mxu0 0.0
  %1035 = vmatpush1.msra.mxu0 0.0
  %1036 = vmatprep.subr.mxu0 0.0
  %1037 = vmatpush1.msra.mxu0 0.0
  %1038 = vmatprep.subr.mxu0 0.0
  %1039 = vmatpush1.msra.mxu0 0.0
  %1040 = vmatprep.subr.mxu0 0.0
  %1041 = vmatpush1.msra.mxu0 0.0
  %1042 = vmatprep.subr.mxu0 0.0
  %1043 = vmatpush1.msra.mxu0 0.0
  %1044 = vmatprep.subr.mxu0 0.0
  %1045 = vmatpush1.msra.mxu0 0.0
  %1046 = vmatprep.subr.mxu0 0.0
  %1047 = vmatpush1.msra.mxu0 0.0
  %1048 = vmatprep.subr.mxu0 0.0
  %1049 = vmatpush1.msra.mxu0 0.0
  %1050 = vmatprep.subr.mxu0 0.0
  %1051 = vmatpush1.msra.mxu0 0.0
  %1052 = vmatprep.subr.mxu0 0.0
  %1053 = vmatpush1.msra.mxu0 0.0
  %1054 = vmatprep.subr.mxu0 0.0
  %1055 = vmatpush1.msra.mxu0 0.0
  %1056 = vmatprep.subr.mxu0 0.0
  %1057 = vmatpush1.msra.mxu0 0.0
  %1058 = vmatprep.subr.mxu0 0.0
  %1059 = vmatpush1.msra.mxu0 0.0
  %1060 = vmatprep.mubr.f32.mxu0 0.0
  %1061 = vmatmul.mubr.f32.gmra.mrb[0].mxu0 %v982
  %v1062 = vpop.f32.mrb[0].mxu0
  %v1063 = vadd.f32 0.0, %v1062
  %v1064 = vpop.f32.mrb[0].mxu0
  %v1065 = vadd.f32 0.0, %v1064
  %1066 = vdwg.mxu0
  %1067 = vmatprep.subr.mxu0 %v994
  %1068 = vmatpush1.msra.mxu0 %v991
  %1069 = vmatprep.subr.mxu0 0.0
  %1070 = vmatpush1.msra.mxu0 0.0
  %1071 = vmatprep.subr.mxu0 0.0
  %1072 = vmatpush1.msra.mxu0 0.0
  %1073 = vmatprep.subr.mxu0 0.0
  %1074 = vmatpush1.msra.mxu0 0.0
  %1075 = vmatprep.subr.mxu0 0.0
  %1076 = vmatpush1.msra.mxu0 0.0
  %1077 = vmatprep.subr.mxu0 0.0
  %1078 = vmatpush1.msra.mxu0 0.0
  %1079 = vmatprep.subr.mxu0 0.0
  %1080 = vmatpush1.msra.mxu0 0.0
  %1081 = vmatprep.subr.mxu0 0.0
  %1082 = vmatpush1.msra.mxu0 0.0
  %1083 = vmatprep.subr.mxu0 0.0
  %1084 = vmatpush1.msra.mxu0 0.0
  %1085 = vmatprep.subr.mxu0 0.0
  %1086 = vmatpush1.msra.mxu0 0.0
  %1087 = vmatprep.subr.mxu0 0.0
  %1088 = vmatpush1.msra.mxu0 0.0
  %1089 = vmatprep.subr.mxu0 0.0
  %1090 = vmatpush1.msra.mxu0 0.0
  %1091 = vmatprep.subr.mxu0 0.0
  %1092 = vmatpush1.msra.mxu0 0.0
  %1093 = vmatprep.subr.mxu0 0.0
  %1094 = vmatpush1.msra.mxu0 0.0
  %1095 = vmatprep.subr.mxu0 0.0
  %1096 = vmatpush1.msra.mxu0 0.0
  %1097 = vmatprep.subr.mxu0 0.0
  %1098 = vmatpush1.msra.mxu0 0.0
  %1099 = vmatprep.subr.mxu0 0.0
  %1100 = vmatpush1.msra.mxu0 0.0
  %1101 = vmatprep.subr.mxu0 0.0
  %1102 = vmatpush1.msra.mxu0 0.0
  %1103 = vmatprep.subr.mxu0 0.0
  %1104 = vmatpush1.msra.mxu0 0.0
  %1105 = vmatprep.subr.mxu0 0.0
  %1106 = vmatpush1.msra.mxu0 0.0
  %1107 = vmatprep.subr.mxu0 0.0
  %1108 = vmatpush1.msra.mxu0 0.0
  %1109 = vmatprep.subr.mxu0 0.0
  %1110 = vmatpush1.msra.mxu0 0.0
  %1111 = vmatprep.subr.mxu0 0.0
  %1112 = vmatpush1.msra.mxu0 0.0
  %1113 = vmatprep.subr.mxu0 0.0
  %1114 = vmatpush1.msra.mxu0 0.0
  %1115 = vmatprep.subr.mxu0 0.0
  %1116 = vmatpush1.msra.mxu0 0.0
  %1117 = vmatprep.subr.mxu0 0.0
  %1118 = vmatpush1.msra.mxu0 0.0
  %1119 = vmatprep.subr.mxu0 0.0
  %1120 = vmatpush1.msra.mxu0 0.0
  %1121 = vmatprep.subr.mxu0 0.0
  %1122 = vmatpush1.msra.mxu0 0.0
  %1123 = vmatprep.subr.mxu0 0.0
  %1124 = vmatpush1.msra.mxu0 0.0
  %1125 = vmatprep.subr.mxu0 0.0
  %1126 = vmatpush1.msra.mxu0 0.0
  %1127 = vmatprep.subr.mxu0 0.0
  %1128 = vmatpush1.msra.mxu0 0.0
  %1129 = vmatprep.subr.mxu0 0.0
  %1130 = vmatpush1.msra.mxu0 0.0
  %1131 = vmatprep.mubr.f32.mxu0 0.0
  %1132 = vmatmul.mubr.f32.gmra.mrb[0].mxu0 %v982
  %v1133 = vpop.f32.mrb[0].mxu0
  %v1134 = vadd.f32 0.0, %v1133
  %v1135 = vpop.f32.mrb[0].mxu0
  %v1136 = vadd.f32 0.0, %v1135
  %1137 = vdwg.mxu0
  %v1138 = vadd.f32 %v958, %v1063
  %v1139 = vadd.f32 %v959, %v1065
  %v1140 = vadd.f32 %v960, %v1134
  %v1141 = vadd.f32 %v961, %v1136
  %1142 = vrot.lane.b32.xlu0 %v32, 113
  %v1143 = vpop.permute.xlu0 %1142
  %1144 = vrot.lane.b32.xlu0 %v36, 113
  %v1145 = vpop.permute.xlu0 %1144
  %1146 = vrot.lane.b32.xlu0 %v34, 113
  %v1147 = vpop.permute.xlu0 %1146
  %1148 = vrot.lane.b32.xlu0 %v39, 113
  %v1149 = vpop.permute.xlu0 %1148
  %vm1150 = vcmp.lt.s32.totalorder %v42, 113
  %v1151 = vsel %vm1150, %v1147, %v1149
  %v1152 = vsel %vm1150, %v1145, %v1147
  %v1153 = vsel %vm1150, %v1143, %v1145
  %v1154 = vsel %vm1150, %v1149, %v1143
  %v1155 = vsel %vm82, %v1153, 0.0
  %v1156 = vsel %vm83, %v1152, 0.0
  %v1157 = vsel %vm84, %v1151, 0.0
  %v1158 = vsel %vm85, %v1154, 0.0
  %s1159 = scalar_lea.vmem %s1, 24
  %v1160 = vld [vmem:[%s1159] sm:$0xf]
  %v1162 = vsel %vm127, %v1160, 0
  %v1165 = vsel %vm131, %v1155, 0
  %v1168 = vsel %vm131, %v1156, 0
  %v1171 = vsel %vm131, %v1157, 0
  %v1174 = vsel %vm131, %v1158, 0
  %1176 = vmatprep.subr.mxu0 %v1168
  %1177 = vmatpush1.msra.mxu0 %v1165
  %1178 = vmatprep.subr.mxu0 0.0
  %1179 = vmatpush1.msra.mxu0 0.0
  %1180 = vmatprep.subr.mxu0 0.0
  %1181 = vmatpush1.msra.mxu0 0.0
  %1182 = vmatprep.subr.mxu0 0.0
  %1183 = vmatpush1.msra.mxu0 0.0
  %1184 = vmatprep.subr.mxu0 0.0
  %1185 = vmatpush1.msra.mxu0 0.0
  %1186 = vmatprep.subr.mxu0 0.0
  %1187 = vmatpush1.msra.mxu0 0.0
  %1188 = vmatprep.subr.mxu0 0.0
  %1189 = vmatpush1.msra.mxu0 0.0
  %1190 = vmatprep.subr.mxu0 0.0
  %1191 = vmatpush1.msra.mxu0 0.0
  %1192 = vmatprep.subr.mxu0 0.0
  %1193 = vmatpush1.msra.mxu0 0.0
  %1194 = vmatprep.subr.mxu0 0.0
  %1195 = vmatpush1.msra.mxu0 0.0
  %1196 = vmatprep.subr.mxu0 0.0
  %1197 = vmatpush1.msra.mxu0 0.0
  %1198 = vmatprep.subr.mxu0 0.0
  %1199 = vmatpush1.msra.mxu0 0.0
  %1200 = vmatprep.subr.mxu0 0.0
  %1201 = vmatpush1.msra.mxu0 0.0
  %1202 = vmatprep.subr.mxu0 0.0
  %1203 = vmatpush1.msra.mxu0 0.0
  %1204 = vmatprep.subr.mxu0 0.0
  %1205 = vmatpush1.msra.mxu0 0.0
  %1206 = vmatprep.subr.mxu0 0.0
  %1207 = vmatpush1.msra.mxu0 0.0
  %1208 = vmatprep.subr.mxu0 0.0
  %1209 = vmatpush1.msra.mxu0 0.0
  %1210 = vmatprep.subr.mxu0 0.0
  %1211 = vmatpush1.msra.mxu0 0.0
  %1212 = vmatprep.subr.mxu0 0.0
  %1213 = vmatpush1.msra.mxu0 0.0
  %1214 = vmatprep.subr.mxu0 0.0
  %1215 = vmatpush1.msra.mxu0 0.0
  %1216 = vmatprep.subr.mxu0 0.0
  %1217 = vmatpush1.msra.mxu0 0.0
  %1218 = vmatprep.subr.mxu0 0.0
  %1219 = vmatpush1.msra.mxu0 0.0
  %1220 = vmatprep.subr.mxu0 0.0
  %1221 = vmatpush1.msra.mxu0 0.0
  %1222 = vmatprep.subr.mxu0 0.0
  %1223 = vmatpush1.msra.mxu0 0.0
  %1224 = vmatprep.subr.mxu0 0.0
  %1225 = vmatpush1.msra.mxu0 0.0
  %1226 = vmatprep.subr.mxu0 0.0
  %1227 = vmatpush1.msra.mxu0 0.0
  %1228 = vmatprep.subr.mxu0 0.0
  %1229 = vmatpush1.msra.mxu0 0.0
  %1230 = vmatprep.subr.mxu0 0.0
  %1231 = vmatpush1.msra.mxu0 0.0
  %1232 = vmatprep.subr.mxu0 0.0
  %1233 = vmatpush1.msra.mxu0 0.0
  %1234 = vmatprep.subr.mxu0 0.0
  %1235 = vmatpush1.msra.mxu0 0.0
  %1236 = vmatprep.subr.mxu0 0.0
  %1237 = vmatpush1.msra.mxu0 0.0
  %1238 = vmatprep.subr.mxu0 0.0
  %1239 = vmatpush1.msra.mxu0 0.0
  %1240 = vmatprep.mubr.f32.mxu0 0.0
  %1241 = vmatmul.mubr.f32.gmra.mrb[0].mxu0 %v1162
  %v1242 = vpop.f32.mrb[0].mxu0
  %v1243 = vadd.f32 0.0, %v1242
  %v1244 = vpop.f32.mrb[0].mxu0
  %v1245 = vadd.f32 0.0, %v1244
  %1246 = vdwg.mxu0
  %1247 = vmatprep.subr.mxu0 %v1174
  %1248 = vmatpush1.msra.mxu0 %v1171
  %1249 = vmatprep.subr.mxu0 0.0
  %1250 = vmatpush1.msra.mxu0 0.0
  %1251 = vmatprep.subr.mxu0 0.0
  %1252 = vmatpush1.msra.mxu0 0.0
  %1253 = vmatprep.subr.mxu0 0.0
  %1254 = vmatpush1.msra.mxu0 0.0
  %1255 = vmatprep.subr.mxu0 0.0
  %1256 = vmatpush1.msra.mxu0 0.0
  %1257 = vmatprep.subr.mxu0 0.0
  %1258 = vmatpush1.msra.mxu0 0.0
  %1259 = vmatprep.subr.mxu0 0.0
  %1260 = vmatpush1.msra.mxu0 0.0
  %1261 = vmatprep.subr.mxu0 0.0
  %1262 = vmatpush1.msra.mxu0 0.0
  %1263 = vmatprep.subr.mxu0 0.0
  %1264 = vmatpush1.msra.mxu0 0.0
  %1265 = vmatprep.subr.mxu0 0.0
  %1266 = vmatpush1.msra.mxu0 0.0
  %1267 = vmatprep.subr.mxu0 0.0
  %1268 = vmatpush1.msra.mxu0 0.0
  %1269 = vmatprep.subr.mxu0 0.0
  %1270 = vmatpush1.msra.mxu0 0.0
  %1271 = vmatprep.subr.mxu0 0.0
  %1272 = vmatpush1.msra.mxu0 0.0
  %1273 = vmatprep.subr.mxu0 0.0
  %1274 = vmatpush1.msra.mxu0 0.0
  %1275 = vmatprep.subr.mxu0 0.0
  %1276 = vmatpush1.msra.mxu0 0.0
  %1277 = vmatprep.subr.mxu0 0.0
  %1278 = vmatpush1.msra.mxu0 0.0
  %1279 = vmatprep.subr.mxu0 0.0
  %1280 = vmatpush1.msra.mxu0 0.0
  %1281 = vmatprep.subr.mxu0 0.0
  %1282 = vmatpush1.msra.mxu0 0.0
  %1283 = vmatprep.subr.mxu0 0.0
  %1284 = vmatpush1.msra.mxu0 0.0
  %1285 = vmatprep.subr.mxu0 0.0
  %1286 = vmatpush1.msra.mxu0 0.0
  %1287 = vmatprep.subr.mxu0 0.0
  %1288 = vmatpush1.msra.mxu0 0.0
  %1289 = vmatprep.subr.mxu0 0.0
  %1290 = vmatpush1.msra.mxu0 0.0
  %1291 = vmatprep.subr.mxu0 0.0
  %1292 = vmatpush1.msra.mxu0 0.0
  %1293 = vmatprep.subr.mxu0 0.0
  %1294 = vmatpush1.msra.mxu0 0.0
  %1295 = vmatprep.subr.mxu0 0.0
  %1296 = vmatpush1.msra.mxu0 0.0
  %1297 = vmatprep.subr.mxu0 0.0
  %1298 = vmatpush1.msra.mxu0 0.0
  %1299 = vmatprep.subr.mxu0 0.0
  %1300 = vmatpush1.msra.mxu0 0.0
  %1301 = vmatprep.subr.mxu0 0.0
  %1302 = vmatpush1.msra.mxu0 0.0
  %1303 = vmatprep.subr.mxu0 0.0
  %1304 = vmatpush1.msra.mxu0 0.0
  %1305 = vmatprep.subr.mxu0 0.0
  %1306 = vmatpush1.msra.mxu0 0.0
  %1307 = vmatprep.subr.mxu0 0.0
  %1308 = vmatpush1.msra.mxu0 0.0
  %1309 = vmatprep.subr.mxu0 0.0
  %1310 = vmatpush1.msra.mxu0 0.0
  %1311 = vmatprep.mubr.f32.mxu0 0.0
  %1312 = vmatmul.mubr.f32.gmra.mrb[0].mxu0 %v1162
  %v1313 = vpop.f32.mrb[0].mxu0
  %v1314 = vadd.f32 0.0, %v1313
  %v1315 = vpop.f32.mrb[0].mxu0
  %v1316 = vadd.f32 0.0, %v1315
  %1317 = vdwg.mxu0
  %v1318 = vadd.f32 %v1138, %v1243
  %v1319 = vadd.f32 %v1139, %v1245
  %v1320 = vadd.f32 %v1140, %v1314
  %v1321 = vadd.f32 %v1141, %v1316
  %1322 = vrot.lane.b32.xlu0 %v32, 112
  %v1323 = vpop.permute.xlu0 %1322
  %1324 = vrot.lane.b32.xlu0 %v36, 112
  %v1325 = vpop.permute.xlu0 %1324
  %1326 = vrot.lane.b32.xlu0 %v34, 112
  %v1327 = vpop.permute.xlu0 %1326
  %1328 = vrot.lane.b32.xlu0 %v39, 112
  %v1329 = vpop.permute.xlu0 %1328
  %vm1330 = vcmp.lt.s32.totalorder %v42, 112
  %v1331 = vsel %vm1330, %v1327, %v1329
  %v1332 = vsel %vm1330, %v1325, %v1327
  %v1333 = vsel %vm1330, %v1323, %v1325
  %v1334 = vsel %vm1330, %v1329, %v1323
  %v1335 = vsel %vm78, %v1333, 0.0
  %v1336 = vsel %vm79, %v1332, 0.0
  %v1337 = vsel %vm80, %v1331, 0.0
  %v1338 = vsel %vm81, %v1334, 0.0
  %s1339 = scalar_lea.vmem %s1, 28
  %v1340 = vld [vmem:[%s1339] sm:$0xf]
  %v1342 = vsel %vm127, %v1340, 0
  %v1345 = vsel %vm131, %v1335, 0
  %v1348 = vsel %vm131, %v1336, 0
  %v1351 = vsel %vm131, %v1337, 0
  %v1354 = vsel %vm131, %v1338, 0
  %1356 = vmatprep.subr.mxu0 %v1348
  %1357 = vmatpush1.msra.mxu0 %v1345
  %1358 = vmatprep.subr.mxu0 0.0
  %1359 = vmatpush1.msra.mxu0 0.0
  %1360 = vmatprep.subr.mxu0 0.0
  %1361 = vmatpush1.msra.mxu0 0.0
  %1362 = vmatprep.subr.mxu0 0.0
  %1363 = vmatpush1.msra.mxu0 0.0
  %1364 = vmatprep.subr.mxu0 0.0
  %1365 = vmatpush1.msra.mxu0 0.0
  %1366 = vmatprep.subr.mxu0 0.0
  %1367 = vmatpush1.msra.mxu0 0.0
  %1368 = vmatprep.subr.mxu0 0.0
  %1369 = vmatpush1.msra.mxu0 0.0
  %1370 = vmatprep.subr.mxu0 0.0
  %1371 = vmatpush1.msra.mxu0 0.0
  %1372 = vmatprep.subr.mxu0 0.0
  %1373 = vmatpush1.msra.mxu0 0.0
  %1374 = vmatprep.subr.mxu0 0.0
  %1375 = vmatpush1.msra.mxu0 0.0
  %1376 = vmatprep.subr.mxu0 0.0
  %1377 = vmatpush1.msra.mxu0 0.0
  %1378 = vmatprep.subr.mxu0 0.0
  %1379 = vmatpush1.msra.mxu0 0.0
  %1380 = vmatprep.subr.mxu0 0.0
  %1381 = vmatpush1.msra.mxu0 0.0
  %1382 = vmatprep.subr.mxu0 0.0
  %1383 = vmatpush1.msra.mxu0 0.0
  %1384 = vmatprep.subr.mxu0 0.0
  %1385 = vmatpush1.msra.mxu0 0.0
  %1386 = vmatprep.subr.mxu0 0.0
  %1387 = vmatpush1.msra.mxu0 0.0
  %1388 = vmatprep.subr.mxu0 0.0
  %1389 = vmatpush1.msra.mxu0 0.0
  %1390 = vmatprep.subr.mxu0 0.0
  %1391 = vmatpush1.msra.mxu0 0.0
  %1392 = vmatprep.subr.mxu0 0.0
  %1393 = vmatpush1.msra.mxu0 0.0
  %1394 = vmatprep.subr.mxu0 0.0
  %1395 = vmatpush1.msra.mxu0 0.0
  %1396 = vmatprep.subr.mxu0 0.0
  %1397 = vmatpush1.msra.mxu0 0.0
  %1398 = vmatprep.subr.mxu0 0.0
  %1399 = vmatpush1.msra.mxu0 0.0
  %1400 = vmatprep.subr.mxu0 0.0
  %1401 = vmatpush1.msra.mxu0 0.0
  %1402 = vmatprep.subr.mxu0 0.0
  %1403 = vmatpush1.msra.mxu0 0.0
  %1404 = vmatprep.subr.mxu0 0.0
  %1405 = vmatpush1.msra.mxu0 0.0
  %1406 = vmatprep.subr.mxu0 0.0
  %1407 = vmatpush1.msra.mxu0 0.0
  %1408 = vmatprep.subr.mxu0 0.0
  %1409 = vmatpush1.msra.mxu0 0.0
  %1410 = vmatprep.subr.mxu0 0.0
  %1411 = vmatpush1.msra.mxu0 0.0
  %1412 = vmatprep.subr.mxu0 0.0
  %1413 = vmatpush1.msra.mxu0 0.0
  %1414 = vmatprep.subr.mxu0 0.0
  %1415 = vmatpush1.msra.mxu0 0.0
  %1416 = vmatprep.subr.mxu0 0.0
  %1417 = vmatpush1.msra.mxu0 0.0
  %1418 = vmatprep.subr.mxu0 0.0
  %1419 = vmatpush1.msra.mxu0 0.0
  %1420 = vmatprep.mubr.f32.mxu0 0.0
  %1421 = vmatmul.mubr.f32.gmra.mrb[0].mxu0 %v1342
  %v1422 = vpop.f32.mrb[0].mxu0
  %v1423 = vadd.f32 0.0, %v1422
  %v1424 = vpop.f32.mrb[0].mxu0
  %v1425 = vadd.f32 0.0, %v1424
  %1426 = vdwg.mxu0
  %1427 = vmatprep.subr.mxu0 %v1354
  %1428 = vmatpush1.msra.mxu0 %v1351
  %1429 = vmatprep.subr.mxu0 0.0
  %1430 = vmatpush1.msra.mxu0 0.0
  %1431 = vmatprep.subr.mxu0 0.0
  %1432 = vmatpush1.msra.mxu0 0.0
  %1433 = vmatprep.subr.mxu0 0.0
  %1434 = vmatpush1.msra.mxu0 0.0
  %1435 = vmatprep.subr.mxu0 0.0
  %1436 = vmatpush1.msra.mxu0 0.0
  %1437 = vmatprep.subr.mxu0 0.0
  %1438 = vmatpush1.msra.mxu0 0.0
  %1439 = vmatprep.subr.mxu0 0.0
  %1440 = vmatpush1.msra.mxu0 0.0
  %1441 = vmatprep.subr.mxu0 0.0
  %1442 = vmatpush1.msra.mxu0 0.0
  %1443 = vmatprep.subr.mxu0 0.0
  %1444 = vmatpush1.msra.mxu0 0.0
  %1445 = vmatprep.subr.mxu0 0.0
  %1446 = vmatpush1.msra.mxu0 0.0
  %1447 = vmatprep.subr.mxu0 0.0
  %1448 = vmatpush1.msra.mxu0 0.0
  %1449 = vmatprep.subr.mxu0 0.0
  %1450 = vmatpush1.msra.mxu0 0.0
  %1451 = vmatprep.subr.mxu0 0.0
  %1452 = vmatpush1.msra.mxu0 0.0
  %1453 = vmatprep.subr.mxu0 0.0
  %1454 = vmatpush1.msra.mxu0 0.0
  %1455 = vmatprep.subr.mxu0 0.0
  %1456 = vmatpush1.msra.mxu0 0.0
  %1457 = vmatprep.subr.mxu0 0.0
  %1458 = vmatpush1.msra.mxu0 0.0
  %1459 = vmatprep.subr.mxu0 0.0
  %1460 = vmatpush1.msra.mxu0 0.0
  %1461 = vmatprep.subr.mxu0 0.0
  %1462 = vmatpush1.msra.mxu0 0.0
  %1463 = vmatprep.subr.mxu0 0.0
  %1464 = vmatpush1.msra.mxu0 0.0
  %1465 = vmatprep.subr.mxu0 0.0
  %1466 = vmatpush1.msra.mxu0 0.0
  %1467 = vmatprep.subr.mxu0 0.0
  %1468 = vmatpush1.msra.mxu0 0.0
  %1469 = vmatprep.subr.mxu0 0.0
  %1470 = vmatpush1.msra.mxu0 0.0
  %1471 = vmatprep.subr.mxu0 0.0
  %1472 = vmatpush1.msra.mxu0 0.0
  %1473 = vmatprep.subr.mxu0 0.0
  %1474 = vmatpush1.msra.mxu0 0.0
  %1475 = vmatprep.subr.mxu0 0.0
  %1476 = vmatpush1.msra.mxu0 0.0
  %1477 = vmatprep.subr.mxu0 0.0
  %1478 = vmatpush1.msra.mxu0 0.0
  %1479 = vmatprep.subr.mxu0 0.0
  %1480 = vmatpush1.msra.mxu0 0.0
  %1481 = vmatprep.subr.mxu0 0.0
  %1482 = vmatpush1.msra.mxu0 0.0
  %1483 = vmatprep.subr.mxu0 0.0
  %1484 = vmatpush1.msra.mxu0 0.0
  %1485 = vmatprep.subr.mxu0 0.0
  %1486 = vmatpush1.msra.mxu0 0.0
  %1487 = vmatprep.subr.mxu0 0.0
  %1488 = vmatpush1.msra.mxu0 0.0
  %1489 = vmatprep.subr.mxu0 0.0
  %1490 = vmatpush1.msra.mxu0 0.0
  %1491 = vmatprep.mubr.f32.mxu0 0.0
  %1492 = vmatmul.mubr.f32.gmra.mrb[0].mxu0 %v1342
  %v1493 = vpop.f32.mrb[0].mxu0
  %v1494 = vadd.f32 0.0, %v1493
  %v1495 = vpop.f32.mrb[0].mxu0
  %v1496 = vadd.f32 0.0, %v1495
  %1497 = vdwg.mxu0
  %v1498 = vadd.f32 %v1318, %v1423
  %v1499 = vadd.f32 %v1319, %v1425
  %v1500 = vadd.f32 %v1320, %v1494
  %v1501 = vadd.f32 %v1321, %v1496
  %1502 = vrot.lane.b32.xlu0 %v32, 111
  %v1503 = vpop.permute.xlu0 %1502
  %1504 = vrot.lane.b32.xlu0 %v36, 111
  %v1505 = vpop.permute.xlu0 %1504
  %1506 = vrot.lane.b32.xlu0 %v34, 111
  %v1507 = vpop.permute.xlu0 %1506
  %1508 = vrot.lane.b32.xlu0 %v39, 111
  %v1509 = vpop.permute.xlu0 %1508
  %vm1510 = vcmp.lt.s32.totalorder %v42, 111
  %v1511 = vsel %vm1510, %v1507, %v1509
  %v1512 = vsel %vm1510, %v1505, %v1507
  %v1513 = vsel %vm1510, %v1503, %v1505
  %v1514 = vsel %vm1510, %v1509, %v1503
  %v1515 = vsel %vm86, %v1513, 0.0
  %v1516 = vsel %vm87, %v1512, 0.0
  %v1517 = vsel %vm88, %v1511, 0.0
  %v1518 = vsel %vm89, %v1514, 0.0
  %s1519 = scalar_lea.vmem %s1, 32
  %v1520 = vld [vmem:[%s1519] sm:$0xf]
  %v1522 = vsel %vm127, %v1520, 0
  %v1525 = vsel %vm131, %v1515, 0
  %v1528 = vsel %vm131, %v1516, 0
  %v1531 = vsel %vm131, %v1517, 0
  %v1534 = vsel %vm131, %v1518, 0
  %1536 = vmatprep.subr.mxu0 %v1528
  %1537 = vmatpush1.msra.mxu0 %v1525
  %1538 = vmatprep.subr.mxu0 0.0
  %1539 = vmatpush1.msra.mxu0 0.0
  %1540 = vmatprep.subr.mxu0 0.0
  %1541 = vmatpush1.msra.mxu0 0.0
  %1542 = vmatprep.subr.mxu0 0.0
  %1543 = vmatpush1.msra.mxu0 0.0
  %1544 = vmatprep.subr.mxu0 0.0
  %1545 = vmatpush1.msra.mxu0 0.0
  %1546 = vmatprep.subr.mxu0 0.0
  %1547 = vmatpush1.msra.mxu0 0.0
  %1548 = vmatprep.subr.mxu0 0.0
  %1549 = vmatpush1.msra.mxu0 0.0
  %1550 = vmatprep.subr.mxu0 0.0
  %1551 = vmatpush1.msra.mxu0 0.0
  %1552 = vmatprep.subr.mxu0 0.0
  %1553 = vmatpush1.msra.mxu0 0.0
  %1554 = vmatprep.subr.mxu0 0.0
  %1555 = vmatpush1.msra.mxu0 0.0
  %1556 = vmatprep.subr.mxu0 0.0
  %1557 = vmatpush1.msra.mxu0 0.0
  %1558 = vmatprep.subr.mxu0 0.0
  %1559 = vmatpush1.msra.mxu0 0.0
  %1560 = vmatprep.subr.mxu0 0.0
  %1561 = vmatpush1.msra.mxu0 0.0
  %1562 = vmatprep.subr.mxu0 0.0
  %1563 = vmatpush1.msra.mxu0 0.0
  %1564 = vmatprep.subr.mxu0 0.0
  %1565 = vmatpush1.msra.mxu0 0.0
  %1566 = vmatprep.subr.mxu0 0.0
  %1567 = vmatpush1.msra.mxu0 0.0
  %1568 = vmatprep.subr.mxu0 0.0
  %1569 = vmatpush1.msra.mxu0 0.0
  %1570 = vmatprep.subr.mxu0 0.0
  %1571 = vmatpush1.msra.mxu0 0.0
  %1572 = vmatprep.subr.mxu0 0.0
  %1573 = vmatpush1.msra.mxu0 0.0
  %1574 = vmatprep.subr.mxu0 0.0
  %1575 = vmatpush1.msra.mxu0 0.0
  %1576 = vmatprep.subr.mxu0 0.0
  %1577 = vmatpush1.msra.mxu0 0.0
  %1578 = vmatprep.subr.mxu0 0.0
  %1579 = vmatpush1.msra.mxu0 0.0
  %1580 = vmatprep.subr.mxu0 0.0
  %1581 = vmatpush1.msra.mxu0 0.0
  %1582 = vmatprep.subr.mxu0 0.0
  %1583 = vmatpush1.msra.mxu0 0.0
  %1584 = vmatprep.subr.mxu0 0.0
  %1585 = vmatpush1.msra.mxu0 0.0
  %1586 = vmatprep.subr.mxu0 0.0
  %1587 = vmatpush1.msra.mxu0 0.0
  %1588 = vmatprep.subr.mxu0 0.0
  %1589 = vmatpush1.msra.mxu0 0.0
  %1590 = vmatprep.subr.mxu0 0.0
  %1591 = vmatpush1.msra.mxu0 0.0
  %1592 = vmatprep.subr.mxu0 0.0
  %1593 = vmatpush1.msra.mxu0 0.0
  %1594 = vmatprep.subr.mxu0 0.0
  %1595 = vmatpush1.msra.mxu0 0.0
  %1596 = vmatprep.subr.mxu0 0.0
  %1597 = vmatpush1.msra.mxu0 0.0
  %1598 = vmatprep.subr.mxu0 0.0
  %1599 = vmatpush1.msra.mxu0 0.0
  %1600 = vmatprep.mubr.f32.mxu0 0.0
  %1601 = vmatmul.mubr.f32.gmra.mrb[0].mxu0 %v1522
  %v1602 = vpop.f32.mrb[0].mxu0
  %v1603 = vadd.f32 0.0, %v1602
  %v1604 = vpop.f32.mrb[0].mxu0
  %v1605 = vadd.f32 0.0, %v1604
  %1606 = vdwg.mxu0
  %1607 = vmatprep.subr.mxu0 %v1534
  %1608 = vmatpush1.msra.mxu0 %v1531
  %1609 = vmatprep.subr.mxu0 0.0
  %1610 = vmatpush1.msra.mxu0 0.0
  %1611 = vmatprep.subr.mxu0 0.0
  %1612 = vmatpush1.msra.mxu0 0.0
  %1613 = vmatprep.subr.mxu0 0.0
  %1614 = vmatpush1.msra.mxu0 0.0
  %1615 = vmatprep.subr.mxu0 0.0
  %1616 = vmatpush1.msra.mxu0 0.0
  %1617 = vmatprep.subr.mxu0 0.0
  %1618 = vmatpush1.msra.mxu0 0.0
  %1619 = vmatprep.subr.mxu0 0.0
  %1620 = vmatpush1.msra.mxu0 0.0
  %1621 = vmatprep.subr.mxu0 0.0
  %1622 = vmatpush1.msra.mxu0 0.0
  %1623 = vmatprep.subr.mxu0 0.0
  %1624 = vmatpush1.msra.mxu0 0.0
  %1625 = vmatprep.subr.mxu0 0.0
  %1626 = vmatpush1.msra.mxu0 0.0
  %1627 = vmatprep.subr.mxu0 0.0
  %1628 = vmatpush1.msra.mxu0 0.0
  %1629 = vmatprep.subr.mxu0 0.0
  %1630 = vmatpush1.msra.mxu0 0.0
  %1631 = vmatprep.subr.mxu0 0.0
  %1632 = vmatpush1.msra.mxu0 0.0
  %1633 = vmatprep.subr.mxu0 0.0
  %1634 = vmatpush1.msra.mxu0 0.0
  %1635 = vmatprep.subr.mxu0 0.0
  %1636 = vmatpush1.msra.mxu0 0.0
  %1637 = vmatprep.subr.mxu0 0.0
  %1638 = vmatpush1.msra.mxu0 0.0
  %1639 = vmatprep.subr.mxu0 0.0
  %1640 = vmatpush1.msra.mxu0 0.0
  %1641 = vmatprep.subr.mxu0 0.0
  %1642 = vmatpush1.msra.mxu0 0.0
  %1643 = vmatprep.subr.mxu0 0.0
  %1644 = vmatpush1.msra.mxu0 0.0
  %1645 = vmatprep.subr.mxu0 0.0
  %1646 = vmatpush1.msra.mxu0 0.0
  %1647 = vmatprep.subr.mxu0 0.0
  %1648 = vmatpush1.msra.mxu0 0.0
  %1649 = vmatprep.subr.mxu0 0.0
  %1650 = vmatpush1.msra.mxu0 0.0
  %1651 = vmatprep.subr.mxu0 0.0
  %1652 = vmatpush1.msra.mxu0 0.0
  %1653 = vmatprep.subr.mxu0 0.0
  %1654 = vmatpush1.msra.mxu0 0.0
  %1655 = vmatprep.subr.mxu0 0.0
  %1656 = vmatpush1.msra.mxu0 0.0
  %1657 = vmatprep.subr.mxu0 0.0
  %1658 = vmatpush1.msra.mxu0 0.0
  %1659 = vmatprep.subr.mxu0 0.0
  %1660 = vmatpush1.msra.mxu0 0.0
  %1661 = vmatprep.subr.mxu0 0.0
  %1662 = vmatpush1.msra.mxu0 0.0
  %1663 = vmatprep.subr.mxu0 0.0
  %1664 = vmatpush1.msra.mxu0 0.0
  %1665 = vmatprep.subr.mxu0 0.0
  %1666 = vmatpush1.msra.mxu0 0.0
  %1667 = vmatprep.subr.mxu0 0.0
  %1668 = vmatpush1.msra.mxu0 0.0
  %1669 = vmatprep.subr.mxu0 0.0
  %1670 = vmatpush1.msra.mxu0 0.0
  %1671 = vmatprep.mubr.f32.mxu0 0.0
  %1672 = vmatmul.mubr.f32.gmra.mrb[0].mxu0 %v1522
  %v1673 = vpop.f32.mrb[0].mxu0
  %v1674 = vadd.f32 0.0, %v1673
  %v1675 = vpop.f32.mrb[0].mxu0
  %v1676 = vadd.f32 0.0, %v1675
  %1677 = vdwg.mxu0
  %v1678 = vadd.f32 %v1498, %v1603
  %v1679 = vadd.f32 %v1499, %v1605
  %v1680 = vadd.f32 %v1500, %v1674
  %v1681 = vadd.f32 %v1501, %v1676
  %v1682 = vld [vmem:[%s2] sm:$0xf]
  %1684 = vset.pattern.permute.xlu0 0
  %1685 = vperm.xlu0 %1684, %v1682
  %v1686 = vpop.permute.xlu0 %1685
  %v1688 = vadd.f32 %v1678, %v1686
  %v1689 = vadd.f32 %v1679, %v1686
  %v1690 = vadd.f32 %v1680, %v1686
  %v1691 = vadd.f32 %v1681, %v1686
  %v1692 = vsel %vm131, %v1688, 0.0
  %v1693 = vsel %vm131, %v1689, 0.0
  %v1694 = vadd.f32 %v1692, %v1693
  %v1695 = vsel %vm131, %v1690, 0.0
  %v1696 = vadd.f32 %v1694, %v1695
  %v1697 = vsel %vm131, %v1691, 0.0
  %v1698 = vadd.f32 %v1696, %v1697
  %1699 = vadd.xlane.f32.xlu0 %v1698
  %v1700 = vpop.xlane.xlu0 %1699
  %v1701 = vmul.f32 %v1700, 0.001953125
  %v1702 = vsub.f32 %v1688, %v1701
  %v1703 = vsub.f32 %v1689, %v1701
  %v1704 = vsub.f32 %v1690, %v1701
  %v1705 = vsub.f32 %v1691, %v1701
  %v1706 = vmul.f32 %v1702, %v1702
  %v1707 = vmul.f32 %v1703, %v1703
  %v1708 = vmul.f32 %v1704, %v1704
  %v1709 = vmul.f32 %v1705, %v1705
  %v1710 = vsel %vm131, %v1706, 0.0
  %v1711 = vsel %vm131, %v1707, 0.0
  %v1712 = vadd.f32 %v1710, %v1711
  %v1713 = vsel %vm131, %v1708, 0.0
  %v1714 = vadd.f32 %v1712, %v1713
  %v1715 = vsel %vm131, %v1709, 0.0
  %v1716 = vadd.f32 %v1714, %v1715
  %1717 = vadd.xlane.f32.xlu0 %v1716
  %v1718 = vpop.xlane.xlu0 %1717
  %v1719 = vmul.f32 %v1718, 0.001953125
  %v1720 = vadd.f32 %v1719, 1e-05
  %v1721 = vrsqrt.pop %v1720
  %v1722 = vld [vmem:[%s3] sm:$0xf]
  %v1723 = vmul.f32 %v1721, %v1722
  %1725 = vset.pattern.permute.xlu0 0
  %1726 = vperm.xlu0 %1725, %v1723
  %v1727 = vpop.permute.xlu0 %1726
  %v1729 = vmul.f32 %v1702, %v1727
  %v1730 = vmul.f32 %v1703, %v1727
  %v1731 = vmul.f32 %v1704, %v1727
  %v1732 = vmul.f32 %v1705, %v1727
  %v1733 = vld [vmem:[%s4] sm:$0xf]
  %1735 = vset.pattern.permute.xlu0 0
  %1736 = vperm.xlu0 %1735, %v1733
  %v1737 = vpop.permute.xlu0 %1736
  %v1739 = vadd.f32 %v1729, %v1737
  %v1740 = vadd.f32 %v1730, %v1737
  %v1741 = vadd.f32 %v1731, %v1737
  %v1742 = vadd.f32 %v1732, %v1737
  %vm1743 = vcmp.gt.f32.partialorder %v1739, 0.0
  %vm1744 = vcmp.gt.f32.partialorder %v1740, 0.0
  %vm1745 = vcmp.gt.f32.partialorder %v1741, 0.0
  %vm1746 = vcmp.gt.f32.partialorder %v1742, 0.0
  %v1747 = vmul.f32 %v1739, 0.01
  %v1748 = vmul.f32 %v1740, 0.01
  %v1749 = vmul.f32 %v1741, 0.01
  %v1750 = vmul.f32 %v1742, 0.01
  %v1751 = vsel %vm1743, %v1739, %v1747
  %v1752 = vsel %vm1744, %v1740, %v1748
  %v1753 = vsel %vm1745, %v1741, %v1749
  %v1754 = vsel %vm1746, %v1742, %v1750
  %1755 = vrot.lane.b32.xlu0 %v1751, 17
  %v1756 = vpop.permute.xlu0 %1755
  %1757 = vrot.lane.b32.xlu0 %v1752, 17
  %v1758 = vpop.permute.xlu0 %1757
  %1759 = vrot.lane.b32.xlu0 %v1753, 17
  %v1760 = vpop.permute.xlu0 %1759
  %1761 = vrot.lane.b32.xlu0 %v1754, 17
  %v1762 = vpop.permute.xlu0 %1761
  %v1763 = vsel %vm98, %v1760, %v1762
  %v1764 = vsel %vm98, %v1758, %v1760
  %v1765 = vsel %vm98, %v1756, %v1758
  %v1766 = vsel %vm98, %v1762, %v1756
  %v1767 = vsel %vm66, %v1766, 0.0
  %v1768 = vsel %vm67, %v1765, 0.0
  %v1769 = vsel %vm68, %v1764, 0.0
  %v1770 = vsel %vm69, %v1763, 0.0
  %v1771 = vld [vmem:[%s5] sm:$0xf]
  %1772 = vrot.lane.b32.xlu0 %v1751, 16
  %v1773 = vpop.permute.xlu0 %1772
  %1774 = vrot.lane.b32.xlu0 %v1752, 16
  %v1775 = vpop.permute.xlu0 %1774
  %1776 = vrot.lane.b32.xlu0 %v1753, 16
  %v1777 = vpop.permute.xlu0 %1776
  %1778 = vrot.lane.b32.xlu0 %v1754, 16
  %v1779 = vpop.permute.xlu0 %1778
  %v1780 = vsel %vm116, %v1777, %v1779
  %v1781 = vsel %vm116, %v1775, %v1777
  %v1782 = vsel %vm116, %v1773, %v1775
  %v1783 = vsel %vm116, %v1779, %v1773
  %v1784 = vsel %vm58, %v1783, 0.0
  %v1785 = vsel %vm59, %v1782, 0.0
  %v1786 = vsel %vm60, %v1781, 0.0
  %v1787 = vsel %vm61, %v1780, 0.0
  %s1788 = scalar_lea.vmem %s5, 4
  %v1789 = vld [vmem:[%s1788] sm:$0xf]
  %v1791 = vsel %vm127, %v1789, 0
  %v1794 = vsel %vm131, %v1784, 0
  %v1797 = vsel %vm131, %v1785, 0
  %v1800 = vsel %vm131, %v1786, 0
  %v1803 = vsel %vm131, %v1787, 0
  %1805 = vmatprep.subr.mxu0 %v1797
  %1806 = vmatpush1.msra.mxu0 %v1794
  %1807 = vmatprep.subr.mxu0 0.0
  %1808 = vmatpush1.msra.mxu0 0.0
  %1809 = vmatprep.subr.mxu0 0.0
  %1810 = vmatpush1.msra.mxu0 0.0
  %1811 = vmatprep.subr.mxu0 0.0
  %1812 = vmatpush1.msra.mxu0 0.0
  %1813 = vmatprep.subr.mxu0 0.0
  %1814 = vmatpush1.msra.mxu0 0.0
  %1815 = vmatprep.subr.mxu0 0.0
  %1816 = vmatpush1.msra.mxu0 0.0
  %1817 = vmatprep.subr.mxu0 0.0
  %1818 = vmatpush1.msra.mxu0 0.0
  %1819 = vmatprep.subr.mxu0 0.0
  %1820 = vmatpush1.msra.mxu0 0.0
  %1821 = vmatprep.subr.mxu0 0.0
  %1822 = vmatpush1.msra.mxu0 0.0
  %1823 = vmatprep.subr.mxu0 0.0
  %1824 = vmatpush1.msra.mxu0 0.0
  %1825 = vmatprep.subr.mxu0 0.0
  %1826 = vmatpush1.msra.mxu0 0.0
  %1827 = vmatprep.subr.mxu0 0.0
  %1828 = vmatpush1.msra.mxu0 0.0
  %1829 = vmatprep.subr.mxu0 0.0
  %1830 = vmatpush1.msra.mxu0 0.0
  %1831 = vmatprep.subr.mxu0 0.0
  %1832 = vmatpush1.msra.mxu0 0.0
  %1833 = vmatprep.subr.mxu0 0.0
  %1834 = vmatpush1.msra.mxu0 0.0
  %1835 = vmatprep.subr.mxu0 0.0
  %1836 = vmatpush1.msra.mxu0 0.0
  %1837 = vmatprep.subr.mxu0 0.0
  %1838 = vmatpush1.msra.mxu0 0.0
  %1839 = vmatprep.subr.mxu0 0.0
  %1840 = vmatpush1.msra.mxu0 0.0
  %1841 = vmatprep.subr.mxu0 0.0
  %1842 = vmatpush1.msra.mxu0 0.0
  %1843 = vmatprep.subr.mxu0 0.0
  %1844 = vmatpush1.msra.mxu0 0.0
  %1845 = vmatprep.subr.mxu0 0.0
  %1846 = vmatpush1.msra.mxu0 0.0
  %1847 = vmatprep.subr.mxu0 0.0
  %1848 = vmatpush1.msra.mxu0 0.0
  %1849 = vmatprep.subr.mxu0 0.0
  %1850 = vmatpush1.msra.mxu0 0.0
  %1851 = vmatprep.subr.mxu0 0.0
  %1852 = vmatpush1.msra.mxu0 0.0
  %1853 = vmatprep.subr.mxu0 0.0
  %1854 = vmatpush1.msra.mxu0 0.0
  %1855 = vmatprep.subr.mxu0 0.0
  %1856 = vmatpush1.msra.mxu0 0.0
  %1857 = vmatprep.subr.mxu0 0.0
  %1858 = vmatpush1.msra.mxu0 0.0
  %1859 = vmatprep.subr.mxu0 0.0
  %1860 = vmatpush1.msra.mxu0 0.0
  %1861 = vmatprep.subr.mxu0 0.0
  %1862 = vmatpush1.msra.mxu0 0.0
  %1863 = vmatprep.subr.mxu0 0.0
  %1864 = vmatpush1.msra.mxu0 0.0
  %1865 = vmatprep.subr.mxu0 0.0
  %1866 = vmatpush1.msra.mxu0 0.0
  %1867 = vmatprep.subr.mxu0 0.0
  %1868 = vmatpush1.msra.mxu0 0.0
  %1869 = vmatprep.mubr.f32.mxu0 0.0
  %1870 = vmatmul.mubr.f32.gmra.mrb[0].mxu0 %v1791
  %v1871 = vpop.f32.mrb[0].mxu0
  %v1872 = vadd.f32 0.0, %v1871
  %v1873 = vpop.f32.mrb[0].mxu0
  %v1874 = vadd.f32 0.0, %v1873
  %1875 = vdwg.mxu0
  %1876 = vmatprep.subr.mxu0 %v1803
  %1877 = vmatpush1.msra.mxu0 %v1800
  %1878 = vmatprep.subr.mxu0 0.0
  %1879 = vmatpush1.msra.mxu0 0.0
  %1880 = vmatprep.subr.mxu0 0.0
  %1881 = vmatpush1.msra.mxu0 0.0
  %1882 = vmatprep.subr.mxu0 0.0
  %1883 = vmatpush1.msra.mxu0 0.0
  %1884 = vmatprep.subr.mxu0 0.0
  %1885 = vmatpush1.msra.mxu0 0.0
  %1886 = vmatprep.subr.mxu0 0.0
  %1887 = vmatpush1.msra.mxu0 0.0
  %1888 = vmatprep.subr.mxu0 0.0
  %1889 = vmatpush1.msra.mxu0 0.0
  %1890 = vmatprep.subr.mxu0 0.0
  %1891 = vmatpush1.msra.mxu0 0.0
  %1892 = vmatprep.subr.mxu0 0.0
  %1893 = vmatpush1.msra.mxu0 0.0
  %1894 = vmatprep.subr.mxu0 0.0
  %1895 = vmatpush1.msra.mxu0 0.0
  %1896 = vmatprep.subr.mxu0 0.0
  %1897 = vmatpush1.msra.mxu0 0.0
  %1898 = vmatprep.subr.mxu0 0.0
  %1899 = vmatpush1.msra.mxu0 0.0
  %1900 = vmatprep.subr.mxu0 0.0
  %1901 = vmatpush1.msra.mxu0 0.0
  %1902 = vmatprep.subr.mxu0 0.0
  %1903 = vmatpush1.msra.mxu0 0.0
  %1904 = vmatprep.subr.mxu0 0.0
  %1905 = vmatpush1.msra.mxu0 0.0
  %1906 = vmatprep.subr.mxu0 0.0
  %1907 = vmatpush1.msra.mxu0 0.0
  %1908 = vmatprep.subr.mxu0 0.0
  %1909 = vmatpush1.msra.mxu0 0.0
  %1910 = vmatprep.subr.mxu0 0.0
  %1911 = vmatpush1.msra.mxu0 0.0
  %1912 = vmatprep.subr.mxu0 0.0
  %1913 = vmatpush1.msra.mxu0 0.0
  %1914 = vmatprep.subr.mxu0 0.0
  %1915 = vmatpush1.msra.mxu0 0.0
  %1916 = vmatprep.subr.mxu0 0.0
  %1917 = vmatpush1.msra.mxu0 0.0
  %1918 = vmatprep.subr.mxu0 0.0
  %1919 = vmatpush1.msra.mxu0 0.0
  %1920 = vmatprep.subr.mxu0 0.0
  %1921 = vmatpush1.msra.mxu0 0.0
  %1922 = vmatprep.subr.mxu0 0.0
  %1923 = vmatpush1.msra.mxu0 0.0
  %1924 = vmatprep.subr.mxu0 0.0
  %1925 = vmatpush1.msra.mxu0 0.0
  %1926 = vmatprep.subr.mxu0 0.0
  %1927 = vmatpush1.msra.mxu0 0.0
  %1928 = vmatprep.subr.mxu0 0.0
  %1929 = vmatpush1.msra.mxu0 0.0
  %1930 = vmatprep.subr.mxu0 0.0
  %1931 = vmatpush1.msra.mxu0 0.0
  %1932 = vmatprep.subr.mxu0 0.0
  %1933 = vmatpush1.msra.mxu0 0.0
  %1934 = vmatprep.subr.mxu0 0.0
  %1935 = vmatpush1.msra.mxu0 0.0
  %1936 = vmatprep.subr.mxu0 0.0
  %1937 = vmatpush1.msra.mxu0 0.0
  %1938 = vmatprep.subr.mxu0 0.0
  %1939 = vmatpush1.msra.mxu0 0.0
  %1940 = vmatprep.mubr.f32.mxu0 0.0
  %1941 = vmatmul.mubr.f32.gmra.mrb[0].mxu0 %v1791
  %v1942 = vpop.f32.mrb[0].mxu0
  %v1943 = vadd.f32 0.0, %v1942
  %v1944 = vpop.f32.mrb[0].mxu0
  %v1945 = vadd.f32 0.0, %v1944
  %1946 = vdwg.mxu0
  %v1948 = vsel %vm127, %v1771, 0
  %v1951 = vsel %vm131, %v1767, 0
  %v1954 = vsel %vm131, %v1768, 0
  %v1957 = vsel %vm131, %v1769, 0
  %v1960 = vsel %vm131, %v1770, 0
  %1962 = vmatprep.subr.mxu0 %v1954
  %1963 = vmatpush1.msra.mxu0 %v1951
  %1964 = vmatprep.subr.mxu0 0.0
  %1965 = vmatpush1.msra.mxu0 0.0
  %1966 = vmatprep.subr.mxu0 0.0
  %1967 = vmatpush1.msra.mxu0 0.0
  %1968 = vmatprep.subr.mxu0 0.0
  %1969 = vmatpush1.msra.mxu0 0.0
  %1970 = vmatprep.subr.mxu0 0.0
  %1971 = vmatpush1.msra.mxu0 0.0
  %1972 = vmatprep.subr.mxu0 0.0
  %1973 = vmatpush1.msra.mxu0 0.0
  %1974 = vmatprep.subr.mxu0 0.0
  %1975 = vmatpush1.msra.mxu0 0.0
  %1976 = vmatprep.subr.mxu0 0.0
  %1977 = vmatpush1.msra.mxu0 0.0
  %1978 = vmatprep.subr.mxu0 0.0
  %1979 = vmatpush1.msra.mxu0 0.0
  %1980 = vmatprep.subr.mxu0 0.0
  %1981 = vmatpush1.msra.mxu0 0.0
  %1982 = vmatprep.subr.mxu0 0.0
  %1983 = vmatpush1.msra.mxu0 0.0
  %1984 = vmatprep.subr.mxu0 0.0
  %1985 = vmatpush1.msra.mxu0 0.0
  %1986 = vmatprep.subr.mxu0 0.0
  %1987 = vmatpush1.msra.mxu0 0.0
  %1988 = vmatprep.subr.mxu0 0.0
  %1989 = vmatpush1.msra.mxu0 0.0
  %1990 = vmatprep.subr.mxu0 0.0
  %1991 = vmatpush1.msra.mxu0 0.0
  %1992 = vmatprep.subr.mxu0 0.0
  %1993 = vmatpush1.msra.mxu0 0.0
  %1994 = vmatprep.subr.mxu0 0.0
  %1995 = vmatpush1.msra.mxu0 0.0
  %1996 = vmatprep.subr.mxu0 0.0
  %1997 = vmatpush1.msra.mxu0 0.0
  %1998 = vmatprep.subr.mxu0 0.0
  %1999 = vmatpush1.msra.mxu0 0.0
  %2000 = vmatprep.subr.mxu0 0.0
  %2001 = vmatpush1.msra.mxu0 0.0
  %2002 = vmatprep.subr.mxu0 0.0
  %2003 = vmatpush1.msra.mxu0 0.0
  %2004 = vmatprep.subr.mxu0 0.0
  %2005 = vmatpush1.msra.mxu0 0.0
  %2006 = vmatprep.subr.mxu0 0.0
  %2007 = vmatpush1.msra.mxu0 0.0
  %2008 = vmatprep.subr.mxu0 0.0
  %2009 = vmatpush1.msra.mxu0 0.0
  %2010 = vmatprep.subr.mxu0 0.0
  %2011 = vmatpush1.msra.mxu0 0.0
  %2012 = vmatprep.subr.mxu0 0.0
  %2013 = vmatpush1.msra.mxu0 0.0
  %2014 = vmatprep.subr.mxu0 0.0
  %2015 = vmatpush1.msra.mxu0 0.0
  %2016 = vmatprep.subr.mxu0 0.0
  %2017 = vmatpush1.msra.mxu0 0.0
  %2018 = vmatprep.subr.mxu0 0.0
  %2019 = vmatpush1.msra.mxu0 0.0
  %2020 = vmatprep.subr.mxu0 0.0
  %2021 = vmatpush1.msra.mxu0 0.0
  %2022 = vmatprep.subr.mxu0 0.0
  %2023 = vmatpush1.msra.mxu0 0.0
  %2024 = vmatprep.subr.mxu0 0.0
  %2025 = vmatpush1.msra.mxu0 0.0
  %2026 = vmatprep.mubr.f32.mxu0 0.0
  %2027 = vmatmul.mubr.f32.gmra.mrb[0].mxu0 %v1948
  %v2028 = vpop.f32.mrb[0].mxu0
  %v2029 = vadd.f32 %v1872, %v2028
  %v2030 = vpop.f32.mrb[0].mxu0
  %v2031 = vadd.f32 %v1874, %v2030
  %2032 = vdwg.mxu0
  %2033 = vmatprep.subr.mxu0 %v1960
  %2034 = vmatpush1.msra.mxu0 %v1957
  %2035 = vmatprep.subr.mxu0 0.0
  %2036 = vmatpush1.msra.mxu0 0.0
  %2037 = vmatprep.subr.mxu0 0.0
  %2038 = vmatpush1.msra.mxu0 0.0
  %2039 = vmatprep.subr.mxu0 0.0
  %2040 = vmatpush1.msra.mxu0 0.0
  %2041 = vmatprep.subr.mxu0 0.0
  %2042 = vmatpush1.msra.mxu0 0.0
  %2043 = vmatprep.subr.mxu0 0.0
  %2044 = vmatpush1.msra.mxu0 0.0
  %2045 = vmatprep.subr.mxu0 0.0
  %2046 = vmatpush1.msra.mxu0 0.0
  %2047 = vmatprep.subr.mxu0 0.0
  %2048 = vmatpush1.msra.mxu0 0.0
  %2049 = vmatprep.subr.mxu0 0.0
  %2050 = vmatpush1.msra.mxu0 0.0
  %2051 = vmatprep.subr.mxu0 0.0
  %2052 = vmatpush1.msra.mxu0 0.0
  %2053 = vmatprep.subr.mxu0 0.0
  %2054 = vmatpush1.msra.mxu0 0.0
  %2055 = vmatprep.subr.mxu0 0.0
  %2056 = vmatpush1.msra.mxu0 0.0
  %2057 = vmatprep.subr.mxu0 0.0
  %2058 = vmatpush1.msra.mxu0 0.0
  %2059 = vmatprep.subr.mxu0 0.0
  %2060 = vmatpush1.msra.mxu0 0.0
  %2061 = vmatprep.subr.mxu0 0.0
  %2062 = vmatpush1.msra.mxu0 0.0
  %2063 = vmatprep.subr.mxu0 0.0
  %2064 = vmatpush1.msra.mxu0 0.0
  %2065 = vmatprep.subr.mxu0 0.0
  %2066 = vmatpush1.msra.mxu0 0.0
  %2067 = vmatprep.subr.mxu0 0.0
  %2068 = vmatpush1.msra.mxu0 0.0
  %2069 = vmatprep.subr.mxu0 0.0
  %2070 = vmatpush1.msra.mxu0 0.0
  %2071 = vmatprep.subr.mxu0 0.0
  %2072 = vmatpush1.msra.mxu0 0.0
  %2073 = vmatprep.subr.mxu0 0.0
  %2074 = vmatpush1.msra.mxu0 0.0
  %2075 = vmatprep.subr.mxu0 0.0
  %2076 = vmatpush1.msra.mxu0 0.0
  %2077 = vmatprep.subr.mxu0 0.0
  %2078 = vmatpush1.msra.mxu0 0.0
  %2079 = vmatprep.subr.mxu0 0.0
  %2080 = vmatpush1.msra.mxu0 0.0
  %2081 = vmatprep.subr.mxu0 0.0
  %2082 = vmatpush1.msra.mxu0 0.0
  %2083 = vmatprep.subr.mxu0 0.0
  %2084 = vmatpush1.msra.mxu0 0.0
  %2085 = vmatprep.subr.mxu0 0.0
  %2086 = vmatpush1.msra.mxu0 0.0
  %2087 = vmatprep.subr.mxu0 0.0
  %2088 = vmatpush1.msra.mxu0 0.0
  %2089 = vmatprep.subr.mxu0 0.0
  %2090 = vmatpush1.msra.mxu0 0.0
  %2091 = vmatprep.subr.mxu0 0.0
  %2092 = vmatpush1.msra.mxu0 0.0
  %2093 = vmatprep.subr.mxu0 0.0
  %2094 = vmatpush1.msra.mxu0 0.0
  %2095 = vmatprep.subr.mxu0 0.0
  %2096 = vmatpush1.msra.mxu0 0.0
  %2097 = vmatprep.mubr.f32.mxu0 0.0
  %2098 = vmatmul.mubr.f32.gmra.mrb[0].mxu0 %v1948
  %v2099 = vpop.f32.mrb[0].mxu0
  %v2100 = vadd.f32 %v1943, %v2099
  %v2101 = vpop.f32.mrb[0].mxu0
  %v2102 = vadd.f32 %v1945, %v2101
  %2103 = vdwg.mxu0
  %2104 = vrot.lane.b32.xlu0 %v1751, 15
  %v2105 = vpop.permute.xlu0 %2104
  %2106 = vrot.lane.b32.xlu0 %v1752, 15
  %v2107 = vpop.permute.xlu0 %2106
  %2108 = vrot.lane.b32.xlu0 %v1753, 15
  %v2109 = vpop.permute.xlu0 %2108
  %2110 = vrot.lane.b32.xlu0 %v1754, 15
  %v2111 = vpop.permute.xlu0 %2110
  %v2112 = vsel %vm451, %v2109, %v2111
  %v2113 = vsel %vm451, %v2107, %v2109
  %v2114 = vsel %vm451, %v2105, %v2107
  %v2115 = vsel %vm451, %v2111, %v2105
  %v2116 = vsel %vm74, %v2115, 0.0
  %v2117 = vsel %vm75, %v2114, 0.0
  %v2118 = vsel %vm76, %v2113, 0.0
  %v2119 = vsel %vm77, %v2112, 0.0
  %s2120 = scalar_lea.vmem %s5, 8
  %v2121 = vld [vmem:[%s2120] sm:$0xf]
  %v2123 = vsel %vm127, %v2121, 0
  %v2126 = vsel %vm131, %v2116, 0
  %v2129 = vsel %vm131, %v2117, 0
  %v2132 = vsel %vm131, %v2118, 0
  %v2135 = vsel %vm131, %v2119, 0
  %2137 = vmatprep.subr.mxu0 %v2129
  %2138 = vmatpush1.msra.mxu0 %v2126
  %2139 = vmatprep.subr.mxu0 0.0
  %2140 = vmatpush1.msra.mxu0 0.0
  %2141 = vmatprep.subr.mxu0 0.0
  %2142 = vmatpush1.msra.mxu0 0.0
  %2143 = vmatprep.subr.mxu0 0.0
  %2144 = vmatpush1.msra.mxu0 0.0
  %2145 = vmatprep.subr.mxu0 0.0
  %2146 = vmatpush1.msra.mxu0 0.0
  %2147 = vmatprep.subr.mxu0 0.0
  %2148 = vmatpush1.msra.mxu0 0.0
  %2149 = vmatprep.subr.mxu0 0.0
  %2150 = vmatpush1.msra.mxu0 0.0
  %2151 = vmatprep.subr.mxu0 0.0
  %2152 = vmatpush1.msra.mxu0 0.0
  %2153 = vmatprep.subr.mxu0 0.0
  %2154 = vmatpush1.msra.mxu0 0.0
  %2155 = vmatprep.subr.mxu0 0.0
  %2156 = vmatpush1.msra.mxu0 0.0
  %2157 = vmatprep.subr.mxu0 0.0
  %2158 = vmatpush1.msra.mxu0 0.0
  %2159 = vmatprep.subr.mxu0 0.0
  %2160 = vmatpush1.msra.mxu0 0.0
  %2161 = vmatprep.subr.mxu0 0.0
  %2162 = vmatpush1.msra.mxu0 0.0
  %2163 = vmatprep.subr.mxu0 0.0
  %2164 = vmatpush1.msra.mxu0 0.0
  %2165 = vmatprep.subr.mxu0 0.0
  %2166 = vmatpush1.msra.mxu0 0.0
  %2167 = vmatprep.subr.mxu0 0.0
  %2168 = vmatpush1.msra.mxu0 0.0
  %2169 = vmatprep.subr.mxu0 0.0
  %2170 = vmatpush1.msra.mxu0 0.0
  %2171 = vmatprep.subr.mxu0 0.0
  %2172 = vmatpush1.msra.mxu0 0.0
  %2173 = vmatprep.subr.mxu0 0.0
  %2174 = vmatpush1.msra.mxu0 0.0
  %2175 = vmatprep.subr.mxu0 0.0
  %2176 = vmatpush1.msra.mxu0 0.0
  %2177 = vmatprep.subr.mxu0 0.0
  %2178 = vmatpush1.msra.mxu0 0.0
  %2179 = vmatprep.subr.mxu0 0.0
  %2180 = vmatpush1.msra.mxu0 0.0
  %2181 = vmatprep.subr.mxu0 0.0
  %2182 = vmatpush1.msra.mxu0 0.0
  %2183 = vmatprep.subr.mxu0 0.0
  %2184 = vmatpush1.msra.mxu0 0.0
  %2185 = vmatprep.subr.mxu0 0.0
  %2186 = vmatpush1.msra.mxu0 0.0
  %2187 = vmatprep.subr.mxu0 0.0
  %2188 = vmatpush1.msra.mxu0 0.0
  %2189 = vmatprep.subr.mxu0 0.0
  %2190 = vmatpush1.msra.mxu0 0.0
  %2191 = vmatprep.subr.mxu0 0.0
  %2192 = vmatpush1.msra.mxu0 0.0
  %2193 = vmatprep.subr.mxu0 0.0
  %2194 = vmatpush1.msra.mxu0 0.0
  %2195 = vmatprep.subr.mxu0 0.0
  %2196 = vmatpush1.msra.mxu0 0.0
  %2197 = vmatprep.subr.mxu0 0.0
  %2198 = vmatpush1.msra.mxu0 0.0
  %2199 = vmatprep.subr.mxu0 0.0
  %2200 = vmatpush1.msra.mxu0 0.0
  %2201 = vmatprep.mubr.f32.mxu0 0.0
  %2202 = vmatmul.mubr.f32.gmra.mrb[0].mxu0 %v2123
  %v2203 = vpop.f32.mrb[0].mxu0
  %v2204 = vadd.f32 0.0, %v2203
  %v2205 = vpop.f32.mrb[0].mxu0
  %v2206 = vadd.f32 0.0, %v2205
  %2207 = vdwg.mxu0
  %2208 = vmatprep.subr.mxu0 %v2135
  %2209 = vmatpush1.msra.mxu0 %v2132
  %2210 = vmatprep.subr.mxu0 0.0
  %2211 = vmatpush1.msra.mxu0 0.0
  %2212 = vmatprep.subr.mxu0 0.0
  %2213 = vmatpush1.msra.mxu0 0.0
  %2214 = vmatprep.subr.mxu0 0.0
  %2215 = vmatpush1.msra.mxu0 0.0
  %2216 = vmatprep.subr.mxu0 0.0
  %2217 = vmatpush1.msra.mxu0 0.0
  %2218 = vmatprep.subr.mxu0 0.0
  %2219 = vmatpush1.msra.mxu0 0.0
  %2220 = vmatprep.subr.mxu0 0.0
  %2221 = vmatpush1.msra.mxu0 0.0
  %2222 = vmatprep.subr.mxu0 0.0
  %2223 = vmatpush1.msra.mxu0 0.0
  %2224 = vmatprep.subr.mxu0 0.0
  %2225 = vmatpush1.msra.mxu0 0.0
  %2226 = vmatprep.subr.mxu0 0.0
  %2227 = vmatpush1.msra.mxu0 0.0
  %2228 = vmatprep.subr.mxu0 0.0
  %2229 = vmatpush1.msra.mxu0 0.0
  %2230 = vmatprep.subr.mxu0 0.0
  %2231 = vmatpush1.msra.mxu0 0.0
  %2232 = vmatprep.subr.mxu0 0.0
  %2233 = vmatpush1.msra.mxu0 0.0
  %2234 = vmatprep.subr.mxu0 0.0
  %2235 = vmatpush1.msra.mxu0 0.0
  %2236 = vmatprep.subr.mxu0 0.0
  %2237 = vmatpush1.msra.mxu0 0.0
  %2238 = vmatprep.subr.mxu0 0.0
  %2239 = vmatpush1.msra.mxu0 0.0
  %2240 = vmatprep.subr.mxu0 0.0
  %2241 = vmatpush1.msra.mxu0 0.0
  %2242 = vmatprep.subr.mxu0 0.0
  %2243 = vmatpush1.msra.mxu0 0.0
  %2244 = vmatprep.subr.mxu0 0.0
  %2245 = vmatpush1.msra.mxu0 0.0
  %2246 = vmatprep.subr.mxu0 0.0
  %2247 = vmatpush1.msra.mxu0 0.0
  %2248 = vmatprep.subr.mxu0 0.0
  %2249 = vmatpush1.msra.mxu0 0.0
  %2250 = vmatprep.subr.mxu0 0.0
  %2251 = vmatpush1.msra.mxu0 0.0
  %2252 = vmatprep.subr.mxu0 0.0
  %2253 = vmatpush1.msra.mxu0 0.0
  %2254 = vmatprep.subr.mxu0 0.0
  %2255 = vmatpush1.msra.mxu0 0.0
  %2256 = vmatprep.subr.mxu0 0.0
  %2257 = vmatpush1.msra.mxu0 0.0
  %2258 = vmatprep.subr.mxu0 0.0
  %2259 = vmatpush1.msra.mxu0 0.0
  %2260 = vmatprep.subr.mxu0 0.0
  %2261 = vmatpush1.msra.mxu0 0.0
  %2262 = vmatprep.subr.mxu0 0.0
  %2263 = vmatpush1.msra.mxu0 0.0
  %2264 = vmatprep.subr.mxu0 0.0
  %2265 = vmatpush1.msra.mxu0 0.0
  %2266 = vmatprep.subr.mxu0 0.0
  %2267 = vmatpush1.msra.mxu0 0.0
  %2268 = vmatprep.subr.mxu0 0.0
  %2269 = vmatpush1.msra.mxu0 0.0
  %2270 = vmatprep.subr.mxu0 0.0
  %2271 = vmatpush1.msra.mxu0 0.0
  %2272 = vmatprep.mubr.f32.mxu0 0.0
  %2273 = vmatmul.mubr.f32.gmra.mrb[0].mxu0 %v2123
  %v2274 = vpop.f32.mrb[0].mxu0
  %v2275 = vadd.f32 0.0, %v2274
  %v2276 = vpop.f32.mrb[0].mxu0
  %v2277 = vadd.f32 0.0, %v2276
  %2278 = vdwg.mxu0
  %v2279 = vadd.f32 %v2029, %v2204
  %v2280 = vadd.f32 %v2031, %v2206
  %v2281 = vadd.f32 %v2100, %v2275
  %v2282 = vadd.f32 %v2102, %v2277
  %2283 = vrot.lane.b32.xlu0 %v1751, 1
  %v2284 = vpop.permute.xlu0 %2283
  %2285 = vrot.lane.b32.xlu0 %v1752, 1
  %v2286 = vpop.permute.xlu0 %2285
  %2287 = vrot.lane.b32.xlu0 %v1753, 1
  %v2288 = vpop.permute.xlu0 %2287
  %2289 = vrot.lane.b32.xlu0 %v1754, 1
  %v2290 = vpop.permute.xlu0 %2289
  %v2291 = vsel %vm631, %v2288, %v2290
  %v2292 = vsel %vm631, %v2286, %v2288
  %v2293 = vsel %vm631, %v2284, %v2286
  %v2294 = vsel %vm631, %v2290, %v2284
  %v2295 = vsel %vm62, %v2294, 0.0
  %v2296 = vsel %vm63, %v2293, 0.0
  %v2297 = vsel %vm64, %v2292, 0.0
  %v2298 = vsel %vm65, %v2291, 0.0
  %s2299 = scalar_lea.vmem %s5, 12
  %v2300 = vld [vmem:[%s2299] sm:$0xf]
  %v2302 = vsel %vm127, %v2300, 0
  %v2305 = vsel %vm131, %v2295, 0
  %v2308 = vsel %vm131, %v2296, 0
  %v2311 = vsel %vm131, %v2297, 0
  %v2314 = vsel %vm131, %v2298, 0
  %2316 = vmatprep.subr.mxu0 %v2308
  %2317 = vmatpush1.msra.mxu0 %v2305
  %2318 = vmatprep.subr.mxu0 0.0
  %2319 = vmatpush1.msra.mxu0 0.0
  %2320 = vmatprep.subr.mxu0 0.0
  %2321 = vmatpush1.msra.mxu0 0.0
  %2322 = vmatprep.subr.mxu0 0.0
  %2323 = vmatpush1.msra.mxu0 0.0
  %2324 = vmatprep.subr.mxu0 0.0
  %2325 = vmatpush1.msra.mxu0 0.0
  %2326 = vmatprep.subr.mxu0 0.0
  %2327 = vmatpush1.msra.mxu0 0.0
  %2328 = vmatprep.subr.mxu0 0.0
  %2329 = vmatpush1.msra.mxu0 0.0
  %2330 = vmatprep.subr.mxu0 0.0
  %2331 = vmatpush1.msra.mxu0 0.0
  %2332 = vmatprep.subr.mxu0 0.0
  %2333 = vmatpush1.msra.mxu0 0.0
  %2334 = vmatprep.subr.mxu0 0.0
  %2335 = vmatpush1.msra.mxu0 0.0
  %2336 = vmatprep.subr.mxu0 0.0
  %2337 = vmatpush1.msra.mxu0 0.0
  %2338 = vmatprep.subr.mxu0 0.0
  %2339 = vmatpush1.msra.mxu0 0.0
  %2340 = vmatprep.subr.mxu0 0.0
  %2341 = vmatpush1.msra.mxu0 0.0
  %2342 = vmatprep.subr.mxu0 0.0
  %2343 = vmatpush1.msra.mxu0 0.0
  %2344 = vmatprep.subr.mxu0 0.0
  %2345 = vmatpush1.msra.mxu0 0.0
  %2346 = vmatprep.subr.mxu0 0.0
  %2347 = vmatpush1.msra.mxu0 0.0
  %2348 = vmatprep.subr.mxu0 0.0
  %2349 = vmatpush1.msra.mxu0 0.0
  %2350 = vmatprep.subr.mxu0 0.0
  %2351 = vmatpush1.msra.mxu0 0.0
  %2352 = vmatprep.subr.mxu0 0.0
  %2353 = vmatpush1.msra.mxu0 0.0
  %2354 = vmatprep.subr.mxu0 0.0
  %2355 = vmatpush1.msra.mxu0 0.0
  %2356 = vmatprep.subr.mxu0 0.0
  %2357 = vmatpush1.msra.mxu0 0.0
  %2358 = vmatprep.subr.mxu0 0.0
  %2359 = vmatpush1.msra.mxu0 0.0
  %2360 = vmatprep.subr.mxu0 0.0
  %2361 = vmatpush1.msra.mxu0 0.0
  %2362 = vmatprep.subr.mxu0 0.0
  %2363 = vmatpush1.msra.mxu0 0.0
  %2364 = vmatprep.subr.mxu0 0.0
  %2365 = vmatpush1.msra.mxu0 0.0
  %2366 = vmatprep.subr.mxu0 0.0
  %2367 = vmatpush1.msra.mxu0 0.0
  %2368 = vmatprep.subr.mxu0 0.0
  %2369 = vmatpush1.msra.mxu0 0.0
  %2370 = vmatprep.subr.mxu0 0.0
  %2371 = vmatpush1.msra.mxu0 0.0
  %2372 = vmatprep.subr.mxu0 0.0
  %2373 = vmatpush1.msra.mxu0 0.0
  %2374 = vmatprep.subr.mxu0 0.0
  %2375 = vmatpush1.msra.mxu0 0.0
  %2376 = vmatprep.subr.mxu0 0.0
  %2377 = vmatpush1.msra.mxu0 0.0
  %2378 = vmatprep.subr.mxu0 0.0
  %2379 = vmatpush1.msra.mxu0 0.0
  %2380 = vmatprep.mubr.f32.mxu0 0.0
  %2381 = vmatmul.mubr.f32.gmra.mrb[0].mxu0 %v2302
  %v2382 = vpop.f32.mrb[0].mxu0
  %v2383 = vadd.f32 0.0, %v2382
  %v2384 = vpop.f32.mrb[0].mxu0
  %v2385 = vadd.f32 0.0, %v2384
  %2386 = vdwg.mxu0
  %2387 = vmatprep.subr.mxu0 %v2314
  %2388 = vmatpush1.msra.mxu0 %v2311
  %2389 = vmatprep.subr.mxu0 0.0
  %2390 = vmatpush1.msra.mxu0 0.0
  %2391 = vmatprep.subr.mxu0 0.0
  %2392 = vmatpush1.msra.mxu0 0.0
  %2393 = vmatprep.subr.mxu0 0.0
  %2394 = vmatpush1.msra.mxu0 0.0
  %2395 = vmatprep.subr.mxu0 0.0
  %2396 = vmatpush1.msra.mxu0 0.0
  %2397 = vmatprep.subr.mxu0 0.0
  %2398 = vmatpush1.msra.mxu0 0.0
  %2399 = vmatprep.subr.mxu0 0.0
  %2400 = vmatpush1.msra.mxu0 0.0
  %2401 = vmatprep.subr.mxu0 0.0
  %2402 = vmatpush1.msra.mxu0 0.0
  %2403 = vmatprep.subr.mxu0 0.0
  %2404 = vmatpush1.msra.mxu0 0.0
  %2405 = vmatprep.subr.mxu0 0.0
  %2406 = vmatpush1.msra.mxu0 0.0
  %2407 = vmatprep.subr.mxu0 0.0
  %2408 = vmatpush1.msra.mxu0 0.0
  %2409 = vmatprep.subr.mxu0 0.0
  %2410 = vmatpush1.msra.mxu0 0.0
  %2411 = vmatprep.subr.mxu0 0.0
  %2412 = vmatpush1.msra.mxu0 0.0
  %2413 = vmatprep.subr.mxu0 0.0
  %2414 = vmatpush1.msra.mxu0 0.0
  %2415 = vmatprep.subr.mxu0 0.0
  %2416 = vmatpush1.msra.mxu0 0.0
  %2417 = vmatprep.subr.mxu0 0.0
  %2418 = vmatpush1.msra.mxu0 0.0
  %2419 = vmatprep.subr.mxu0 0.0
  %2420 = vmatpush1.msra.mxu0 0.0
  %2421 = vmatprep.subr.mxu0 0.0
  %2422 = vmatpush1.msra.mxu0 0.0
  %2423 = vmatprep.subr.mxu0 0.0
  %2424 = vmatpush1.msra.mxu0 0.0
  %2425 = vmatprep.subr.mxu0 0.0
  %2426 = vmatpush1.msra.mxu0 0.0
  %2427 = vmatprep.subr.mxu0 0.0
  %2428 = vmatpush1.msra.mxu0 0.0
  %2429 = vmatprep.subr.mxu0 0.0
  %2430 = vmatpush1.msra.mxu0 0.0
  %2431 = vmatprep.subr.mxu0 0.0
  %2432 = vmatpush1.msra.mxu0 0.0
  %2433 = vmatprep.subr.mxu0 0.0
  %2434 = vmatpush1.msra.mxu0 0.0
  %2435 = vmatprep.subr.mxu0 0.0
  %2436 = vmatpush1.msra.mxu0 0.0
  %2437 = vmatprep.subr.mxu0 0.0
  %2438 = vmatpush1.msra.mxu0 0.0
  %2439 = vmatprep.subr.mxu0 0.0
  %2440 = vmatpush1.msra.mxu0 0.0
  %2441 = vmatprep.subr.mxu0 0.0
  %2442 = vmatpush1.msra.mxu0 0.0
  %2443 = vmatprep.subr.mxu0 0.0
  %2444 = vmatpush1.msra.mxu0 0.0
  %2445 = vmatprep.subr.mxu0 0.0
  %2446 = vmatpush1.msra.mxu0 0.0
  %2447 = vmatprep.subr.mxu0 0.0
  %2448 = vmatpush1.msra.mxu0 0.0
  %2449 = vmatprep.subr.mxu0 0.0
  %2450 = vmatpush1.msra.mxu0 0.0
  %2451 = vmatprep.mubr.f32.mxu0 0.0
  %2452 = vmatmul.mubr.f32.gmra.mrb[0].mxu0 %v2302
  %v2453 = vpop.f32.mrb[0].mxu0
  %v2454 = vadd.f32 0.0, %v2453
  %v2455 = vpop.f32.mrb[0].mxu0
  %v2456 = vadd.f32 0.0, %v2455
  %2457 = vdwg.mxu0
  %v2458 = vadd.f32 %v2279, %v2383
  %v2459 = vadd.f32 %v2280, %v2385
  %v2460 = vadd.f32 %v2281, %v2454
  %v2461 = vadd.f32 %v2282, %v2456
  %s2462 = scalar_lea.vmem %s5, 16
  %v2463 = vld [vmem:[%s2462] sm:$0xf]
  %v2465 = vsel %vm127, %v2463, 0
  %v2468 = vsel %vm131, %v1751, 0
  %v2471 = vsel %vm131, %v1752, 0
  %v2474 = vsel %vm131, %v1753, 0
  %v2477 = vsel %vm131, %v1754, 0
  %2479 = vmatprep.subr.mxu0 %v2471
  %2480 = vmatpush1.msra.mxu0 %v2468
  %2481 = vmatprep.subr.mxu0 0.0
  %2482 = vmatpush1.msra.mxu0 0.0
  %2483 = vmatprep.subr.mxu0 0.0
  %2484 = vmatpush1.msra.mxu0 0.0
  %2485 = vmatprep.subr.mxu0 0.0
  %2486 = vmatpush1.msra.mxu0 0.0
  %2487 = vmatprep.subr.mxu0 0.0
  %2488 = vmatpush1.msra.mxu0 0.0
  %2489 = vmatprep.subr.mxu0 0.0
  %2490 = vmatpush1.msra.mxu0 0.0
  %2491 = vmatprep.subr.mxu0 0.0
  %2492 = vmatpush1.msra.mxu0 0.0
  %2493 = vmatprep.subr.mxu0 0.0
  %2494 = vmatpush1.msra.mxu0 0.0
  %2495 = vmatprep.subr.mxu0 0.0
  %2496 = vmatpush1.msra.mxu0 0.0
  %2497 = vmatprep.subr.mxu0 0.0
  %2498 = vmatpush1.msra.mxu0 0.0
  %2499 = vmatprep.subr.mxu0 0.0
  %2500 = vmatpush1.msra.mxu0 0.0
  %2501 = vmatprep.subr.mxu0 0.0
  %2502 = vmatpush1.msra.mxu0 0.0
  %2503 = vmatprep.subr.mxu0 0.0
  %2504 = vmatpush1.msra.mxu0 0.0
  %2505 = vmatprep.subr.mxu0 0.0
  %2506 = vmatpush1.msra.mxu0 0.0
  %2507 = vmatprep.subr.mxu0 0.0
  %2508 = vmatpush1.msra.mxu0 0.0
  %2509 = vmatprep.subr.mxu0 0.0
  %2510 = vmatpush1.msra.mxu0 0.0
  %2511 = vmatprep.subr.mxu0 0.0
  %2512 = vmatpush1.msra.mxu0 0.0
  %2513 = vmatprep.subr.mxu0 0.0
  %2514 = vmatpush1.msra.mxu0 0.0
  %2515 = vmatprep.subr.mxu0 0.0
  %2516 = vmatpush1.msra.mxu0 0.0
  %2517 = vmatprep.subr.mxu0 0.0
  %2518 = vmatpush1.msra.mxu0 0.0
  %2519 = vmatprep.subr.mxu0 0.0
  %2520 = vmatpush1.msra.mxu0 0.0
  %2521 = vmatprep.subr.mxu0 0.0
  %2522 = vmatpush1.msra.mxu0 0.0
  %2523 = vmatprep.subr.mxu0 0.0
  %2524 = vmatpush1.msra.mxu0 0.0
  %2525 = vmatprep.subr.mxu0 0.0
  %2526 = vmatpush1.msra.mxu0 0.0
  %2527 = vmatprep.subr.mxu0 0.0
  %2528 = vmatpush1.msra.mxu0 0.0
  %2529 = vmatprep.subr.mxu0 0.0
  %2530 = vmatpush1.msra.mxu0 0.0
  %2531 = vmatprep.subr.mxu0 0.0
  %2532 = vmatpush1.msra.mxu0 0.0
  %2533 = vmatprep.subr.mxu0 0.0
  %2534 = vmatpush1.msra.mxu0 0.0
  %2535 = vmatprep.subr.mxu0 0.0
  %2536 = vmatpush1.msra.mxu0 0.0
  %2537 = vmatprep.subr.mxu0 0.0
  %2538 = vmatpush1.msra.mxu0 0.0
  %2539 = vmatprep.subr.mxu0 0.0
  %2540 = vmatpush1.msra.mxu0 0.0
  %2541 = vmatprep.subr.mxu0 0.0
  %2542 = vmatpush1.msra.mxu0 0.0
  %2543 = vmatprep.mubr.f32.mxu0 0.0
  %2544 = vmatmul.mubr.f32.gmra.mrb[0].mxu0 %v2465
  %v2545 = vpop.f32.mrb[0].mxu0
  %v2546 = vadd.f32 0.0, %v2545
  %v2547 = vpop.f32.mrb[0].mxu0
  %v2548 = vadd.f32 0.0, %v2547
  %2549 = vdwg.mxu0
  %2550 = vmatprep.subr.mxu0 %v2477
  %2551 = vmatpush1.msra.mxu0 %v2474
  %2552 = vmatprep.subr.mxu0 0.0
  %2553 = vmatpush1.msra.mxu0 0.0
  %2554 = vmatprep.subr.mxu0 0.0
  %2555 = vmatpush1.msra.mxu0 0.0
  %2556 = vmatprep.subr.mxu0 0.0
  %2557 = vmatpush1.msra.mxu0 0.0
  %2558 = vmatprep.subr.mxu0 0.0
  %2559 = vmatpush1.msra.mxu0 0.0
  %2560 = vmatprep.subr.mxu0 0.0
  %2561 = vmatpush1.msra.mxu0 0.0
  %2562 = vmatprep.subr.mxu0 0.0
  %2563 = vmatpush1.msra.mxu0 0.0
  %2564 = vmatprep.subr.mxu0 0.0
  %2565 = vmatpush1.msra.mxu0 0.0
  %2566 = vmatprep.subr.mxu0 0.0
  %2567 = vmatpush1.msra.mxu0 0.0
  %2568 = vmatprep.subr.mxu0 0.0
  %2569 = vmatpush1.msra.mxu0 0.0
  %2570 = vmatprep.subr.mxu0 0.0
  %2571 = vmatpush1.msra.mxu0 0.0
  %2572 = vmatprep.subr.mxu0 0.0
  %2573 = vmatpush1.msra.mxu0 0.0
  %2574 = vmatprep.subr.mxu0 0.0
  %2575 = vmatpush1.msra.mxu0 0.0
  %2576 = vmatprep.subr.mxu0 0.0
  %2577 = vmatpush1.msra.mxu0 0.0
  %2578 = vmatprep.subr.mxu0 0.0
  %2579 = vmatpush1.msra.mxu0 0.0
  %2580 = vmatprep.subr.mxu0 0.0
  %2581 = vmatpush1.msra.mxu0 0.0
  %2582 = vmatprep.subr.mxu0 0.0
  %2583 = vmatpush1.msra.mxu0 0.0
  %2584 = vmatprep.subr.mxu0 0.0
  %2585 = vmatpush1.msra.mxu0 0.0
  %2586 = vmatprep.subr.mxu0 0.0
  %2587 = vmatpush1.msra.mxu0 0.0
  %2588 = vmatprep.subr.mxu0 0.0
  %2589 = vmatpush1.msra.mxu0 0.0
  %2590 = vmatprep.subr.mxu0 0.0
  %2591 = vmatpush1.msra.mxu0 0.0
  %2592 = vmatprep.subr.mxu0 0.0
  %2593 = vmatpush1.msra.mxu0 0.0
  %2594 = vmatprep.subr.mxu0 0.0
  %2595 = vmatpush1.msra.mxu0 0.0
  %2596 = vmatprep.subr.mxu0 0.0
  %2597 = vmatpush1.msra.mxu0 0.0
  %2598 = vmatprep.subr.mxu0 0.0
  %2599 = vmatpush1.msra.mxu0 0.0
  %2600 = vmatprep.subr.mxu0 0.0
  %2601 = vmatpush1.msra.mxu0 0.0
  %2602 = vmatprep.subr.mxu0 0.0
  %2603 = vmatpush1.msra.mxu0 0.0
  %2604 = vmatprep.subr.mxu0 0.0
  %2605 = vmatpush1.msra.mxu0 0.0
  %2606 = vmatprep.subr.mxu0 0.0
  %2607 = vmatpush1.msra.mxu0 0.0
  %2608 = vmatprep.subr.mxu0 0.0
  %2609 = vmatpush1.msra.mxu0 0.0
  %2610 = vmatprep.subr.mxu0 0.0
  %2611 = vmatpush1.msra.mxu0 0.0
  %2612 = vmatprep.subr.mxu0 0.0
  %2613 = vmatpush1.msra.mxu0 0.0
  %2614 = vmatprep.mubr.f32.mxu0 0.0
  %2615 = vmatmul.mubr.f32.gmra.mrb[0].mxu0 %v2465
  %v2616 = vpop.f32.mrb[0].mxu0
  %v2617 = vadd.f32 0.0, %v2616
  %v2618 = vpop.f32.mrb[0].mxu0
  %v2619 = vadd.f32 0.0, %v2618
  %2620 = vdwg.mxu0
  %v2621 = vadd.f32 %v2458, %v2546
  %v2622 = vadd.f32 %v2459, %v2548
  %v2623 = vadd.f32 %v2460, %v2617
  %v2624 = vadd.f32 %v2461, %v2619
  %2625 = vrot.lane.b32.xlu0 %v1751, 127
  %v2626 = vpop.permute.xlu0 %2625
  %2627 = vrot.lane.b32.xlu0 %v1752, 127
  %v2628 = vpop.permute.xlu0 %2627
  %2629 = vrot.lane.b32.xlu0 %v1753, 127
  %v2630 = vpop.permute.xlu0 %2629
  %2631 = vrot.lane.b32.xlu0 %v1754, 127
  %v2632 = vpop.permute.xlu0 %2631
  %v2633 = vsel %vm970, %v2630, %v2632
  %v2634 = vsel %vm970, %v2628, %v2630
  %v2635 = vsel %vm970, %v2626, %v2628
  %v2636 = vsel %vm970, %v2632, %v2626
  %v2637 = vsel %vm70, %v2635, 0.0
  %v2638 = vsel %vm71, %v2634, 0.0
  %v2639 = vsel %vm72, %v2633, 0.0
  %v2640 = vsel %vm73, %v2636, 0.0
  %s2641 = scalar_lea.vmem %s5, 20
  %v2642 = vld [vmem:[%s2641] sm:$0xf]
  %v2644 = vsel %vm127, %v2642, 0
  %v2647 = vsel %vm131, %v2637, 0
  %v2650 = vsel %vm131, %v2638, 0
  %v2653 = vsel %vm131, %v2639, 0
  %v2656 = vsel %vm131, %v2640, 0
  %2658 = vmatprep.subr.mxu0 %v2650
  %2659 = vmatpush1.msra.mxu0 %v2647
  %2660 = vmatprep.subr.mxu0 0.0
  %2661 = vmatpush1.msra.mxu0 0.0
  %2662 = vmatprep.subr.mxu0 0.0
  %2663 = vmatpush1.msra.mxu0 0.0
  %2664 = vmatprep.subr.mxu0 0.0
  %2665 = vmatpush1.msra.mxu0 0.0
  %2666 = vmatprep.subr.mxu0 0.0
  %2667 = vmatpush1.msra.mxu0 0.0
  %2668 = vmatprep.subr.mxu0 0.0
  %2669 = vmatpush1.msra.mxu0 0.0
  %2670 = vmatprep.subr.mxu0 0.0
  %2671 = vmatpush1.msra.mxu0 0.0
  %2672 = vmatprep.subr.mxu0 0.0
  %2673 = vmatpush1.msra.mxu0 0.0
  %2674 = vmatprep.subr.mxu0 0.0
  %2675 = vmatpush1.msra.mxu0 0.0
  %2676 = vmatprep.subr.mxu0 0.0
  %2677 = vmatpush1.msra.mxu0 0.0
  %2678 = vmatprep.subr.mxu0 0.0
  %2679 = vmatpush1.msra.mxu0 0.0
  %2680 = vmatprep.subr.mxu0 0.0
  %2681 = vmatpush1.msra.mxu0 0.0
  %2682 = vmatprep.subr.mxu0 0.0
  %2683 = vmatpush1.msra.mxu0 0.0
  %2684 = vmatprep.subr.mxu0 0.0
  %2685 = vmatpush1.msra.mxu0 0.0
  %2686 = vmatprep.subr.mxu0 0.0
  %2687 = vmatpush1.msra.mxu0 0.0
  %2688 = vmatprep.subr.mxu0 0.0
  %2689 = vmatpush1.msra.mxu0 0.0
  %2690 = vmatprep.subr.mxu0 0.0
  %2691 = vmatpush1.msra.mxu0 0.0
  %2692 = vmatprep.subr.mxu0 0.0
  %2693 = vmatpush1.msra.mxu0 0.0
  %2694 = vmatprep.subr.mxu0 0.0
  %2695 = vmatpush1.msra.mxu0 0.0
  %2696 = vmatprep.subr.mxu0 0.0
  %2697 = vmatpush1.msra.mxu0 0.0
  %2698 = vmatprep.subr.mxu0 0.0
  %2699 = vmatpush1.msra.mxu0 0.0
  %2700 = vmatprep.subr.mxu0 0.0
  %2701 = vmatpush1.msra.mxu0 0.0
  %2702 = vmatprep.subr.mxu0 0.0
  %2703 = vmatpush1.msra.mxu0 0.0
  %2704 = vmatprep.subr.mxu0 0.0
  %2705 = vmatpush1.msra.mxu0 0.0
  %2706 = vmatprep.subr.mxu0 0.0
  %2707 = vmatpush1.msra.mxu0 0.0
  %2708 = vmatprep.subr.mxu0 0.0
  %2709 = vmatpush1.msra.mxu0 0.0
  %2710 = vmatprep.subr.mxu0 0.0
  %2711 = vmatpush1.msra.mxu0 0.0
  %2712 = vmatprep.subr.mxu0 0.0
  %2713 = vmatpush1.msra.mxu0 0.0
  %2714 = vmatprep.subr.mxu0 0.0
  %2715 = vmatpush1.msra.mxu0 0.0
  %2716 = vmatprep.subr.mxu0 0.0
  %2717 = vmatpush1.msra.mxu0 0.0
  %2718 = vmatprep.subr.mxu0 0.0
  %2719 = vmatpush1.msra.mxu0 0.0
  %2720 = vmatprep.subr.mxu0 0.0
  %2721 = vmatpush1.msra.mxu0 0.0
  %2722 = vmatprep.mubr.f32.mxu0 0.0
  %2723 = vmatmul.mubr.f32.gmra.mrb[0].mxu0 %v2644
  %v2724 = vpop.f32.mrb[0].mxu0
  %v2725 = vadd.f32 0.0, %v2724
  %v2726 = vpop.f32.mrb[0].mxu0
  %v2727 = vadd.f32 0.0, %v2726
  %2728 = vdwg.mxu0
  %2729 = vmatprep.subr.mxu0 %v2656
  %2730 = vmatpush1.msra.mxu0 %v2653
  %2731 = vmatprep.subr.mxu0 0.0
  %2732 = vmatpush1.msra.mxu0 0.0
  %2733 = vmatprep.subr.mxu0 0.0
  %2734 = vmatpush1.msra.mxu0 0.0
  %2735 = vmatprep.subr.mxu0 0.0
  %2736 = vmatpush1.msra.mxu0 0.0
  %2737 = vmatprep.subr.mxu0 0.0
  %2738 = vmatpush1.msra.mxu0 0.0
  %2739 = vmatprep.subr.mxu0 0.0
  %2740 = vmatpush1.msra.mxu0 0.0
  %2741 = vmatprep.subr.mxu0 0.0
  %2742 = vmatpush1.msra.mxu0 0.0
  %2743 = vmatprep.subr.mxu0 0.0
  %2744 = vmatpush1.msra.mxu0 0.0
  %2745 = vmatprep.subr.mxu0 0.0
  %2746 = vmatpush1.msra.mxu0 0.0
  %2747 = vmatprep.subr.mxu0 0.0
  %2748 = vmatpush1.msra.mxu0 0.0
  %2749 = vmatprep.subr.mxu0 0.0
  %2750 = vmatpush1.msra.mxu0 0.0
  %2751 = vmatprep.subr.mxu0 0.0
  %2752 = vmatpush1.msra.mxu0 0.0
  %2753 = vmatprep.subr.mxu0 0.0
  %2754 = vmatpush1.msra.mxu0 0.0
  %2755 = vmatprep.subr.mxu0 0.0
  %2756 = vmatpush1.msra.mxu0 0.0
  %2757 = vmatprep.subr.mxu0 0.0
  %2758 = vmatpush1.msra.mxu0 0.0
  %2759 = vmatprep.subr.mxu0 0.0
  %2760 = vmatpush1.msra.mxu0 0.0
  %2761 = vmatprep.subr.mxu0 0.0
  %2762 = vmatpush1.msra.mxu0 0.0
  %2763 = vmatprep.subr.mxu0 0.0
  %2764 = vmatpush1.msra.mxu0 0.0
  %2765 = vmatprep.subr.mxu0 0.0
  %2766 = vmatpush1.msra.mxu0 0.0
  %2767 = vmatprep.subr.mxu0 0.0
  %2768 = vmatpush1.msra.mxu0 0.0
  %2769 = vmatprep.subr.mxu0 0.0
  %2770 = vmatpush1.msra.mxu0 0.0
  %2771 = vmatprep.subr.mxu0 0.0
  %2772 = vmatpush1.msra.mxu0 0.0
  %2773 = vmatprep.subr.mxu0 0.0
  %2774 = vmatpush1.msra.mxu0 0.0
  %2775 = vmatprep.subr.mxu0 0.0
  %2776 = vmatpush1.msra.mxu0 0.0
  %2777 = vmatprep.subr.mxu0 0.0
  %2778 = vmatpush1.msra.mxu0 0.0
  %2779 = vmatprep.subr.mxu0 0.0
  %2780 = vmatpush1.msra.mxu0 0.0
  %2781 = vmatprep.subr.mxu0 0.0
  %2782 = vmatpush1.msra.mxu0 0.0
  %2783 = vmatprep.subr.mxu0 0.0
  %2784 = vmatpush1.msra.mxu0 0.0
  %2785 = vmatprep.subr.mxu0 0.0
  %2786 = vmatpush1.msra.mxu0 0.0
  %2787 = vmatprep.subr.mxu0 0.0
  %2788 = vmatpush1.msra.mxu0 0.0
  %2789 = vmatprep.subr.mxu0 0.0
  %2790 = vmatpush1.msra.mxu0 0.0
  %2791 = vmatprep.subr.mxu0 0.0
  %2792 = vmatpush1.msra.mxu0 0.0
  %2793 = vmatprep.mubr.f32.mxu0 0.0
  %2794 = vmatmul.mubr.f32.gmra.mrb[0].mxu0 %v2644
  %v2795 = vpop.f32.mrb[0].mxu0
  %v2796 = vadd.f32 0.0, %v2795
  %v2797 = vpop.f32.mrb[0].mxu0
  %v2798 = vadd.f32 0.0, %v2797
  %2799 = vdwg.mxu0
  %v2800 = vadd.f32 %v2621, %v2725
  %v2801 = vadd.f32 %v2622, %v2727
  %v2802 = vadd.f32 %v2623, %v2796
  %v2803 = vadd.f32 %v2624, %v2798
  %2804 = vrot.lane.b32.xlu0 %v1751, 113
  %v2805 = vpop.permute.xlu0 %2804
  %2806 = vrot.lane.b32.xlu0 %v1752, 113
  %v2807 = vpop.permute.xlu0 %2806
  %2808 = vrot.lane.b32.xlu0 %v1753, 113
  %v2809 = vpop.permute.xlu0 %2808
  %2810 = vrot.lane.b32.xlu0 %v1754, 113
  %v2811 = vpop.permute.xlu0 %2810
  %v2812 = vsel %vm1150, %v2809, %v2811
  %v2813 = vsel %vm1150, %v2807, %v2809
  %v2814 = vsel %vm1150, %v2805, %v2807
  %v2815 = vsel %vm1150, %v2811, %v2805
  %v2816 = vsel %vm82, %v2814, 0.0
  %v2817 = vsel %vm83, %v2813, 0.0
  %v2818 = vsel %vm84, %v2812, 0.0
  %v2819 = vsel %vm85, %v2815, 0.0
  %s2820 = scalar_lea.vmem %s5, 24
  %v2821 = vld [vmem:[%s2820] sm:$0xf]
  %v2823 = vsel %vm127, %v2821, 0
  %v2826 = vsel %vm131, %v2816, 0
  %v2829 = vsel %vm131, %v2817, 0
  %v2832 = vsel %vm131, %v2818, 0
  %v2835 = vsel %vm131, %v2819, 0
  %2837 = vmatprep.subr.mxu0 %v2829
  %2838 = vmatpush1.msra.mxu0 %v2826
  %2839 = vmatprep.subr.mxu0 0.0
  %2840 = vmatpush1.msra.mxu0 0.0
  %2841 = vmatprep.subr.mxu0 0.0
  %2842 = vmatpush1.msra.mxu0 0.0
  %2843 = vmatprep.subr.mxu0 0.0
  %2844 = vmatpush1.msra.mxu0 0.0
  %2845 = vmatprep.subr.mxu0 0.0
  %2846 = vmatpush1.msra.mxu0 0.0
  %2847 = vmatprep.subr.mxu0 0.0
  %2848 = vmatpush1.msra.mxu0 0.0
  %2849 = vmatprep.subr.mxu0 0.0
  %2850 = vmatpush1.msra.mxu0 0.0
  %2851 = vmatprep.subr.mxu0 0.0
  %2852 = vmatpush1.msra.mxu0 0.0
  %2853 = vmatprep.subr.mxu0 0.0
  %2854 = vmatpush1.msra.mxu0 0.0
  %2855 = vmatprep.subr.mxu0 0.0
  %2856 = vmatpush1.msra.mxu0 0.0
  %2857 = vmatprep.subr.mxu0 0.0
  %2858 = vmatpush1.msra.mxu0 0.0
  %2859 = vmatprep.subr.mxu0 0.0
  %2860 = vmatpush1.msra.mxu0 0.0
  %2861 = vmatprep.subr.mxu0 0.0
  %2862 = vmatpush1.msra.mxu0 0.0
  %2863 = vmatprep.subr.mxu0 0.0
  %2864 = vmatpush1.msra.mxu0 0.0
  %2865 = vmatprep.subr.mxu0 0.0
  %2866 = vmatpush1.msra.mxu0 0.0
  %2867 = vmatprep.subr.mxu0 0.0
  %2868 = vmatpush1.msra.mxu0 0.0
  %2869 = vmatprep.subr.mxu0 0.0
  %2870 = vmatpush1.msra.mxu0 0.0
  %2871 = vmatprep.subr.mxu0 0.0
  %2872 = vmatpush1.msra.mxu0 0.0
  %2873 = vmatprep.subr.mxu0 0.0
  %2874 = vmatpush1.msra.mxu0 0.0
  %2875 = vmatprep.subr.mxu0 0.0
  %2876 = vmatpush1.msra.mxu0 0.0
  %2877 = vmatprep.subr.mxu0 0.0
  %2878 = vmatpush1.msra.mxu0 0.0
  %2879 = vmatprep.subr.mxu0 0.0
  %2880 = vmatpush1.msra.mxu0 0.0
  %2881 = vmatprep.subr.mxu0 0.0
  %2882 = vmatpush1.msra.mxu0 0.0
  %2883 = vmatprep.subr.mxu0 0.0
  %2884 = vmatpush1.msra.mxu0 0.0
  %2885 = vmatprep.subr.mxu0 0.0
  %2886 = vmatpush1.msra.mxu0 0.0
  %2887 = vmatprep.subr.mxu0 0.0
  %2888 = vmatpush1.msra.mxu0 0.0
  %2889 = vmatprep.subr.mxu0 0.0
  %2890 = vmatpush1.msra.mxu0 0.0
  %2891 = vmatprep.subr.mxu0 0.0
  %2892 = vmatpush1.msra.mxu0 0.0
  %2893 = vmatprep.subr.mxu0 0.0
  %2894 = vmatpush1.msra.mxu0 0.0
  %2895 = vmatprep.subr.mxu0 0.0
  %2896 = vmatpush1.msra.mxu0 0.0
  %2897 = vmatprep.subr.mxu0 0.0
  %2898 = vmatpush1.msra.mxu0 0.0
  %2899 = vmatprep.subr.mxu0 0.0
  %2900 = vmatpush1.msra.mxu0 0.0
  %2901 = vmatprep.mubr.f32.mxu0 0.0
  %2902 = vmatmul.mubr.f32.gmra.mrb[0].mxu0 %v2823
  %v2903 = vpop.f32.mrb[0].mxu0
  %v2904 = vadd.f32 0.0, %v2903
  %v2905 = vpop.f32.mrb[0].mxu0
  %v2906 = vadd.f32 0.0, %v2905
  %2907 = vdwg.mxu0
  %2908 = vmatprep.subr.mxu0 %v2835
  %2909 = vmatpush1.msra.mxu0 %v2832
  %2910 = vmatprep.subr.mxu0 0.0
  %2911 = vmatpush1.msra.mxu0 0.0
  %2912 = vmatprep.subr.mxu0 0.0
  %2913 = vmatpush1.msra.mxu0 0.0
  %2914 = vmatprep.subr.mxu0 0.0
  %2915 = vmatpush1.msra.mxu0 0.0
  %2916 = vmatprep.subr.mxu0 0.0
  %2917 = vmatpush1.msra.mxu0 0.0
  %2918 = vmatprep.subr.mxu0 0.0
  %2919 = vmatpush1.msra.mxu0 0.0
  %2920 = vmatprep.subr.mxu0 0.0
  %2921 = vmatpush1.msra.mxu0 0.0
  %2922 = vmatprep.subr.mxu0 0.0
  %2923 = vmatpush1.msra.mxu0 0.0
  %2924 = vmatprep.subr.mxu0 0.0
  %2925 = vmatpush1.msra.mxu0 0.0
  %2926 = vmatprep.subr.mxu0 0.0
  %2927 = vmatpush1.msra.mxu0 0.0
  %2928 = vmatprep.subr.mxu0 0.0
  %2929 = vmatpush1.msra.mxu0 0.0
  %2930 = vmatprep.subr.mxu0 0.0
  %2931 = vmatpush1.msra.mxu0 0.0
  %2932 = vmatprep.subr.mxu0 0.0
  %2933 = vmatpush1.msra.mxu0 0.0
  %2934 = vmatprep.subr.mxu0 0.0
  %2935 = vmatpush1.msra.mxu0 0.0
  %2936 = vmatprep.subr.mxu0 0.0
  %2937 = vmatpush1.msra.mxu0 0.0
  %2938 = vmatprep.subr.mxu0 0.0
  %2939 = vmatpush1.msra.mxu0 0.0
  %2940 = vmatprep.subr.mxu0 0.0
  %2941 = vmatpush1.msra.mxu0 0.0
  %2942 = vmatprep.subr.mxu0 0.0
  %2943 = vmatpush1.msra.mxu0 0.0
  %2944 = vmatprep.subr.mxu0 0.0
  %2945 = vmatpush1.msra.mxu0 0.0
  %2946 = vmatprep.subr.mxu0 0.0
  %2947 = vmatpush1.msra.mxu0 0.0
  %2948 = vmatprep.subr.mxu0 0.0
  %2949 = vmatpush1.msra.mxu0 0.0
  %2950 = vmatprep.subr.mxu0 0.0
  %2951 = vmatpush1.msra.mxu0 0.0
  %2952 = vmatprep.subr.mxu0 0.0
  %2953 = vmatpush1.msra.mxu0 0.0
  %2954 = vmatprep.subr.mxu0 0.0
  %2955 = vmatpush1.msra.mxu0 0.0
  %2956 = vmatprep.subr.mxu0 0.0
  %2957 = vmatpush1.msra.mxu0 0.0
  %2958 = vmatprep.subr.mxu0 0.0
  %2959 = vmatpush1.msra.mxu0 0.0
  %2960 = vmatprep.subr.mxu0 0.0
  %2961 = vmatpush1.msra.mxu0 0.0
  %2962 = vmatprep.subr.mxu0 0.0
  %2963 = vmatpush1.msra.mxu0 0.0
  %2964 = vmatprep.subr.mxu0 0.0
  %2965 = vmatpush1.msra.mxu0 0.0
  %2966 = vmatprep.subr.mxu0 0.0
  %2967 = vmatpush1.msra.mxu0 0.0
  %2968 = vmatprep.subr.mxu0 0.0
  %2969 = vmatpush1.msra.mxu0 0.0
  %2970 = vmatprep.subr.mxu0 0.0
  %2971 = vmatpush1.msra.mxu0 0.0
  %2972 = vmatprep.mubr.f32.mxu0 0.0
  %2973 = vmatmul.mubr.f32.gmra.mrb[0].mxu0 %v2823
  %v2974 = vpop.f32.mrb[0].mxu0
  %v2975 = vadd.f32 0.0, %v2974
  %v2976 = vpop.f32.mrb[0].mxu0
  %v2977 = vadd.f32 0.0, %v2976
  %2978 = vdwg.mxu0
  %v2979 = vadd.f32 %v2800, %v2904
  %v2980 = vadd.f32 %v2801, %v2906
  %v2981 = vadd.f32 %v2802, %v2975
  %v2982 = vadd.f32 %v2803, %v2977
  %2983 = vrot.lane.b32.xlu0 %v1751, 112
  %v2984 = vpop.permute.xlu0 %2983
  %2985 = vrot.lane.b32.xlu0 %v1752, 112
  %v2986 = vpop.permute.xlu0 %2985
  %2987 = vrot.lane.b32.xlu0 %v1753, 112
  %v2988 = vpop.permute.xlu0 %2987
  %2989 = vrot.lane.b32.xlu0 %v1754, 112
  %v2990 = vpop.permute.xlu0 %2989
  %v2991 = vsel %vm1330, %v2988, %v2990
  %v2992 = vsel %vm1330, %v2986, %v2988
  %v2993 = vsel %vm1330, %v2984, %v2986
  %v2994 = vsel %vm1330, %v2990, %v2984
  %v2995 = vsel %vm78, %v2993, 0.0
  %v2996 = vsel %vm79, %v2992, 0.0
  %v2997 = vsel %vm80, %v2991, 0.0
  %v2998 = vsel %vm81, %v2994, 0.0
  %s2999 = scalar_lea.vmem %s5, 28
  %v3000 = vld [vmem:[%s2999] sm:$0xf]
  %v3002 = vsel %vm127, %v3000, 0
  %v3005 = vsel %vm131, %v2995, 0
  %v3008 = vsel %vm131, %v2996, 0
  %v3011 = vsel %vm131, %v2997, 0
  %v3014 = vsel %vm131, %v2998, 0
  %3016 = vmatprep.subr.mxu0 %v3008
  %3017 = vmatpush1.msra.mxu0 %v3005
  %3018 = vmatprep.subr.mxu0 0.0
  %3019 = vmatpush1.msra.mxu0 0.0
  %3020 = vmatprep.subr.mxu0 0.0
  %3021 = vmatpush1.msra.mxu0 0.0
  %3022 = vmatprep.subr.mxu0 0.0
  %3023 = vmatpush1.msra.mxu0 0.0
  %3024 = vmatprep.subr.mxu0 0.0
  %3025 = vmatpush1.msra.mxu0 0.0
  %3026 = vmatprep.subr.mxu0 0.0
  %3027 = vmatpush1.msra.mxu0 0.0
  %3028 = vmatprep.subr.mxu0 0.0
  %3029 = vmatpush1.msra.mxu0 0.0
  %3030 = vmatprep.subr.mxu0 0.0
  %3031 = vmatpush1.msra.mxu0 0.0
  %3032 = vmatprep.subr.mxu0 0.0
  %3033 = vmatpush1.msra.mxu0 0.0
  %3034 = vmatprep.subr.mxu0 0.0
  %3035 = vmatpush1.msra.mxu0 0.0
  %3036 = vmatprep.subr.mxu0 0.0
  %3037 = vmatpush1.msra.mxu0 0.0
  %3038 = vmatprep.subr.mxu0 0.0
  %3039 = vmatpush1.msra.mxu0 0.0
  %3040 = vmatprep.subr.mxu0 0.0
  %3041 = vmatpush1.msra.mxu0 0.0
  %3042 = vmatprep.subr.mxu0 0.0
  %3043 = vmatpush1.msra.mxu0 0.0
  %3044 = vmatprep.subr.mxu0 0.0
  %3045 = vmatpush1.msra.mxu0 0.0
  %3046 = vmatprep.subr.mxu0 0.0
  %3047 = vmatpush1.msra.mxu0 0.0
  %3048 = vmatprep.subr.mxu0 0.0
  %3049 = vmatpush1.msra.mxu0 0.0
  %3050 = vmatprep.subr.mxu0 0.0
  %3051 = vmatpush1.msra.mxu0 0.0
  %3052 = vmatprep.subr.mxu0 0.0
  %3053 = vmatpush1.msra.mxu0 0.0
  %3054 = vmatprep.subr.mxu0 0.0
  %3055 = vmatpush1.msra.mxu0 0.0
  %3056 = vmatprep.subr.mxu0 0.0
  %3057 = vmatpush1.msra.mxu0 0.0
  %3058 = vmatprep.subr.mxu0 0.0
  %3059 = vmatpush1.msra.mxu0 0.0
  %3060 = vmatprep.subr.mxu0 0.0
  %3061 = vmatpush1.msra.mxu0 0.0
  %3062 = vmatprep.subr.mxu0 0.0
  %3063 = vmatpush1.msra.mxu0 0.0
  %3064 = vmatprep.subr.mxu0 0.0
  %3065 = vmatpush1.msra.mxu0 0.0
  %3066 = vmatprep.subr.mxu0 0.0
  %3067 = vmatpush1.msra.mxu0 0.0
  %3068 = vmatprep.subr.mxu0 0.0
  %3069 = vmatpush1.msra.mxu0 0.0
  %3070 = vmatprep.subr.mxu0 0.0
  %3071 = vmatpush1.msra.mxu0 0.0
  %3072 = vmatprep.subr.mxu0 0.0
  %3073 = vmatpush1.msra.mxu0 0.0
  %3074 = vmatprep.subr.mxu0 0.0
  %3075 = vmatpush1.msra.mxu0 0.0
  %3076 = vmatprep.subr.mxu0 0.0
  %3077 = vmatpush1.msra.mxu0 0.0
  %3078 = vmatprep.subr.mxu0 0.0
  %3079 = vmatpush1.msra.mxu0 0.0
  %3080 = vmatprep.mubr.f32.mxu0 0.0
  %3081 = vmatmul.mubr.f32.gmra.mrb[0].mxu0 %v3002
  %v3082 = vpop.f32.mrb[0].mxu0
  %v3083 = vadd.f32 0.0, %v3082
  %v3084 = vpop.f32.mrb[0].mxu0
  %v3085 = vadd.f32 0.0, %v3084
  %3086 = vdwg.mxu0
  %3087 = vmatprep.subr.mxu0 %v3014
  %3088 = vmatpush1.msra.mxu0 %v3011
  %3089 = vmatprep.subr.mxu0 0.0
  %3090 = vmatpush1.msra.mxu0 0.0
  %3091 = vmatprep.subr.mxu0 0.0
  %3092 = vmatpush1.msra.mxu0 0.0
  %3093 = vmatprep.subr.mxu0 0.0
  %3094 = vmatpush1.msra.mxu0 0.0
  %3095 = vmatprep.subr.mxu0 0.0
  %3096 = vmatpush1.msra.mxu0 0.0
  %3097 = vmatprep.subr.mxu0 0.0
  %3098 = vmatpush1.msra.mxu0 0.0
  %3099 = vmatprep.subr.mxu0 0.0
  %3100 = vmatpush1.msra.mxu0 0.0
  %3101 = vmatprep.subr.mxu0 0.0
  %3102 = vmatpush1.msra.mxu0 0.0
  %3103 = vmatprep.subr.mxu0 0.0
  %3104 = vmatpush1.msra.mxu0 0.0
  %3105 = vmatprep.subr.mxu0 0.0
  %3106 = vmatpush1.msra.mxu0 0.0
  %3107 = vmatprep.subr.mxu0 0.0
  %3108 = vmatpush1.msra.mxu0 0.0
  %3109 = vmatprep.subr.mxu0 0.0
  %3110 = vmatpush1.msra.mxu0 0.0
  %3111 = vmatprep.subr.mxu0 0.0
  %3112 = vmatpush1.msra.mxu0 0.0
  %3113 = vmatprep.subr.mxu0 0.0
  %3114 = vmatpush1.msra.mxu0 0.0
  %3115 = vmatprep.subr.mxu0 0.0
  %3116 = vmatpush1.msra.mxu0 0.0
  %3117 = vmatprep.subr.mxu0 0.0
  %3118 = vmatpush1.msra.mxu0 0.0
  %3119 = vmatprep.subr.mxu0 0.0
  %3120 = vmatpush1.msra.mxu0 0.0
  %3121 = vmatprep.subr.mxu0 0.0
  %3122 = vmatpush1.msra.mxu0 0.0
  %3123 = vmatprep.subr.mxu0 0.0
  %3124 = vmatpush1.msra.mxu0 0.0
  %3125 = vmatprep.subr.mxu0 0.0
  %3126 = vmatpush1.msra.mxu0 0.0
  %3127 = vmatprep.subr.mxu0 0.0
  %3128 = vmatpush1.msra.mxu0 0.0
  %3129 = vmatprep.subr.mxu0 0.0
  %3130 = vmatpush1.msra.mxu0 0.0
  %3131 = vmatprep.subr.mxu0 0.0
  %3132 = vmatpush1.msra.mxu0 0.0
  %3133 = vmatprep.subr.mxu0 0.0
  %3134 = vmatpush1.msra.mxu0 0.0
  %3135 = vmatprep.subr.mxu0 0.0
  %3136 = vmatpush1.msra.mxu0 0.0
  %3137 = vmatprep.subr.mxu0 0.0
  %3138 = vmatpush1.msra.mxu0 0.0
  %3139 = vmatprep.subr.mxu0 0.0
  %3140 = vmatpush1.msra.mxu0 0.0
  %3141 = vmatprep.subr.mxu0 0.0
  %3142 = vmatpush1.msra.mxu0 0.0
  %3143 = vmatprep.subr.mxu0 0.0
  %3144 = vmatpush1.msra.mxu0 0.0
  %3145 = vmatprep.subr.mxu0 0.0
  %3146 = vmatpush1.msra.mxu0 0.0
  %3147 = vmatprep.subr.mxu0 0.0
  %3148 = vmatpush1.msra.mxu0 0.0
  %3149 = vmatprep.subr.mxu0 0.0
  %3150 = vmatpush1.msra.mxu0 0.0
  %3151 = vmatprep.mubr.f32.mxu0 0.0
  %3152 = vmatmul.mubr.f32.gmra.mrb[0].mxu0 %v3002
  %v3153 = vpop.f32.mrb[0].mxu0
  %v3154 = vadd.f32 0.0, %v3153
  %v3155 = vpop.f32.mrb[0].mxu0
  %v3156 = vadd.f32 0.0, %v3155
  %3157 = vdwg.mxu0
  %v3158 = vadd.f32 %v2979, %v3083
  %v3159 = vadd.f32 %v2980, %v3085
  %v3160 = vadd.f32 %v2981, %v3154
  %v3161 = vadd.f32 %v2982, %v3156
  %3162 = vrot.lane.b32.xlu0 %v1751, 111
  %v3163 = vpop.permute.xlu0 %3162
  %3164 = vrot.lane.b32.xlu0 %v1752, 111
  %v3165 = vpop.permute.xlu0 %3164
  %3166 = vrot.lane.b32.xlu0 %v1753, 111
  %v3167 = vpop.permute.xlu0 %3166
  %3168 = vrot.lane.b32.xlu0 %v1754, 111
  %v3169 = vpop.permute.xlu0 %3168
  %v3170 = vsel %vm1510, %v3167, %v3169
  %v3171 = vsel %vm1510, %v3165, %v3167
  %v3172 = vsel %vm1510, %v3163, %v3165
  %v3173 = vsel %vm1510, %v3169, %v3163
  %v3174 = vsel %vm86, %v3172, 0.0
  %v3175 = vsel %vm87, %v3171, 0.0
  %v3176 = vsel %vm88, %v3170, 0.0
  %v3177 = vsel %vm89, %v3173, 0.0
  %s3178 = scalar_lea.vmem %s5, 32
  %v3179 = vld [vmem:[%s3178] sm:$0xf]
  %v3181 = vsel %vm127, %v3179, 0
  %v3184 = vsel %vm131, %v3174, 0
  %v3187 = vsel %vm131, %v3175, 0
  %v3190 = vsel %vm131, %v3176, 0
  %v3193 = vsel %vm131, %v3177, 0
  %3195 = vmatprep.subr.mxu0 %v3187
  %3196 = vmatpush1.msra.mxu0 %v3184
  %3197 = vmatprep.subr.mxu0 0.0
  %3198 = vmatpush1.msra.mxu0 0.0
  %3199 = vmatprep.subr.mxu0 0.0
  %3200 = vmatpush1.msra.mxu0 0.0
  %3201 = vmatprep.subr.mxu0 0.0
  %3202 = vmatpush1.msra.mxu0 0.0
  %3203 = vmatprep.subr.mxu0 0.0
  %3204 = vmatpush1.msra.mxu0 0.0
  %3205 = vmatprep.subr.mxu0 0.0
  %3206 = vmatpush1.msra.mxu0 0.0
  %3207 = vmatprep.subr.mxu0 0.0
  %3208 = vmatpush1.msra.mxu0 0.0
  %3209 = vmatprep.subr.mxu0 0.0
  %3210 = vmatpush1.msra.mxu0 0.0
  %3211 = vmatprep.subr.mxu0 0.0
  %3212 = vmatpush1.msra.mxu0 0.0
  %3213 = vmatprep.subr.mxu0 0.0
  %3214 = vmatpush1.msra.mxu0 0.0
  %3215 = vmatprep.subr.mxu0 0.0
  %3216 = vmatpush1.msra.mxu0 0.0
  %3217 = vmatprep.subr.mxu0 0.0
  %3218 = vmatpush1.msra.mxu0 0.0
  %3219 = vmatprep.subr.mxu0 0.0
  %3220 = vmatpush1.msra.mxu0 0.0
  %3221 = vmatprep.subr.mxu0 0.0
  %3222 = vmatpush1.msra.mxu0 0.0
  %3223 = vmatprep.subr.mxu0 0.0
  %3224 = vmatpush1.msra.mxu0 0.0
  %3225 = vmatprep.subr.mxu0 0.0
  %3226 = vmatpush1.msra.mxu0 0.0
  %3227 = vmatprep.subr.mxu0 0.0
  %3228 = vmatpush1.msra.mxu0 0.0
  %3229 = vmatprep.subr.mxu0 0.0
  %3230 = vmatpush1.msra.mxu0 0.0
  %3231 = vmatprep.subr.mxu0 0.0
  %3232 = vmatpush1.msra.mxu0 0.0
  %3233 = vmatprep.subr.mxu0 0.0
  %3234 = vmatpush1.msra.mxu0 0.0
  %3235 = vmatprep.subr.mxu0 0.0
  %3236 = vmatpush1.msra.mxu0 0.0
  %3237 = vmatprep.subr.mxu0 0.0
  %3238 = vmatpush1.msra.mxu0 0.0
  %3239 = vmatprep.subr.mxu0 0.0
  %3240 = vmatpush1.msra.mxu0 0.0
  %3241 = vmatprep.subr.mxu0 0.0
  %3242 = vmatpush1.msra.mxu0 0.0
  %3243 = vmatprep.subr.mxu0 0.0
  %3244 = vmatpush1.msra.mxu0 0.0
  %3245 = vmatprep.subr.mxu0 0.0
  %3246 = vmatpush1.msra.mxu0 0.0
  %3247 = vmatprep.subr.mxu0 0.0
  %3248 = vmatpush1.msra.mxu0 0.0
  %3249 = vmatprep.subr.mxu0 0.0
  %3250 = vmatpush1.msra.mxu0 0.0
  %3251 = vmatprep.subr.mxu0 0.0
  %3252 = vmatpush1.msra.mxu0 0.0
  %3253 = vmatprep.subr.mxu0 0.0
  %3254 = vmatpush1.msra.mxu0 0.0
  %3255 = vmatprep.subr.mxu0 0.0
  %3256 = vmatpush1.msra.mxu0 0.0
  %3257 = vmatprep.subr.mxu0 0.0
  %3258 = vmatpush1.msra.mxu0 0.0
  %3259 = vmatprep.mubr.f32.mxu0 0.0
  %3260 = vmatmul.mubr.f32.gmra.mrb[0].mxu0 %v3181
  %v3261 = vpop.f32.mrb[0].mxu0
  %v3262 = vadd.f32 0.0, %v3261
  %v3263 = vpop.f32.mrb[0].mxu0
  %v3264 = vadd.f32 0.0, %v3263
  %3265 = vdwg.mxu0
  %3266 = vmatprep.subr.mxu0 %v3193
  %3267 = vmatpush1.msra.mxu0 %v3190
  %3268 = vmatprep.subr.mxu0 0.0
  %3269 = vmatpush1.msra.mxu0 0.0
  %3270 = vmatprep.subr.mxu0 0.0
  %3271 = vmatpush1.msra.mxu0 0.0
  %3272 = vmatprep.subr.mxu0 0.0
  %3273 = vmatpush1.msra.mxu0 0.0
  %3274 = vmatprep.subr.mxu0 0.0
  %3275 = vmatpush1.msra.mxu0 0.0
  %3276 = vmatprep.subr.mxu0 0.0
  %3277 = vmatpush1.msra.mxu0 0.0
  %3278 = vmatprep.subr.mxu0 0.0
  %3279 = vmatpush1.msra.mxu0 0.0
  %3280 = vmatprep.subr.mxu0 0.0
  %3281 = vmatpush1.msra.mxu0 0.0
  %3282 = vmatprep.subr.mxu0 0.0
  %3283 = vmatpush1.msra.mxu0 0.0
  %3284 = vmatprep.subr.mxu0 0.0
  %3285 = vmatpush1.msra.mxu0 0.0
  %3286 = vmatprep.subr.mxu0 0.0
  %3287 = vmatpush1.msra.mxu0 0.0
  %3288 = vmatprep.subr.mxu0 0.0
  %3289 = vmatpush1.msra.mxu0 0.0
  %3290 = vmatprep.subr.mxu0 0.0
  %3291 = vmatpush1.msra.mxu0 0.0
  %3292 = vmatprep.subr.mxu0 0.0
  %3293 = vmatpush1.msra.mxu0 0.0
  %3294 = vmatprep.subr.mxu0 0.0
  %3295 = vmatpush1.msra.mxu0 0.0
  %3296 = vmatprep.subr.mxu0 0.0
  %3297 = vmatpush1.msra.mxu0 0.0
  %3298 = vmatprep.subr.mxu0 0.0
  %3299 = vmatpush1.msra.mxu0 0.0
  %3300 = vmatprep.subr.mxu0 0.0
  %3301 = vmatpush1.msra.mxu0 0.0
  %3302 = vmatprep.subr.mxu0 0.0
  %3303 = vmatpush1.msra.mxu0 0.0
  %3304 = vmatprep.subr.mxu0 0.0
  %3305 = vmatpush1.msra.mxu0 0.0
  %3306 = vmatprep.subr.mxu0 0.0
  %3307 = vmatpush1.msra.mxu0 0.0
  %3308 = vmatprep.subr.mxu0 0.0
  %3309 = vmatpush1.msra.mxu0 0.0
  %3310 = vmatprep.subr.mxu0 0.0
  %3311 = vmatpush1.msra.mxu0 0.0
  %3312 = vmatprep.subr.mxu0 0.0
  %3313 = vmatpush1.msra.mxu0 0.0
  %3314 = vmatprep.subr.mxu0 0.0
  %3315 = vmatpush1.msra.mxu0 0.0
  %3316 = vmatprep.subr.mxu0 0.0
  %3317 = vmatpush1.msra.mxu0 0.0
  %3318 = vmatprep.subr.mxu0 0.0
  %3319 = vmatpush1.msra.mxu0 0.0
  %3320 = vmatprep.subr.mxu0 0.0
  %3321 = vmatpush1.msra.mxu0 0.0
  %3322 = vmatprep.subr.mxu0 0.0
  %3323 = vmatpush1.msra.mxu0 0.0
  %3324 = vmatprep.subr.mxu0 0.0
  %3325 = vmatpush1.msra.mxu0 0.0
  %3326 = vmatprep.subr.mxu0 0.0
  %3327 = vmatpush1.msra.mxu0 0.0
  %3328 = vmatprep.subr.mxu0 0.0
  %3329 = vmatpush1.msra.mxu0 0.0
  %3330 = vmatprep.mubr.f32.mxu0 0.0
  %3331 = vmatmul.mubr.f32.gmra.mrb[0].mxu0 %v3181
  %v3332 = vpop.f32.mrb[0].mxu0
  %v3333 = vadd.f32 0.0, %v3332
  %v3334 = vpop.f32.mrb[0].mxu0
  %v3335 = vadd.f32 0.0, %v3334
  %3336 = vdwg.mxu0
  %v3337 = vadd.f32 %v3158, %v3262
  %v3338 = vadd.f32 %v3159, %v3264
  %v3339 = vadd.f32 %v3160, %v3333
  %v3340 = vadd.f32 %v3161, %v3335
  %v3341 = vld [vmem:[%s6] sm:$0xf]
  %3343 = vset.pattern.permute.xlu0 0
  %3344 = vperm.xlu0 %3343, %v3341
  %v3345 = vpop.permute.xlu0 %3344
  %v3347 = vadd.f32 %v3337, %v3345
  %v3348 = vadd.f32 %v3338, %v3345
  %v3349 = vadd.f32 %v3339, %v3345
  %v3350 = vadd.f32 %v3340, %v3345
  %v3351 = vsel %vm131, %v3347, 0.0
  %v3352 = vsel %vm131, %v3348, 0.0
  %v3353 = vadd.f32 %v3351, %v3352
  %v3354 = vsel %vm131, %v3349, 0.0
  %v3355 = vadd.f32 %v3353, %v3354
  %v3356 = vsel %vm131, %v3350, 0.0
  %v3357 = vadd.f32 %v3355, %v3356
  %3358 = vadd.xlane.f32.xlu0 %v3357
  %v3359 = vpop.xlane.xlu0 %3358
  %v3360 = vmul.f32 %v3359, 0.001953125
  %v3361 = vsub.f32 %v3347, %v3360
  %v3362 = vsub.f32 %v3348, %v3360
  %v3363 = vsub.f32 %v3349, %v3360
  %v3364 = vsub.f32 %v3350, %v3360
  %v3365 = vmul.f32 %v3361, %v3361
  %v3366 = vmul.f32 %v3362, %v3362
  %v3367 = vmul.f32 %v3363, %v3363
  %v3368 = vmul.f32 %v3364, %v3364
  %v3369 = vsel %vm131, %v3365, 0.0
  %v3370 = vsel %vm131, %v3366, 0.0
  %v3371 = vadd.f32 %v3369, %v3370
  %v3372 = vsel %vm131, %v3367, 0.0
  %v3373 = vadd.f32 %v3371, %v3372
  %v3374 = vsel %vm131, %v3368, 0.0
  %v3375 = vadd.f32 %v3373, %v3374
  %3376 = vadd.xlane.f32.xlu0 %v3375
  %v3377 = vpop.xlane.xlu0 %3376
  %v3378 = vmul.f32 %v3377, 0.001953125
  %v3379 = vadd.f32 %v3378, 1e-05
  %v3380 = vrsqrt.pop %v3379
  %v3381 = vld [vmem:[%s7] sm:$0xf]
  %v3382 = vmul.f32 %v3380, %v3381
  %3384 = vset.pattern.permute.xlu0 0
  %3385 = vperm.xlu0 %3384, %v3382
  %v3386 = vpop.permute.xlu0 %3385
  %v3388 = vmul.f32 %v3361, %v3386
  %v3389 = vmul.f32 %v3362, %v3386
  %v3390 = vmul.f32 %v3363, %v3386
  %v3391 = vmul.f32 %v3364, %v3386
  %v3392 = vld [vmem:[%s8] sm:$0xf]
  %3394 = vset.pattern.permute.xlu0 0
  %3395 = vperm.xlu0 %3394, %v3392
  %v3396 = vpop.permute.xlu0 %3395
  %v3398 = vadd.f32 %v3388, %v3396
  %v3399 = vadd.f32 %v3389, %v3396
  %v3400 = vadd.f32 %v3390, %v3396
  %v3401 = vadd.f32 %v3391, %v3396
  %v3402 = vadd.f32 %v32, %v3398
  %v3403 = vadd.f32 %v36, %v3399
  %v3404 = vadd.f32 %v34, %v3400
  %v3405 = vadd.f32 %v39, %v3401
  %vm3406 = vcmp.gt.f32.partialorder %v3402, 0.0
  %vm3407 = vcmp.gt.f32.partialorder %v3403, 0.0
  %vm3408 = vcmp.gt.f32.partialorder %v3404, 0.0
  %vm3409 = vcmp.gt.f32.partialorder %v3405, 0.0
  %v3410 = vmul.f32 %v3402, 0.01
  %v3411 = vmul.f32 %v3403, 0.01
  %v3412 = vmul.f32 %v3404, 0.01
  %v3413 = vmul.f32 %v3405, 0.01
  %v3414 = vsel %vm3406, %v3402, %v3410
  %v3415 = vsel %vm3407, %v3403, %v3411
  %v3416 = vsel %vm3408, %v3404, %v3412
  %v3417 = vsel %vm3409, %v3405, %v3413
  %v3420 = vcombine.low %v3414, %v3415
  %3422 = vst [vmem:[%s9] sm:$0xff] %v3420
  %v3425 = vcombine.low %v3416, %v3417
  %s3427 = scalar_lea.vmem %s9, 8
  %3428 = vst [vmem:[%s3427] sm:$0xff] %v3425
  // Predicated region
  $region38: #{res_block_forward.1} parent=0 // pred_check
    _
  $region39: #{res_block_forward.1} parent=0 // pred_check_branch
    %3430 = sbr.rel (0) target = $region41
  $region40: #{res_block_forward.1} parent=0 // pred_region
    _
  $region41: #{res_block_forward.1} parent=0 // pred_fallthru
    _
  // Predicated region
  $region42: #{res_block_forward.1} parent=0 // pred_check
    _
  $region43: #{res_block_forward.1} parent=0 // pred_check_branch
    %3432 = sbr.rel (0) target = $region45
  $region44: #{res_block_forward.1} parent=0 // pred_region
    _
  $region45: #{res_block_forward.1} parent=0 // pred_fallthru
    _

</llo_original>
